<compile_context>
chip_gen: v6e
topology: v6e:2x2x1
jax: 0.10.0
libtpu: 0.0.40
codegen_flags: <defaults>
</compile_context>

<pallas_src>
import functools

import jax
import jax.numpy as jnp
from jax.experimental import pallas as pl
from jax.experimental.pallas import tpu as pltpu

BN_EPS = 1e-5
LANE = 128


def _round_up(x, m):
    return (x + m - 1) // m * m


def _pick_row_tile(h, w, budget=4096):
    """Largest divisor of h whose flattened (th*w) M-tile is sublane-aligned and <= budget."""
    divs = [d for d in range(1, h + 1) if h % d == 0]
    good = [d for d in divs if d * w <= budget and (d * w) % 8 == 0]
    if good:
        small = [d for d in good if d <= max(1, h // 2)] or good
        return max(small)
    # TODO(synk): shapes with no sublane-aligned row tile (e.g. odd W with N>1)
    # fall back to one row-block per image.
    return h


# ----------------------------- kernel bodies ---------------------------------

def _conv3x3_acc(slab, w_ref):
    """slab: (TH+2, W+2, Cin) zero-padded window; w_ref: (9, Cin, Cpad) -> (TH*W, Cpad) f32."""
    th = slab.shape[0] - 2
    wd = slab.shape[1] - 2
    cin = slab.shape[2]
    cpad = w_ref.shape[2]
    acc = jnp.zeros((th * wd, cpad), jnp.float32)
    for dh in range(3):
        for dw in range(3):
            patch = slab[dh:dh + th, dw:dw + wd, :].reshape(th * wd, cin)
            acc = acc + jnp.dot(patch, w_ref[dh * 3 + dw],
                                preferred_element_type=jnp.float32)
    return acc


def _pad_and_mask_rows(top, mid, bot):
    """Assemble the zero-padded (TH+2, W+2, Cin) slab from a row block + 1-row halos."""
    i = pl.program_id(1)
    nb = pl.num_programs(1)
    # conv zero-padding at the image top / bottom edge.
    top = jnp.where(i == 0, jnp.zeros_like(top), top)
    bot = jnp.where(i == nb - 1, jnp.zeros_like(bot), bot)
    rows = jnp.concatenate([top, mid, bot], axis=0)            # (TH+2, W, Cin)
    zcol = jnp.zeros((rows.shape[0], 1, rows.shape[2]), rows.dtype)
    return jnp.concatenate([zcol, rows, zcol], axis=1)         # (TH+2, W+2, Cin)


def _emit_y_and_stats(acc, y_ref, stats_ref):
    y_ref[...] = acc.astype(y_ref.dtype)
    s = jnp.sum(acc, axis=0, keepdims=True)
    ss = jnp.sum(acc * acc, axis=0, keepdims=True)
    stats_ref[...] = jnp.concatenate([s, ss], axis=0)[None]


def _conv_stats_kernel(xm_ref, xt_ref, xb_ref, w_ref, y_ref, stats_ref):
    """Pass A: 3x3 conv on the raw NHWC block + per-tile channel statistics."""
    slab = _pad_and_mask_rows(xt_ref[0], xm_ref[0], xb_ref[0])
    _emit_y_and_stats(_conv3x3_acc(slab, w_ref), y_ref, stats_ref)


def _bnrelu_conv_stats_kernel(ym_ref, yt_ref, yb_ref, scale_ref, shift_ref,
                              w_ref, y_ref, stats_ref, *, compute_dtype):
    """Pass B: BN+ReLU of the previous conv output (incl. halos), then 3x3 conv + stats."""
    cin = ym_ref.shape[3]
    sc = scale_ref[...].reshape(1, 1, cin)
    sh = shift_ref[...].reshape(1, 1, cin)

    def bn_relu(v):
        return jnp.maximum(v.astype(jnp.float32) * sc + sh, 0.0).astype(compute_dtype)

    # BN+ReLU first, then the halo masking zeroes the conv padding rows exactly.
    slab = _pad_and_mask_rows(bn_relu(yt_ref[0]), bn_relu(ym_ref[0]),
                              bn_relu(yb_ref[0]))
    _emit_y_and_stats(_conv3x3_acc(slab, w_ref), y_ref, stats_ref)


def _bn_relu_kernel(y_ref, scale_ref, shift_ref, o_ref):
    """Pass C: folded BatchNorm + ReLU: out = max(y * scale + shift, 0)."""
    o_ref[...] = jnp.maximum(
        y_ref[...].astype(jnp.float32) * scale_ref[...] + shift_ref[...], 0.0)


# ------------------------------ host wrappers ---------------------------------

def _prep_weights(w_oihw, cin_pad, cout_pad, compute_dtype):
    """(Cout, Cin, 3, 3) -> (9, cin_pad, cout_pad); tap index = dh*3 + dw, zero-padded."""
    cout, cin = w_oihw.shape[0], w_oihw.shape[1]
    wt = jnp.transpose(w_oihw, (2, 3, 1, 0)).reshape(9, cin, cout)
    wt = jnp.pad(wt, ((0, 0), (0, cin_pad - cin), (0, cout_pad - cout)))
    return wt.astype(compute_dtype)


def _conv_pass(x4d, wt, scale=None, shift=None, *, compute_dtype):
    """One fused pass: [BN+ReLU of the input ->] 3x3 conv -> (y, per-tile stats)."""
    n, h, w, cin = x4d.shape
    cpad = wt.shape[2]
    th = _pick_row_tile(h, w)
    nb = h // th
    mtot = n * h * w

    row_spec = pl.BlockSpec((1, th, w, cin), lambda b, i: (b, i, 0, 0))
    # 1-row halos above/below the block; clamped index maps + in-kernel masking
    # provide the conv's zero padding at the image top / bottom.
    top_spec = pl.BlockSpec((1, 1, w, cin),
                            lambda b, i: (b, jnp.maximum(i * th - 1, 0), 0, 0))
    bot_spec = pl.BlockSpec((1, 1, w, cin),
                            lambda b, i: (b, jnp.minimum(i * th + th, h - 1), 0, 0))
    # Constant index maps -> weights / scale / shift stay resident in VMEM.
    w_spec = pl.BlockSpec((9, cin, cpad), lambda b, i: (0, 0, 0))

    if scale is None:
        kernel = _conv_stats_kernel
        extra_args, extra_specs = (), []
    else:
        kernel = functools.partial(_bnrelu_conv_stats_kernel,
                                   compute_dtype=compute_dtype)
        extra_args = (scale, shift)
        extra_specs = [pl.BlockSpec((1, cin), lambda b, i: (0, 0)),
                       pl.BlockSpec((1, cin), lambda b, i: (0, 0))]

    return pl.pallas_call(
        kernel,
        out_shape=(jax.ShapeDtypeStruct((mtot, cpad), compute_dtype),
                   jax.ShapeDtypeStruct((n * nb, 2, cpad), jnp.float32)),
        grid=(n, nb),
        in_specs=[row_spec, top_spec, bot_spec] + extra_specs + [w_spec],
        out_specs=(pl.BlockSpec((th * w, cpad), lambda b, i: (b * nb + i, 0)),
                   pl.BlockSpec((1, 2, cpad), lambda b, i: (b * nb + i, 0, 0))),
        compiler_params=pltpu.CompilerParams(
            dimension_semantics=("parallel", "parallel")),
    )(x4d, x4d, x4d, *extra_args, wt)


def _fold_bn(pstats, gamma, beta, mtot):
    """Fold training-mode batch statistics into per-channel scale/shift (padded chans stay 0)."""
    cpad = pstats.shape[-1]
    cout = gamma.shape[0]
    stats = jnp.sum(pstats, axis=0)               # (2, Cpad): [sum, sumsq]
    mean = stats[0] / mtot
    var = stats[1] / mtot - mean * mean           # biased variance (BN training mode)
    inv = jax.lax.rsqrt(var + BN_EPS)
    gpad = jnp.pad(gamma.astype(jnp.float32), (0, cpad - cout))
    bpad = jnp.pad(beta.astype(jnp.float32), (0, cpad - cout))
    scale = gpad * inv
    shift = bpad - mean * scale
    return scale.reshape(1, cpad), shift.reshape(1, cpad)


def _final_bn_relu(y, scale2d, shift2d, tile_rows):
    """Pass C: streaming normalize + ReLU over the lane-dense (M, Cpad) conv output."""
    mtot, cpad = y.shape
    ntiles = max(mtot // tile_rows, 1)
    cand = [d for d in range(1, ntiles + 1)
            if ntiles % d == 0 and d * tile_rows <= 4096]
    tm = (max(cand) if cand else 1) * tile_rows
    tm = min(tm, mtot)
    return pl.pallas_call(
        _bn_relu_kernel,
        out_shape=jax.ShapeDtypeStruct((mtot, cpad), jnp.float32),
        grid=(mtot // tm,),
        in_specs=[pl.BlockSpec((tm, cpad), lambda i: (i, 0)),
                  pl.BlockSpec((1, cpad), lambda i: (0, 0)),
                  pl.BlockSpec((1, cpad), lambda i: (0, 0))],
        out_specs=pl.BlockSpec((tm, cpad), lambda i: (i, 0)),
        compiler_params=pltpu.CompilerParams(dimension_semantics=("parallel",)),
    )(y, scale2d, shift2d)


def double_conv(x_nchw, params, *, compute_dtype=jnp.float32):
    """Pallas implementation of DoubleConv.forward; input/output are NCHW."""
    x = jnp.transpose(x_nchw, (0, 2, 3, 1)).astype(compute_dtype)    # NCHW -> NHWC
    n, h, w, cin = x.shape
    cmid = params["w1"].shape[0]
    cout = params["w2"].shape[0]
    cpad1 = _round_up(cmid, LANE)
    cpad2 = _round_up(cout, LANE)
    mtot = n * h * w

    wt1 = _prep_weights(params["w1"], cin, cpad1, compute_dtype)
    # conv2 consumes the Cpad1-wide activation; padded channels are exactly 0
    # (gamma=beta=0 there) and meet zero weight rows, so padding has no effect.
    wt2 = _prep_weights(params["w2"], cpad1, cpad2, compute_dtype)

    # Block 1: conv1 + batch statistics.
    y1, st1 = _conv_pass(x, wt1, compute_dtype=compute_dtype)
    scale1, shift1 = _fold_bn(st1, params["g1"], params["b1"], mtot)

    # Block 2: BN1+ReLU fused into conv2's input load, conv2 + batch statistics.
    y2, st2 = _conv_pass(y1.reshape(n, h, w, cpad1), wt2, scale1, shift1,
                         compute_dtype=compute_dtype)
    scale2, shift2 = _fold_bn(st2, params["g2"], params["b2"], mtot)

    # Final BN2 + ReLU.
    out2d = _final_bn_relu(y2, scale2, shift2, _pick_row_tile(h, w) * w)
    out = out2d.reshape(n, h, w, cpad2)[..., :cout]
    return jnp.transpose(out, (0, 3, 1, 2))                          # NHWC -> NCHW


def ref_double_conv(x_nchw, params):
    """Pure-JAX reference (lax conv + batch-stats BN + ReLU) for validation."""
    def block(x, w, g, b):
        y = jax.lax.conv_general_dilated(
            x, w, window_strides=(1, 1), padding=((1, 1), (1, 1)),
            dimension_numbers=("NCHW", "OIHW", "NCHW"))
        mean = jnp.mean(y, axis=(0, 2, 3), keepdims=True)
        var = jnp.var(y, axis=(0, 2, 3), keepdims=True)
        yh = (y - mean) * jax.lax.rsqrt(var + BN_EPS)
        return jnp.maximum(yh * g.reshape(1, -1, 1, 1) + b.reshape(1, -1, 1, 1), 0.0)

    h = block(x_nchw, params["w1"], params["g1"], params["b1"])
    return block(h, params["w2"], params["g2"], params["b2"])


if __name__ == "__main__":
    # Small shapes consistent with the module: NCHW input.
    N, C_IN, C_OUT, H, W = 2, 4, 8, 16, 16
    C_MID = C_OUT  # mid_channels defaults to out_channels

    key = jax.random.PRNGKey(0)
    kx, kw1, kw2, kg1, kb1, kg2, kb2 = jax.random.split(key, 7)

    x = jax.random.normal(kx, (N, C_IN, H, W), dtype=jnp.float32)
    params = {
        # Conv weights in PyTorch OIHW layout, bias=False.
        "w1": 0.1 * jax.random.normal(kw1, (C_MID, C_IN, 3, 3), dtype=jnp.float32),
        "w2": 0.1 * jax.random.normal(kw2, (C_OUT, C_MID, 3, 3), dtype=jnp.float32),
        # BatchNorm affine params (deterministic, non-trivial).
        "g1": 1.0 + 0.1 * jax.random.normal(kg1, (C_MID,), dtype=jnp.float32),
        "b1": 0.1 * jax.random.normal(kb1, (C_MID,), dtype=jnp.float32),
        "g2": 1.0 + 0.1 * jax.random.normal(kg2, (C_OUT,), dtype=jnp.float32),
        "b2": 0.1 * jax.random.normal(kb2, (C_OUT,), dtype=jnp.float32),
    }

    ref = jax.block_until_ready(ref_double_conv(x, params))

    # f32 path (v5e-friendly, tight tolerance).
    run_f32 = jax.jit(functools.partial(double_conv, compute_dtype=jnp.float32))
    out = jax.block_until_ready(run_f32(x, params))
    assert out.shape == (N, C_OUT, H, W), out.shape
    assert jnp.allclose(out, ref, atol=1e-4, rtol=1e-4), float(jnp.max(jnp.abs(out - ref)))

    # bf16 MXU path (v6e/v7x): matmul operands + intermediates in bf16, f32 accum/stats.
    run_bf16 = jax.jit(functools.partial(double_conv, compute_dtype=jnp.bfloat16))
    out_bf16 = jax.block_until_ready(run_bf16(x, params))
    assert out_bf16.shape == (N, C_OUT, H, W), out_bf16.shape
    assert jnp.allclose(out_bf16, ref, atol=1e-1, rtol=1e-1), \
        float(jnp.max(jnp.abs(out_bf16 - ref)))

    print("KERNEL_OK")
</pallas_src>

<mosaic_0001>
module attributes {stable_mosaic.version = 11 : i64} {
  func.func @_conv_stats_kernel(%arg0: i32, %arg1: i32, %arg2: memref<1x8x16x4xf32, #tpu.memory_space<vmem>>, %arg3: memref<1x1x16x4xf32, #tpu.memory_space<vmem>>, %arg4: memref<1x1x16x4xf32, #tpu.memory_space<vmem>>, %arg5: memref<9x4x128xf32, #tpu.memory_space<vmem>>, %arg6: memref<128x128xf32, #tpu.memory_space<vmem>>, %arg7: memref<1x2x128xf32, #tpu.memory_space<vmem>>) attributes {dimension_semantics = [#tpu.dimension_semantics<parallel>, #tpu.dimension_semantics<parallel>], iteration_bounds = array<i64: 2, 2>, scalar_prefetch = 0 : i64, scratch_operands = 0 : i64, tpu.core_type = #tpu.core_type<tc>, window_params = [{transform_indices = @transform_0, window_bounds = array<i64: 1, 8, 16, 4>}, {transform_indices = @transform_1, window_bounds = array<i64: 1, 1, 16, 4>}, {transform_indices = @transform_2, window_bounds = array<i64: 1, 1, 16, 4>}, {pipeline_mode = #tpu.pipeline_mode<synchronous>, transform_indices = @transform_3, window_bounds = array<i64: 9, 4, 128>}, {transform_indices = @transform_4, window_bounds = array<i64: 128, 128>}, {transform_indices = @transform_5, window_bounds = array<i64: 1, 2, 128>}]} {
    %c0 = arith.constant 0 : index
    %c0_0 = arith.constant 0 : index
    %c0_1 = arith.constant 0 : index
    %c0_2 = arith.constant 0 : index
    %0 = vector.load %arg3[%c0, %c0_0, %c0_1, %c0_2] : memref<1x1x16x4xf32, #tpu.memory_space<vmem>>, vector<1x1x16x4xf32>
    %1 = vector.shape_cast %0 : vector<1x1x16x4xf32> to vector<1x16x4xf32>
    %c0_3 = arith.constant 0 : index
    %c0_4 = arith.constant 0 : index
    %c0_5 = arith.constant 0 : index
    %c0_6 = arith.constant 0 : index
    %2 = vector.load %arg2[%c0_3, %c0_4, %c0_5, %c0_6] : memref<1x8x16x4xf32, #tpu.memory_space<vmem>>, vector<1x8x16x4xf32>
    %3 = vector.shape_cast %2 : vector<1x8x16x4xf32> to vector<8x16x4xf32>
    %c0_7 = arith.constant 0 : index
    %c0_8 = arith.constant 0 : index
    %c0_9 = arith.constant 0 : index
    %c0_10 = arith.constant 0 : index
    %4 = vector.load %arg4[%c0_7, %c0_8, %c0_9, %c0_10] : memref<1x1x16x4xf32, #tpu.memory_space<vmem>>, vector<1x1x16x4xf32>
    %5 = vector.shape_cast %4 : vector<1x1x16x4xf32> to vector<1x16x4xf32>
    %c0_i32 = arith.constant 0 : i32
    %6 = arith.cmpi eq, %arg1, %c0_i32 : i32
    %cst = arith.constant 0.000000e+00 : f32
    %7 = vector.broadcast %cst : f32 to vector<1x16x4xf32>
    %8 = arith.select %6, %7, %1 : vector<1x16x4xf32>
    %c1_i32 = arith.constant 1 : i32
    %9 = arith.cmpi eq, %arg1, %c1_i32 : i32
    %cst_11 = arith.constant 0.000000e+00 : f32
    %10 = vector.broadcast %cst_11 : f32 to vector<1x16x4xf32>
    %11 = arith.select %9, %10, %5 : vector<1x16x4xf32>
    %12 = tpu.concatenate %8, %3, %11 in 0 : vector<1x16x4xf32>, vector<8x16x4xf32>, vector<1x16x4xf32> -> vector<10x16x4xf32>
    %cst_12 = arith.constant 0.000000e+00 : f32
    %13 = vector.broadcast %cst_12 : f32 to vector<10x1x4xf32>
    %14 = tpu.concatenate %13, %12, %13 in 1 : vector<10x1x4xf32>, vector<10x16x4xf32>, vector<10x1x4xf32> -> vector<10x18x4xf32>
    %cst_13 = arith.constant 0.000000e+00 : f32
    %15 = vector.broadcast %cst_13 : f32 to vector<128x128xf32>
    %16 = vector.extract_strided_slice %14 {offsets = [0, 0, 0], sizes = [8, 16, 4], strides = [1, 1, 1]} : vector<10x18x4xf32> to vector<8x16x4xf32>
    %17 = vector.shape_cast %16 : vector<8x16x4xf32> to vector<128x4xf32>
    %c0_14 = arith.constant 0 : index
    %c0_15 = arith.constant 0 : index
    %c0_16 = arith.constant 0 : index
    %18 = vector.load %arg5[%c0_14, %c0_15, %c0_16] : memref<9x4x128xf32, #tpu.memory_space<vmem>>, vector<1x4x128xf32>
    %19 = vector.shape_cast %18 : vector<1x4x128xf32> to vector<4x128xf32>
    %cst_17 = arith.constant dense<0.000000e+00> : vector<128x128xf32>
    %20 = tpu.matmul %17, %19, %cst_17 {dimension_numbers = #tpu.dot_dimension_numbers<[1], [0], [0], [1], [0, 0, 1, 1], [], []>} : vector<128x4xf32>, vector<4x128xf32>, vector<128x128xf32> -> vector<128x128xf32>
    %21 = arith.addf %15, %20 : vector<128x128xf32>
    %22 = vector.extract_strided_slice %14 {offsets = [0, 1, 0], sizes = [8, 16, 4], strides = [1, 1, 1]} : vector<10x18x4xf32> to vector<8x16x4xf32>
    %23 = vector.shape_cast %22 : vector<8x16x4xf32> to vector<128x4xf32>
    %c1 = arith.constant 1 : index
    %c0_18 = arith.constant 0 : index
    %c0_19 = arith.constant 0 : index
    %24 = vector.load %arg5[%c1, %c0_18, %c0_19] : memref<9x4x128xf32, #tpu.memory_space<vmem>>, vector<1x4x128xf32>
    %25 = vector.shape_cast %24 : vector<1x4x128xf32> to vector<4x128xf32>
    %cst_20 = arith.constant dense<0.000000e+00> : vector<128x128xf32>
    %26 = tpu.matmul %23, %25, %cst_20 {dimension_numbers = #tpu.dot_dimension_numbers<[1], [0], [0], [1], [0, 0, 1, 1], [], []>} : vector<128x4xf32>, vector<4x128xf32>, vector<128x128xf32> -> vector<128x128xf32>
    %27 = arith.addf %21, %26 : vector<128x128xf32>
    %28 = vector.extract_strided_slice %14 {offsets = [0, 2, 0], sizes = [8, 16, 4], strides = [1, 1, 1]} : vector<10x18x4xf32> to vector<8x16x4xf32>
    %29 = vector.shape_cast %28 : vector<8x16x4xf32> to vector<128x4xf32>
    %c2 = arith.constant 2 : index
    %c0_21 = arith.constant 0 : index
    %c0_22 = arith.constant 0 : index
    %30 = vector.load %arg5[%c2, %c0_21, %c0_22] : memref<9x4x128xf32, #tpu.memory_space<vmem>>, vector<1x4x128xf32>
    %31 = vector.shape_cast %30 : vector<1x4x128xf32> to vector<4x128xf32>
    %cst_23 = arith.constant dense<0.000000e+00> : vector<128x128xf32>
    %32 = tpu.matmul %29, %31, %cst_23 {dimension_numbers = #tpu.dot_dimension_numbers<[1], [0], [0], [1], [0, 0, 1, 1], [], []>} : vector<128x4xf32>, vector<4x128xf32>, vector<128x128xf32> -> vector<128x128xf32>
    %33 = arith.addf %27, %32 : vector<128x128xf32>
    %34 = vector.extract_strided_slice %14 {offsets = [1, 0, 0], sizes = [8, 16, 4], strides = [1, 1, 1]} : vector<10x18x4xf32> to vector<8x16x4xf32>
    %35 = vector.shape_cast %34 : vector<8x16x4xf32> to vector<128x4xf32>
    %c3 = arith.constant 3 : index
    %c0_24 = arith.constant 0 : index
    %c0_25 = arith.constant 0 : index
    %36 = vector.load %arg5[%c3, %c0_24, %c0_25] : memref<9x4x128xf32, #tpu.memory_space<vmem>>, vector<1x4x128xf32>
    %37 = vector.shape_cast %36 : vector<1x4x128xf32> to vector<4x128xf32>
    %cst_26 = arith.constant dense<0.000000e+00> : vector<128x128xf32>
    %38 = tpu.matmul %35, %37, %cst_26 {dimension_numbers = #tpu.dot_dimension_numbers<[1], [0], [0], [1], [0, 0, 1, 1], [], []>} : vector<128x4xf32>, vector<4x128xf32>, vector<128x128xf32> -> vector<128x128xf32>
    %39 = arith.addf %33, %38 : vector<128x128xf32>
    %40 = vector.extract_strided_slice %14 {offsets = [1, 1, 0], sizes = [8, 16, 4], strides = [1, 1, 1]} : vector<10x18x4xf32> to vector<8x16x4xf32>
    %41 = vector.shape_cast %40 : vector<8x16x4xf32> to vector<128x4xf32>
    %c4 = arith.constant 4 : index
    %c0_27 = arith.constant 0 : index
    %c0_28 = arith.constant 0 : index
    %42 = vector.load %arg5[%c4, %c0_27, %c0_28] : memref<9x4x128xf32, #tpu.memory_space<vmem>>, vector<1x4x128xf32>
    %43 = vector.shape_cast %42 : vector<1x4x128xf32> to vector<4x128xf32>
    %cst_29 = arith.constant dense<0.000000e+00> : vector<128x128xf32>
    %44 = tpu.matmul %41, %43, %cst_29 {dimension_numbers = #tpu.dot_dimension_numbers<[1], [0], [0], [1], [0, 0, 1, 1], [], []>} : vector<128x4xf32>, vector<4x128xf32>, vector<128x128xf32> -> vector<128x128xf32>
    %45 = arith.addf %39, %44 : vector<128x128xf32>
    %46 = vector.extract_strided_slice %14 {offsets = [1, 2, 0], sizes = [8, 16, 4], strides = [1, 1, 1]} : vector<10x18x4xf32> to vector<8x16x4xf32>
    %47 = vector.shape_cast %46 : vector<8x16x4xf32> to vector<128x4xf32>
    %c5 = arith.constant 5 : index
    %c0_30 = arith.constant 0 : index
    %c0_31 = arith.constant 0 : index
    %48 = vector.load %arg5[%c5, %c0_30, %c0_31] : memref<9x4x128xf32, #tpu.memory_space<vmem>>, vector<1x4x128xf32>
    %49 = vector.shape_cast %48 : vector<1x4x128xf32> to vector<4x128xf32>
    %cst_32 = arith.constant dense<0.000000e+00> : vector<128x128xf32>
    %50 = tpu.matmul %47, %49, %cst_32 {dimension_numbers = #tpu.dot_dimension_numbers<[1], [0], [0], [1], [0, 0, 1, 1], [], []>} : vector<128x4xf32>, vector<4x128xf32>, vector<128x128xf32> -> vector<128x128xf32>
    %51 = arith.addf %45, %50 : vector<128x128xf32>
    %52 = vector.extract_strided_slice %14 {offsets = [2, 0, 0], sizes = [8, 16, 4], strides = [1, 1, 1]} : vector<10x18x4xf32> to vector<8x16x4xf32>
    %53 = vector.shape_cast %52 : vector<8x16x4xf32> to vector<128x4xf32>
    %c6 = arith.constant 6 : index
    %c0_33 = arith.constant 0 : index
    %c0_34 = arith.constant 0 : index
    %54 = vector.load %arg5[%c6, %c0_33, %c0_34] : memref<9x4x128xf32, #tpu.memory_space<vmem>>, vector<1x4x128xf32>
    %55 = vector.shape_cast %54 : vector<1x4x128xf32> to vector<4x128xf32>
    %cst_35 = arith.constant dense<0.000000e+00> : vector<128x128xf32>
    %56 = tpu.matmul %53, %55, %cst_35 {dimension_numbers = #tpu.dot_dimension_numbers<[1], [0], [0], [1], [0, 0, 1, 1], [], []>} : vector<128x4xf32>, vector<4x128xf32>, vector<128x128xf32> -> vector<128x128xf32>
    %57 = arith.addf %51, %56 : vector<128x128xf32>
    %58 = vector.extract_strided_slice %14 {offsets = [2, 1, 0], sizes = [8, 16, 4], strides = [1, 1, 1]} : vector<10x18x4xf32> to vector<8x16x4xf32>
    %59 = vector.shape_cast %58 : vector<8x16x4xf32> to vector<128x4xf32>
    %c7 = arith.constant 7 : index
    %c0_36 = arith.constant 0 : index
    %c0_37 = arith.constant 0 : index
    %60 = vector.load %arg5[%c7, %c0_36, %c0_37] : memref<9x4x128xf32, #tpu.memory_space<vmem>>, vector<1x4x128xf32>
    %61 = vector.shape_cast %60 : vector<1x4x128xf32> to vector<4x128xf32>
    %cst_38 = arith.constant dense<0.000000e+00> : vector<128x128xf32>
    %62 = tpu.matmul %59, %61, %cst_38 {dimension_numbers = #tpu.dot_dimension_numbers<[1], [0], [0], [1], [0, 0, 1, 1], [], []>} : vector<128x4xf32>, vector<4x128xf32>, vector<128x128xf32> -> vector<128x128xf32>
    %63 = arith.addf %57, %62 : vector<128x128xf32>
    %64 = vector.extract_strided_slice %14 {offsets = [2, 2, 0], sizes = [8, 16, 4], strides = [1, 1, 1]} : vector<10x18x4xf32> to vector<8x16x4xf32>
    %65 = vector.shape_cast %64 : vector<8x16x4xf32> to vector<128x4xf32>
    %c8 = arith.constant 8 : index
    %c0_39 = arith.constant 0 : index
    %c0_40 = arith.constant 0 : index
    %66 = vector.load %arg5[%c8, %c0_39, %c0_40] : memref<9x4x128xf32, #tpu.memory_space<vmem>>, vector<1x4x128xf32>
    %67 = vector.shape_cast %66 : vector<1x4x128xf32> to vector<4x128xf32>
    %cst_41 = arith.constant dense<0.000000e+00> : vector<128x128xf32>
    %68 = tpu.matmul %65, %67, %cst_41 {dimension_numbers = #tpu.dot_dimension_numbers<[1], [0], [0], [1], [0, 0, 1, 1], [], []>} : vector<128x4xf32>, vector<4x128xf32>, vector<128x128xf32> -> vector<128x128xf32>
    %69 = arith.addf %63, %68 : vector<128x128xf32>
    %c0_42 = arith.constant 0 : index
    %c0_43 = arith.constant 0 : index
    %70 = vector.load %arg6[%c0_42, %c0_43] : memref<128x128xf32, #tpu.memory_space<vmem>>, vector<128x128xf32>
    tpu.vector_store %arg6[%c0_42, %c0_43], %69 {strides = array<i32>} : memref<128x128xf32, #tpu.memory_space<vmem>>, vector<128x128xf32>,
    %cst_44 = arith.constant dense<0.000000e+00> : vector<128xf32>
    %71 = vector.multi_reduction <add>, %69, %cst_44 [0] : vector<128x128xf32> to vector<128xf32>
    %72 = vector.shape_cast %71 : vector<128xf32> to vector<1x128xf32>
    %73 = arith.mulf %69, %69 : vector<128x128xf32>
    %cst_45 = arith.constant dense<0.000000e+00> : vector<128xf32>
    %74 = vector.multi_reduction <add>, %73, %cst_45 [0] : vector<128x128xf32> to vector<128xf32>
    %75 = vector.shape_cast %74 : vector<128xf32> to vector<1x128xf32>
    %76 = tpu.concatenate %72, %75 in 0 : vector<1x128xf32>, vector<1x128xf32> -> vector<2x128xf32>
    %77 = vector.shape_cast %76 : vector<2x128xf32> to vector<1x2x128xf32>
    %c0_46 = arith.constant 0 : index
    %c0_47 = arith.constant 0 : index
    %c0_48 = arith.constant 0 : index
    %78 = vector.load %arg7[%c0_46, %c0_47, %c0_48] : memref<1x2x128xf32, #tpu.memory_space<vmem>>, vector<1x2x128xf32>
    tpu.vector_store %arg7[%c0_46, %c0_47, %c0_48], %77 {strides = array<i32>} : memref<1x2x128xf32, #tpu.memory_space<vmem>>, vector<1x2x128xf32>,
    return
  }
  func.func @transform_0(%arg0: i32, %arg1: i32) -> (i32, i32, i32, i32) {
    %c0_i32 = arith.constant 0 : i32
    %c0_i32_0 = arith.constant 0 : i32
    %c0_i32_1 = arith.constant 0 : i32
    return %arg0, %arg1, %c0_i32, %c0_i32_0 : i32, i32, i32, i32
  }
  func.func @transform_1(%arg0: i32, %arg1: i32) -> (i32, i32, i32, i32) {
    %c8_i32 = arith.constant 8 : i32
    %0 = arith.muli %arg1, %c8_i32 : i32
    %c1_i32 = arith.constant 1 : i32
    %1 = arith.subi %0, %c1_i32 : i32
    %c0_i32 = arith.constant 0 : i32
    %2 = arith.maxsi %1, %c0_i32 : i32
    %c0_i32_0 = arith.constant 0 : i32
    %c0_i32_1 = arith.constant 0 : i32
    %c0_i32_2 = arith.constant 0 : i32
    return %arg0, %2, %c0_i32_0, %c0_i32_1 : i32, i32, i32, i32
  }
  func.func @transform_2(%arg0: i32, %arg1: i32) -> (i32, i32, i32, i32) {
    %c8_i32 = arith.constant 8 : i32
    %0 = arith.muli %arg1, %c8_i32 : i32
    %c8_i32_0 = arith.constant 8 : i32
    %1 = arith.addi %0, %c8_i32_0 : i32
    %c15_i32 = arith.constant 15 : i32
    %2 = arith.minsi %1, %c15_i32 : i32
    %c0_i32 = arith.constant 0 : i32
    %c0_i32_1 = arith.constant 0 : i32
    %c0_i32_2 = arith.constant 0 : i32
    return %arg0, %2, %c0_i32, %c0_i32_1 : i32, i32, i32, i32
  }
  func.func @transform_3(%arg0: i32, %arg1: i32) -> (i32, i32, i32) {
    %c0_i32 = arith.constant 0 : i32
    %c0_i32_0 = arith.constant 0 : i32
    %c0_i32_1 = arith.constant 0 : i32
    %c0_i32_2 = arith.constant 0 : i32
    return %c0_i32, %c0_i32_0, %c0_i32_1 : i32, i32, i32
  }
  func.func @transform_4(%arg0: i32, %arg1: i32) -> (i32, i32) {
    %c2_i32 = arith.constant 2 : i32
    %0 = arith.muli %arg0, %c2_i32 : i32
    %1 = arith.addi %0, %arg1 : i32
    %c0_i32 = arith.constant 0 : i32
    %c0_i32_0 = arith.constant 0 : i32
    return %1, %c0_i32 : i32, i32
  }
  func.func @transform_5(%arg0: i32, %arg1: i32) -> (i32, i32, i32) {
    %c2_i32 = arith.constant 2 : i32
    %0 = arith.muli %arg0, %c2_i32 : i32
    %1 = arith.addi %0, %arg1 : i32
    %c0_i32 = arith.constant 0 : i32
    %c0_i32_0 = arith.constant 0 : i32
    %c0_i32_1 = arith.constant 0 : i32
    return %1, %c0_i32, %c0_i32_0 : i32, i32, i32
  }
}

module attributes {stable_mosaic.version = 11 : i64} {
  func.func @_bn_relu_kernel(%arg0: i32, %arg1: memref<512x128xf32, #tpu.memory_space<vmem>>, %arg2: memref<1x128xf32, #tpu.memory_space<vmem>>, %arg3: memref<1x128xf32, #tpu.memory_space<vmem>>, %arg4: memref<512x128xf32, #tpu.memory_space<vmem>>) attributes {dimension_semantics = [#tpu.dimension_semantics<parallel>], iteration_bounds = array<i64: 1>, scalar_prefetch = 0 : i64, scratch_operands = 0 : i64, tpu.core_type = #tpu.core_type<tc>, window_params = [{transform_indices = @transform_0, window_bounds = array<i64: 512, 128>}, {pipeline_mode = #tpu.pipeline_mode<synchronous>, transform_indices = @transform_1, window_bounds = array<i64: 1, 128>}, {pipeline_mode = #tpu.pipeline_mode<synchronous>, transform_indices = @transform_2, window_bounds = array<i64: 1, 128>}, {transform_indices = @transform_3, window_bounds = array<i64: 512, 128>}]} {
    %c0 = arith.constant 0 : index
    %c0_0 = arith.constant 0 : index
    %0 = vector.load %arg1[%c0, %c0_0] : memref<512x128xf32, #tpu.memory_space<vmem>>, vector<512x128xf32>
    %c0_1 = arith.constant 0 : index
    %c0_2 = arith.constant 0 : index
    %1 = vector.load %arg2[%c0_1, %c0_2] : memref<1x128xf32, #tpu.memory_space<vmem>>, vector<1x128xf32>
    %2 = vector.broadcast %1 : vector<1x128xf32> to vector<512x128xf32>
    %3 = arith.mulf %0, %2 : vector<512x128xf32>
    %c0_3 = arith.constant 0 : index
    %c0_4 = arith.constant 0 : index
    %4 = vector.load %arg3[%c0_3, %c0_4] : memref<1x128xf32, #tpu.memory_space<vmem>>, vector<1x128xf32>
    %5 = vector.broadcast %4 : vector<1x128xf32> to vector<512x128xf32>
    %6 = arith.addf %3, %5 : vector<512x128xf32>
    %cst = arith.constant 0.000000e+00 : f32
    %7 = vector.broadcast %cst : f32 to vector<512x128xf32>
    %8 = arith.maximumf %6, %7 : vector<512x128xf32>
    %c0_5 = arith.constant 0 : index
    %c0_6 = arith.constant 0 : index
    %9 = vector.load %arg4[%c0_5, %c0_6] : memref<512x128xf32, #tpu.memory_space<vmem>>, vector<512x128xf32>
    tpu.vector_store %arg4[%c0_5, %c0_6], %8 {strides = array<i32>} : memref<512x128xf32, #tpu.memory_space<vmem>>, vector<512x128xf32>,
    return
  }
  func.func @transform_0(%arg0: i32) -> (i32, i32) {
    %c0_i32 = arith.constant 0 : i32
    %c0_i32_0 = arith.constant 0 : i32
    return %arg0, %c0_i32 : i32, i32
  }
  func.func @transform_1(%arg0: i32) -> (i32, i32) {
    %c0_i32 = arith.constant 0 : i32
    %c0_i32_0 = arith.constant 0 : i32
    %c0_i32_1 = arith.constant 0 : i32
    return %c0_i32, %c0_i32_0 : i32, i32
  }
  func.func @transform_2(%arg0: i32) -> (i32, i32) {
    %c0_i32 = arith.constant 0 : i32
    %c0_i32_0 = arith.constant 0 : i32
    %c0_i32_1 = arith.constant 0 : i32
    return %c0_i32, %c0_i32_0 : i32, i32
  }
  func.func @transform_3(%arg0: i32) -> (i32, i32) {
    %c0_i32 = arith.constant 0 : i32
    %c0_i32_0 = arith.constant 0 : i32
    return %arg0, %c0_i32 : i32, i32
  }
}

module attributes {stable_mosaic.version = 11 : i64} {
  func.func @_bnrelu_conv_stats_kernel(%arg0: i32, %arg1: i32, %arg2: memref<1x8x16x128xf32, #tpu.memory_space<vmem>>, %arg3: memref<1x1x16x128xf32, #tpu.memory_space<vmem>>, %arg4: memref<1x1x16x128xf32, #tpu.memory_space<vmem>>, %arg5: memref<1x128xf32, #tpu.memory_space<vmem>>, %arg6: memref<1x128xf32, #tpu.memory_space<vmem>>, %arg7: memref<9x128x128xf32, #tpu.memory_space<vmem>>, %arg8: memref<128x128xf32, #tpu.memory_space<vmem>>, %arg9: memref<1x2x128xf32, #tpu.memory_space<vmem>>) attributes {dimension_semantics = [#tpu.dimension_semantics<parallel>, #tpu.dimension_semantics<parallel>], iteration_bounds = array<i64: 2, 2>, scalar_prefetch = 0 : i64, scratch_operands = 0 : i64, tpu.core_type = #tpu.core_type<tc>, window_params = [{transform_indices = @transform_0, window_bounds = array<i64: 1, 8, 16, 128>}, {transform_indices = @transform_1, window_bounds = array<i64: 1, 1, 16, 128>}, {transform_indices = @transform_2, window_bounds = array<i64: 1, 1, 16, 128>}, {pipeline_mode = #tpu.pipeline_mode<synchronous>, transform_indices = @transform_3, window_bounds = array<i64: 1, 128>}, {pipeline_mode = #tpu.pipeline_mode<synchronous>, transform_indices = @transform_4, window_bounds = array<i64: 1, 128>}, {pipeline_mode = #tpu.pipeline_mode<synchronous>, transform_indices = @transform_5, window_bounds = array<i64: 9, 128, 128>}, {transform_indices = @transform_6, window_bounds = array<i64: 128, 128>}, {transform_indices = @transform_7, window_bounds = array<i64: 1, 2, 128>}]} {
    %c0 = arith.constant 0 : index
    %c0_0 = arith.constant 0 : index
    %0 = vector.load %arg5[%c0, %c0_0] : memref<1x128xf32, #tpu.memory_space<vmem>>, vector<1x128xf32>
    %1 = vector.shape_cast %0 : vector<1x128xf32> to vector<1x1x128xf32>
    %c0_1 = arith.constant 0 : index
    %c0_2 = arith.constant 0 : index
    %2 = vector.load %arg6[%c0_1, %c0_2] : memref<1x128xf32, #tpu.memory_space<vmem>>, vector<1x128xf32>
    %3 = vector.shape_cast %2 : vector<1x128xf32> to vector<1x1x128xf32>
    %c0_3 = arith.constant 0 : index
    %c0_4 = arith.constant 0 : index
    %c0_5 = arith.constant 0 : index
    %c0_6 = arith.constant 0 : index
    %4 = vector.load %arg3[%c0_3, %c0_4, %c0_5, %c0_6] : memref<1x1x16x128xf32, #tpu.memory_space<vmem>>, vector<1x1x16x128xf32>
    %5 = vector.shape_cast %4 : vector<1x1x16x128xf32> to vector<1x16x128xf32>
    %6 = vector.broadcast %1 : vector<1x1x128xf32> to vector<1x16x128xf32>
    %7 = arith.mulf %5, %6 : vector<1x16x128xf32>
    %8 = vector.broadcast %3 : vector<1x1x128xf32> to vector<1x16x128xf32>
    %9 = arith.addf %7, %8 : vector<1x16x128xf32>
    %cst = arith.constant 0.000000e+00 : f32
    %10 = vector.broadcast %cst : f32 to vector<1x16x128xf32>
    %11 = arith.maximumf %9, %10 : vector<1x16x128xf32>
    %c0_7 = arith.constant 0 : index
    %c0_8 = arith.constant 0 : index
    %c0_9 = arith.constant 0 : index
    %c0_10 = arith.constant 0 : index
    %12 = vector.load %arg2[%c0_7, %c0_8, %c0_9, %c0_10] : memref<1x8x16x128xf32, #tpu.memory_space<vmem>>, vector<1x8x16x128xf32>
    %13 = vector.shape_cast %12 : vector<1x8x16x128xf32> to vector<8x16x128xf32>
    %14 = vector.broadcast %1 : vector<1x1x128xf32> to vector<8x16x128xf32>
    %15 = arith.mulf %13, %14 : vector<8x16x128xf32>
    %16 = vector.broadcast %3 : vector<1x1x128xf32> to vector<8x16x128xf32>
    %17 = arith.addf %15, %16 : vector<8x16x128xf32>
    %cst_11 = arith.constant 0.000000e+00 : f32
    %18 = vector.broadcast %cst_11 : f32 to vector<8x16x128xf32>
    %19 = arith.maximumf %17, %18 : vector<8x16x128xf32>
    %c0_12 = arith.constant 0 : index
    %c0_13 = arith.constant 0 : index
    %c0_14 = arith.constant 0 : index
    %c0_15 = arith.constant 0 : index
    %20 = vector.load %arg4[%c0_12, %c0_13, %c0_14, %c0_15] : memref<1x1x16x128xf32, #tpu.memory_space<vmem>>, vector<1x1x16x128xf32>
    %21 = vector.shape_cast %20 : vector<1x1x16x128xf32> to vector<1x16x128xf32>
    %22 = vector.broadcast %1 : vector<1x1x128xf32> to vector<1x16x128xf32>
    %23 = arith.mulf %21, %22 : vector<1x16x128xf32>
    %24 = vector.broadcast %3 : vector<1x1x128xf32> to vector<1x16x128xf32>
    %25 = arith.addf %23, %24 : vector<1x16x128xf32>
    %cst_16 = arith.constant 0.000000e+00 : f32
    %26 = vector.broadcast %cst_16 : f32 to vector<1x16x128xf32>
    %27 = arith.maximumf %25, %26 : vector<1x16x128xf32>
    %c0_i32 = arith.constant 0 : i32
    %28 = arith.cmpi eq, %arg1, %c0_i32 : i32
    %cst_17 = arith.constant 0.000000e+00 : f32
    %29 = vector.broadcast %cst_17 : f32 to vector<1x16x128xf32>
    %30 = arith.select %28, %29, %11 : vector<1x16x128xf32>
    %c1_i32 = arith.constant 1 : i32
    %31 = arith.cmpi eq, %arg1, %c1_i32 : i32
    %cst_18 = arith.constant 0.000000e+00 : f32
    %32 = vector.broadcast %cst_18 : f32 to vector<1x16x128xf32>
    %33 = arith.select %31, %32, %27 : vector<1x16x128xf32>
    %34 = tpu.concatenate %30, %19, %33 in 0 : vector<1x16x128xf32>, vector<8x16x128xf32>, vector<1x16x128xf32> -> vector<10x16x128xf32>
    %cst_19 = arith.constant 0.000000e+00 : f32
    %35 = vector.broadcast %cst_19 : f32 to vector<10x1x128xf32>
    %36 = tpu.concatenate %35, %34, %35 in 1 : vector<10x1x128xf32>, vector<10x16x128xf32>, vector<10x1x128xf32> -> vector<10x18x128xf32>
    %cst_20 = arith.constant 0.000000e+00 : f32
    %37 = vector.broadcast %cst_20 : f32 to vector<128x128xf32>
    %38 = vector.extract_strided_slice %36 {offsets = [0, 0, 0], sizes = [8, 16, 128], strides = [1, 1, 1]} : vector<10x18x128xf32> to vector<8x16x128xf32>
    %39 = vector.shape_cast %38 : vector<8x16x128xf32> to vector<128x128xf32>
    %c0_21 = arith.constant 0 : index
    %c0_22 = arith.constant 0 : index
    %c0_23 = arith.constant 0 : index
    %40 = vector.load %arg7[%c0_21, %c0_22, %c0_23] : memref<9x128x128xf32, #tpu.memory_space<vmem>>, vector<1x128x128xf32>
    %41 = vector.shape_cast %40 : vector<1x128x128xf32> to vector<128x128xf32>
    %cst_24 = arith.constant dense<0.000000e+00> : vector<128x128xf32>
    %42 = tpu.matmul %39, %41, %cst_24 {dimension_numbers = #tpu.dot_dimension_numbers<[1], [0], [0], [1], [0, 0, 1, 1], [], []>} : vector<128x128xf32>, vector<128x128xf32>, vector<128x128xf32> -> vector<128x128xf32>
    %43 = arith.addf %37, %42 : vector<128x128xf32>
    %44 = vector.extract_strided_slice %36 {offsets = [0, 1, 0], sizes = [8, 16, 128], strides = [1, 1, 1]} : vector<10x18x128xf32> to vector<8x16x128xf32>
    %45 = vector.shape_cast %44 : vector<8x16x128xf32> to vector<128x128xf32>
    %c1 = arith.constant 1 : index
    %c0_25 = arith.constant 0 : index
    %c0_26 = arith.constant 0 : index
    %46 = vector.load %arg7[%c1, %c0_25, %c0_26] : memref<9x128x128xf32, #tpu.memory_space<vmem>>, vector<1x128x128xf32>
    %47 = vector.shape_cast %46 : vector<1x128x128xf32> to vector<128x128xf32>
    %cst_27 = arith.constant dense<0.000000e+00> : vector<128x128xf32>
    %48 = tpu.matmul %45, %47, %cst_27 {dimension_numbers = #tpu.dot_dimension_numbers<[1], [0], [0], [1], [0, 0, 1, 1], [], []>} : vector<128x128xf32>, vector<128x128xf32>, vector<128x128xf32> -> vector<128x128xf32>
    %49 = arith.addf %43, %48 : vector<128x128xf32>
    %50 = vector.extract_strided_slice %36 {offsets = [0, 2, 0], sizes = [8, 16, 128], strides = [1, 1, 1]} : vector<10x18x128xf32> to vector<8x16x128xf32>
    %51 = vector.shape_cast %50 : vector<8x16x128xf32> to vector<128x128xf32>
    %c2 = arith.constant 2 : index
    %c0_28 = arith.constant 0 : index
    %c0_29 = arith.constant 0 : index
    %52 = vector.load %arg7[%c2, %c0_28, %c0_29] : memref<9x128x128xf32, #tpu.memory_space<vmem>>, vector<1x128x128xf32>
    %53 = vector.shape_cast %52 : vector<1x128x128xf32> to vector<128x128xf32>
    %cst_30 = arith.constant dense<0.000000e+00> : vector<128x128xf32>
    %54 = tpu.matmul %51, %53, %cst_30 {dimension_numbers = #tpu.dot_dimension_numbers<[1], [0], [0], [1], [0, 0, 1, 1], [], []>} : vector<128x128xf32>, vector<128x128xf32>, vector<128x128xf32> -> vector<128x128xf32>
    %55 = arith.addf %49, %54 : vector<128x128xf32>
    %56 = vector.extract_strided_slice %36 {offsets = [1, 0, 0], sizes = [8, 16, 128], strides = [1, 1, 1]} : vector<10x18x128xf32> to vector<8x16x128xf32>
    %57 = vector.shape_cast %56 : vector<8x16x128xf32> to vector<128x128xf32>
    %c3 = arith.constant 3 : index
    %c0_31 = arith.constant 0 : index
    %c0_32 = arith.constant 0 : index
    %58 = vector.load %arg7[%c3, %c0_31, %c0_32] : memref<9x128x128xf32, #tpu.memory_space<vmem>>, vector<1x128x128xf32>
    %59 = vector.shape_cast %58 : vector<1x128x128xf32> to vector<128x128xf32>
    %cst_33 = arith.constant dense<0.000000e+00> : vector<128x128xf32>
    %60 = tpu.matmul %57, %59, %cst_33 {dimension_numbers = #tpu.dot_dimension_numbers<[1], [0], [0], [1], [0, 0, 1, 1], [], []>} : vector<128x128xf32>, vector<128x128xf32>, vector<128x128xf32> -> vector<128x128xf32>
    %61 = arith.addf %55, %60 : vector<128x128xf32>
    %62 = vector.extract_strided_slice %36 {offsets = [1, 1, 0], sizes = [8, 16, 128], strides = [1, 1, 1]} : vector<10x18x128xf32> to vector<8x16x128xf32>
    %63 = vector.shape_cast %62 : vector<8x16x128xf32> to vector<128x128xf32>
    %c4 = arith.constant 4 : index
    %c0_34 = arith.constant 0 : index
    %c0_35 = arith.constant 0 : index
    %64 = vector.load %arg7[%c4, %c0_34, %c0_35] : memref<9x128x128xf32, #tpu.memory_space<vmem>>, vector<1x128x128xf32>
    %65 = vector.shape_cast %64 : vector<1x128x128xf32> to vector<128x128xf32>
    %cst_36 = arith.constant dense<0.000000e+00> : vector<128x128xf32>
    %66 = tpu.matmul %63, %65, %cst_36 {dimension_numbers = #tpu.dot_dimension_numbers<[1], [0], [0], [1], [0, 0, 1, 1], [], []>} : vector<128x128xf32>, vector<128x128xf32>, vector<128x128xf32> -> vector<128x128xf32>
    %67 = arith.addf %61, %66 : vector<128x128xf32>
    %68 = vector.extract_strided_slice %36 {offsets = [1, 2, 0], sizes = [8, 16, 128], strides = [1, 1, 1]} : vector<10x18x128xf32> to vector<8x16x128xf32>
    %69 = vector.shape_cast %68 : vector<8x16x128xf32> to vector<128x128xf32>
    %c5 = arith.constant 5 : index
    %c0_37 = arith.constant 0 : index
    %c0_38 = arith.constant 0 : index
    %70 = vector.load %arg7[%c5, %c0_37, %c0_38] : memref<9x128x128xf32, #tpu.memory_space<vmem>>, vector<1x128x128xf32>
    %71 = vector.shape_cast %70 : vector<1x128x128xf32> to vector<128x128xf32>
    %cst_39 = arith.constant dense<0.000000e+00> : vector<128x128xf32>
    %72 = tpu.matmul %69, %71, %cst_39 {dimension_numbers = #tpu.dot_dimension_numbers<[1], [0], [0], [1], [0, 0, 1, 1], [], []>} : vector<128x128xf32>, vector<128x128xf32>, vector<128x128xf32> -> vector<128x128xf32>
    %73 = arith.addf %67, %72 : vector<128x128xf32>
    %74 = vector.extract_strided_slice %36 {offsets = [2, 0, 0], sizes = [8, 16, 128], strides = [1, 1, 1]} : vector<10x18x128xf32> to vector<8x16x128xf32>
    %75 = vector.shape_cast %74 : vector<8x16x128xf32> to vector<128x128xf32>
    %c6 = arith.constant 6 : index
    %c0_40 = arith.constant 0 : index
    %c0_41 = arith.constant 0 : index
    %76 = vector.load %arg7[%c6, %c0_40, %c0_41] : memref<9x128x128xf32, #tpu.memory_space<vmem>>, vector<1x128x128xf32>
    %77 = vector.shape_cast %76 : vector<1x128x128xf32> to vector<128x128xf32>
    %cst_42 = arith.constant dense<0.000000e+00> : vector<128x128xf32>
    %78 = tpu.matmul %75, %77, %cst_42 {dimension_numbers = #tpu.dot_dimension_numbers<[1], [0], [0], [1], [0, 0, 1, 1], [], []>} : vector<128x128xf32>, vector<128x128xf32>, vector<128x128xf32> -> vector<128x128xf32>
    %79 = arith.addf %73, %78 : vector<128x128xf32>
    %80 = vector.extract_strided_slice %36 {offsets = [2, 1, 0], sizes = [8, 16, 128], strides = [1, 1, 1]} : vector<10x18x128xf32> to vector<8x16x128xf32>
    %81 = vector.shape_cast %80 : vector<8x16x128xf32> to vector<128x128xf32>
    %c7 = arith.constant 7 : index
    %c0_43 = arith.constant 0 : index
    %c0_44 = arith.constant 0 : index
    %82 = vector.load %arg7[%c7, %c0_43, %c0_44] : memref<9x128x128xf32, #tpu.memory_space<vmem>>, vector<1x128x128xf32>
    %83 = vector.shape_cast %82 : vector<1x128x128xf32> to vector<128x128xf32>
    %cst_45 = arith.constant dense<0.000000e+00> : vector<128x128xf32>
    %84 = tpu.matmul %81, %83, %cst_45 {dimension_numbers = #tpu.dot_dimension_numbers<[1], [0], [0], [1], [0, 0, 1, 1], [], []>} : vector<128x128xf32>, vector<128x128xf32>, vector<128x128xf32> -> vector<128x128xf32>
    %85 = arith.addf %79, %84 : vector<128x128xf32>
    %86 = vector.extract_strided_slice %36 {offsets = [2, 2, 0], sizes = [8, 16, 128], strides = [1, 1, 1]} : vector<10x18x128xf32> to vector<8x16x128xf32>
    %87 = vector.shape_cast %86 : vector<8x16x128xf32> to vector<128x128xf32>
    %c8 = arith.constant 8 : index
    %c0_46 = arith.constant 0 : index
    %c0_47 = arith.constant 0 : index
    %88 = vector.load %arg7[%c8, %c0_46, %c0_47] : memref<9x128x128xf32, #tpu.memory_space<vmem>>, vector<1x128x128xf32>
    %89 = vector.shape_cast %88 : vector<1x128x128xf32> to vector<128x128xf32>
    %cst_48 = arith.constant dense<0.000000e+00> : vector<128x128xf32>
    %90 = tpu.matmul %87, %89, %cst_48 {dimension_numbers = #tpu.dot_dimension_numbers<[1], [0], [0], [1], [0, 0, 1, 1], [], []>} : vector<128x128xf32>, vector<128x128xf32>, vector<128x128xf32> -> vector<128x128xf32>
    %91 = arith.addf %85, %90 : vector<128x128xf32>
    %c0_49 = arith.constant 0 : index
    %c0_50 = arith.constant 0 : index
    %92 = vector.load %arg8[%c0_49, %c0_50] : memref<128x128xf32, #tpu.memory_space<vmem>>, vector<128x128xf32>
    tpu.vector_store %arg8[%c0_49, %c0_50], %91 {strides = array<i32>} : memref<128x128xf32, #tpu.memory_space<vmem>>, vector<128x128xf32>,
    %cst_51 = arith.constant dense<0.000000e+00> : vector<128xf32>
    %93 = vector.multi_reduction <add>, %91, %cst_51 [0] : vector<128x128xf32> to vector<128xf32>
    %94 = vector.shape_cast %93 : vector<128xf32> to vector<1x128xf32>
    %95 = arith.mulf %91, %91 : vector<128x128xf32>
    %cst_52 = arith.constant dense<0.000000e+00> : vector<128xf32>
    %96 = vector.multi_reduction <add>, %95, %cst_52 [0] : vector<128x128xf32> to vector<128xf32>
    %97 = vector.shape_cast %96 : vector<128xf32> to vector<1x128xf32>
    %98 = tpu.concatenate %94, %97 in 0 : vector<1x128xf32>, vector<1x128xf32> -> vector<2x128xf32>
    %99 = vector.shape_cast %98 : vector<2x128xf32> to vector<1x2x128xf32>
    %c0_53 = arith.constant 0 : index
    %c0_54 = arith.constant 0 : index
    %c0_55 = arith.constant 0 : index
    %100 = vector.load %arg9[%c0_53, %c0_54, %c0_55] : memref<1x2x128xf32, #tpu.memory_space<vmem>>, vector<1x2x128xf32>
    tpu.vector_store %arg9[%c0_53, %c0_54, %c0_55], %99 {strides = array<i32>} : memref<1x2x128xf32, #tpu.memory_space<vmem>>, vector<1x2x128xf32>,
    return
  }
  func.func @transform_0(%arg0: i32, %arg1: i32) -> (i32, i32, i32, i32) {
    %c0_i32 = arith.constant 0 : i32
    %c0_i32_0 = arith.constant 0 : i32
    %c0_i32_1 = arith.constant 0 : i32
    return %arg0, %arg1, %c0_i32, %c0_i32_0 : i32, i32, i32, i32
  }
  func.func @transform_1(%arg0: i32, %arg1: i32) -> (i32, i32, i32, i32) {
    %c8_i32 = arith.constant 8 : i32
    %0 = arith.muli %arg1, %c8_i32 : i32
    %c1_i32 = arith.constant 1 : i32
    %1 = arith.subi %0, %c1_i32 : i32
    %c0_i32 = arith.constant 0 : i32
    %2 = arith.maxsi %1, %c0_i32 : i32
    %c0_i32_0 = arith.constant 0 : i32
    %c0_i32_1 = arith.constant 0 : i32
    %c0_i32_2 = arith.constant 0 : i32
    return %arg0, %2, %c0_i32_0, %c0_i32_1 : i32, i32, i32, i32
  }
  func.func @transform_2(%arg0: i32, %arg1: i32) -> (i32, i32, i32, i32) {
    %c8_i32 = arith.constant 8 : i32
    %0 = arith.muli %arg1, %c8_i32 : i32
    %c8_i32_0 = arith.constant 8 : i32
    %1 = arith.addi %0, %c8_i32_0 : i32
    %c15_i32 = arith.constant 15 : i32
    %2 = arith.minsi %1, %c15_i32 : i32
    %c0_i32 = arith.constant 0 : i32
    %c0_i32_1 = arith.constant 0 : i32
    %c0_i32_2 = arith.constant 0 : i32
    return %arg0, %2, %c0_i32, %c0_i32_1 : i32, i32, i32, i32
  }
  func.func @transform_3(%arg0: i32, %arg1: i32) -> (i32, i32) {
    %c0_i32 = arith.constant 0 : i32
    %c0_i32_0 = arith.constant 0 : i32
    %c0_i32_1 = arith.constant 0 : i32
    return %c0_i32, %c0_i32_0 : i32, i32
  }
  func.func @transform_4(%arg0: i32, %arg1: i32) -> (i32, i32) {
    %c0_i32 = arith.constant 0 : i32
    %c0_i32_0 = arith.constant 0 : i32
    %c0_i32_1 = arith.constant 0 : i32
    return %c0_i32, %c0_i32_0 : i32, i32
  }
  func.func @transform_5(%arg0: i32, %arg1: i32) -> (i32, i32, i32) {
    %c0_i32 = arith.constant 0 : i32
    %c0_i32_0 = arith.constant 0 : i32
    %c0_i32_1 = arith.constant 0 : i32
    %c0_i32_2 = arith.constant 0 : i32
    return %c0_i32, %c0_i32_0, %c0_i32_1 : i32, i32, i32
  }
  func.func @transform_6(%arg0: i32, %arg1: i32) -> (i32, i32) {
    %c2_i32 = arith.constant 2 : i32
    %0 = arith.muli %arg0, %c2_i32 : i32
    %1 = arith.addi %0, %arg1 : i32
    %c0_i32 = arith.constant 0 : i32
    %c0_i32_0 = arith.constant 0 : i32
    return %1, %c0_i32 : i32, i32
  }
  func.func @transform_7(%arg0: i32, %arg1: i32) -> (i32, i32, i32) {
    %c2_i32 = arith.constant 2 : i32
    %0 = arith.muli %arg0, %c2_i32 : i32
    %1 = arith.addi %0, %arg1 : i32
    %c0_i32 = arith.constant 0 : i32
    %c0_i32_0 = arith.constant 0 : i32
    %c0_i32_1 = arith.constant 0 : i32
    return %1, %c0_i32, %c0_i32_0 : i32, i32, i32
  }
}

</mosaic_0001>

<llo_original>
// kernel: double_conv.5
$region0: #{double_conv.5}
  #allocation0 [shape = 'u32[]', space=smem, size = 0x4, offset = 0x4, fixed_abs, tag = 'smem constant byte address 0x4 - core index']
  #allocation1 [shape = 'u32[144,128]{1,0:T(1,128)}', space=vmem, size = 0x12000, scoped, tag = 'internal scratch']
  %s0 = inlined_call_operand.vmem [shape: f32[512,128], index: 0, kind: input, shape index: {}]
  %s1 = inlined_call_operand.vmem [shape: f32[1,128], index: 1, kind: input, shape index: {}]
  %s2 = inlined_call_operand.vmem [shape: f32[1,128], index: 2, kind: input, shape index: {}]
  %s3 = inlined_call_operand.vmem [shape: f32[512,128], index: 3, kind: output, shape index: {}]
  %s4 = sld [smem:[#allocation0]]
  $region22: #{double_conv.5} parent=0
    _
  %s6 = ssub.s32 1, %s4
  %s7 = scalar_select 0, %s6, %s4
  // Predicated region
  $region2: #{double_conv.5} parent=0 // pred_check
    _
  $region3: #{double_conv.5} parent=0 // pred_check_branch
    %9 = sbr.rel (0) target = $region5
  $region4: #{double_conv.5} parent=0 // pred_region
    _
  $region5: #{double_conv.5} parent=0 // pred_fallthru
    _
  // Predicated region
  $region6: #{double_conv.5} parent=0 // pred_check
    _
  $region7: #{double_conv.5} parent=0 // pred_check_branch
    %11 = sbr.rel (0) target = $region9
  $region8: #{double_conv.5} parent=0 // pred_region
    _
  $region9: #{double_conv.5} parent=0 // pred_fallthru
    _
  // Predicated region
  $region10: #{double_conv.5} parent=0 // pred_check
    _
  $region11: #{double_conv.5} parent=0 // pred_check_branch
    %13 = sbr.rel (0) target = $region13
  $region12: #{double_conv.5} parent=0 // pred_region
    _
  $region13: #{double_conv.5} parent=0 // pred_fallthru
    _
  %v14 = vld [vmem:[%s0] sm:$0xff]
  %v15 = vld [vmem:[%s0 + $0x8] sm:$0xff]
  %v16 = vld [vmem:[%s0 + $0x10] sm:$0xff]
  %v17 = vld [vmem:[%s0 + $0x18] sm:$0xff]
  %v18 = vld [vmem:[%s0 + $0x20] sm:$0xff]
  %v19 = vld [vmem:[%s0 + $0x28] sm:$0xff]
  %v20 = vld [vmem:[%s0 + $0x30] sm:$0xff]
  %v21 = vld [vmem:[%s0 + $0x38] sm:$0xff]
  %v22 = vld [vmem:[%s0 + $0x40] sm:$0xff]
  %v23 = vld [vmem:[%s0 + $0x48] sm:$0xff]
  %v24 = vld [vmem:[%s0 + $0x50] sm:$0xff]
  %v25 = vld [vmem:[%s0 + $0x58] sm:$0xff]
  %v26 = vld [vmem:[%s0 + $0x60] sm:$0xff]
  %v27 = vld [vmem:[%s0 + $0x68] sm:$0xff]
  %v28 = vld [vmem:[%s0 + $0x70] sm:$0xff]
  %v29 = vld [vmem:[%s0 + $0x78] sm:$0xff]
  %v30 = vld [vmem:[%s0 + $0x80] sm:$0xff]
  %v31 = vld [vmem:[%s0 + $0x88] sm:$0xff]
  %v32 = vld [vmem:[%s0 + $0x90] sm:$0xff]
  %v33 = vld [vmem:[%s0 + $0x98] sm:$0xff]
  %v34 = vld [vmem:[%s0 + $0xa0] sm:$0xff]
  %v35 = vld [vmem:[%s0 + $0xa8] sm:$0xff]
  %v36 = vld [vmem:[%s0 + $0xb0] sm:$0xff]
  %v37 = vld [vmem:[%s0 + $0xb8] sm:$0xff]
  %v38 = vld [vmem:[%s0 + $0xc0] sm:$0xff]
  %v39 = vld [vmem:[%s0 + $0xc8] sm:$0xff]
  %v40 = vld [vmem:[%s0 + $0xd0] sm:$0xff]
  %v41 = vld [vmem:[%s0 + $0xd8] sm:$0xff]
  %v42 = vld [vmem:[%s0 + $0xe0] sm:$0xff]
  %v43 = vld [vmem:[%s0 + $0xe8] sm:$0xff]
  %v44 = vld [vmem:[%s0 + $0xf0] sm:$0xff]
  %v45 = vld [vmem:[%s0 + $0xf8] sm:$0xff]
  %v46 = vld [vmem:[%s0 + $0x100] sm:$0xff]
  %v47 = vld [vmem:[%s0 + $0x108] sm:$0xff]
  %v48 = vld [vmem:[%s0 + $0x110] sm:$0xff]
  %v49 = vld [vmem:[%s0 + $0x118] sm:$0xff]
  %v50 = vld [vmem:[%s0 + $0x120] sm:$0xff]
  %v51 = vld [vmem:[%s0 + $0x128] sm:$0xff]
  %v52 = vld [vmem:[%s0 + $0x130] sm:$0xff]
  %v53 = vld [vmem:[%s0 + $0x138] sm:$0xff]
  %v54 = vld [vmem:[%s0 + $0x140] sm:$0xff]
  %v55 = vld [vmem:[%s0 + $0x148] sm:$0xff]
  %v56 = vld [vmem:[%s0 + $0x150] sm:$0xff]
  %v57 = vld [vmem:[%s0 + $0x158] sm:$0xff]
  %v58 = vld [vmem:[%s0 + $0x160] sm:$0xff]
  %v59 = vld [vmem:[%s0 + $0x168] sm:$0xff]
  %v60 = vld [vmem:[%s0 + $0x170] sm:$0xff]
  %v61 = vld [vmem:[%s0 + $0x178] sm:$0xff]
  %v62 = vld [vmem:[%s0 + $0x180] sm:$0xff]
  %v63 = vld [vmem:[%s0 + $0x188] sm:$0xff]
  %v64 = vld [vmem:[%s0 + $0x190] sm:$0xff]
  %v65 = vld [vmem:[%s0 + $0x198] sm:$0xff]
  %v66 = vld [vmem:[%s0 + $0x1a0] sm:$0xff]
  %v67 = vld [vmem:[%s0 + $0x1a8] sm:$0xff]
  %v68 = vld [vmem:[%s0 + $0x1b0] sm:$0xff]
  %v69 = vld [vmem:[%s0 + $0x1b8] sm:$0xff]
  %v70 = vld [vmem:[%s0 + $0x1c0] sm:$0xff]
  %v71 = vld [vmem:[%s0 + $0x1c8] sm:$0xff]
  %v72 = vld [vmem:[%s0 + $0x1d0] sm:$0xff]
  %v73 = vld [vmem:[%s0 + $0x1d8] sm:$0xff]
  %v74 = vld [vmem:[%s0 + $0x1e0] sm:$0xff]
  %v75 = vld [vmem:[%s0 + $0x1e8] sm:$0xff]
  %v76 = vld [vmem:[%s0 + $0x1f0] sm:$0xff]
  %v77 = vld [vmem:[%s0 + $0x1f8] sm:$0xff]
  %v78 = vld [vmem:[%s1] sm:$0x1]
  %v80 = vlaneseq
  %v81 = vshrl.u32 %v80, 7
  %v82 = vsub.s32 0, %v81
  %v83 = vrot.slane %v78, %v82
  %v85 = vmul.f32 %v14, %v83
  %v86 = vmul.f32 %v15, %v83
  %v87 = vmul.f32 %v16, %v83
  %v88 = vmul.f32 %v17, %v83
  %v89 = vmul.f32 %v18, %v83
  %v90 = vmul.f32 %v19, %v83
  %v91 = vmul.f32 %v20, %v83
  %v92 = vmul.f32 %v21, %v83
  %v93 = vmul.f32 %v22, %v83
  %v94 = vmul.f32 %v23, %v83
  %v95 = vmul.f32 %v24, %v83
  %v96 = vmul.f32 %v25, %v83
  %v97 = vmul.f32 %v26, %v83
  %v98 = vmul.f32 %v27, %v83
  %v99 = vmul.f32 %v28, %v83
  %v100 = vmul.f32 %v29, %v83
  %v101 = vmul.f32 %v30, %v83
  %v102 = vmul.f32 %v31, %v83
  %v103 = vmul.f32 %v32, %v83
  %v104 = vmul.f32 %v33, %v83
  %v105 = vmul.f32 %v34, %v83
  %v106 = vmul.f32 %v35, %v83
  %v107 = vmul.f32 %v36, %v83
  %v108 = vmul.f32 %v37, %v83
  %v109 = vmul.f32 %v38, %v83
  %v110 = vmul.f32 %v39, %v83
  %v111 = vmul.f32 %v40, %v83
  %v112 = vmul.f32 %v41, %v83
  %v113 = vmul.f32 %v42, %v83
  %v114 = vmul.f32 %v43, %v83
  %v115 = vmul.f32 %v44, %v83
  %v116 = vmul.f32 %v45, %v83
  %v117 = vmul.f32 %v46, %v83
  %v118 = vmul.f32 %v47, %v83
  %v119 = vmul.f32 %v48, %v83
  %v120 = vmul.f32 %v49, %v83
  %v121 = vmul.f32 %v50, %v83
  %v122 = vmul.f32 %v51, %v83
  %v123 = vmul.f32 %v52, %v83
  %v124 = vmul.f32 %v53, %v83
  %v125 = vmul.f32 %v54, %v83
  %v126 = vmul.f32 %v55, %v83
  %v127 = vmul.f32 %v56, %v83
  %v128 = vmul.f32 %v57, %v83
  %v129 = vmul.f32 %v58, %v83
  %v130 = vmul.f32 %v59, %v83
  %v131 = vmul.f32 %v60, %v83
  %v132 = vmul.f32 %v61, %v83
  %v133 = vmul.f32 %v62, %v83
  %v134 = vmul.f32 %v63, %v83
  %v135 = vmul.f32 %v64, %v83
  %v136 = vmul.f32 %v65, %v83
  %v137 = vmul.f32 %v66, %v83
  %v138 = vmul.f32 %v67, %v83
  %v139 = vmul.f32 %v68, %v83
  %v140 = vmul.f32 %v69, %v83
  %v141 = vmul.f32 %v70, %v83
  %v142 = vmul.f32 %v71, %v83
  %v143 = vmul.f32 %v72, %v83
  %v144 = vmul.f32 %v73, %v83
  %v145 = vmul.f32 %v74, %v83
  %v146 = vmul.f32 %v75, %v83
  %v147 = vmul.f32 %v76, %v83
  %v148 = vmul.f32 %v77, %v83
  %v149 = vld [vmem:[%s2] sm:$0x1]
  %v151 = vlaneseq
  %v152 = vshrl.u32 %v151, 7
  %v153 = vsub.s32 0, %v152
  %v154 = vrot.slane %v149, %v153
  %v156 = vadd.f32 %v85, %v154
  %v157 = vadd.f32 %v86, %v154
  %v158 = vadd.f32 %v87, %v154
  %v159 = vadd.f32 %v88, %v154
  %v160 = vadd.f32 %v89, %v154
  %v161 = vadd.f32 %v90, %v154
  %v162 = vadd.f32 %v91, %v154
  %v163 = vadd.f32 %v92, %v154
  %v164 = vadd.f32 %v93, %v154
  %v165 = vadd.f32 %v94, %v154
  %v166 = vadd.f32 %v95, %v154
  %v167 = vadd.f32 %v96, %v154
  %v168 = vadd.f32 %v97, %v154
  %v169 = vadd.f32 %v98, %v154
  %v170 = vadd.f32 %v99, %v154
  %v171 = vadd.f32 %v100, %v154
  %v172 = vadd.f32 %v101, %v154
  %v173 = vadd.f32 %v102, %v154
  %v174 = vadd.f32 %v103, %v154
  %v175 = vadd.f32 %v104, %v154
  %v176 = vadd.f32 %v105, %v154
  %v177 = vadd.f32 %v106, %v154
  %v178 = vadd.f32 %v107, %v154
  %v179 = vadd.f32 %v108, %v154
  %v180 = vadd.f32 %v109, %v154
  %v181 = vadd.f32 %v110, %v154
  %v182 = vadd.f32 %v111, %v154
  %v183 = vadd.f32 %v112, %v154
  %v184 = vadd.f32 %v113, %v154
  %v185 = vadd.f32 %v114, %v154
  %v186 = vadd.f32 %v115, %v154
  %v187 = vadd.f32 %v116, %v154
  %v188 = vadd.f32 %v117, %v154
  %v189 = vadd.f32 %v118, %v154
  %v190 = vadd.f32 %v119, %v154
  %v191 = vadd.f32 %v120, %v154
  %v192 = vadd.f32 %v121, %v154
  %v193 = vadd.f32 %v122, %v154
  %v194 = vadd.f32 %v123, %v154
  %v195 = vadd.f32 %v124, %v154
  %v196 = vadd.f32 %v125, %v154
  %v197 = vadd.f32 %v126, %v154
  %v198 = vadd.f32 %v127, %v154
  %v199 = vadd.f32 %v128, %v154
  %v200 = vadd.f32 %v129, %v154
  %v201 = vadd.f32 %v130, %v154
  %v202 = vadd.f32 %v131, %v154
  %v203 = vadd.f32 %v132, %v154
  %v204 = vadd.f32 %v133, %v154
  %v205 = vadd.f32 %v134, %v154
  %v206 = vadd.f32 %v135, %v154
  %v207 = vadd.f32 %v136, %v154
  %v208 = vadd.f32 %v137, %v154
  %v209 = vadd.f32 %v138, %v154
  %v210 = vadd.f32 %v139, %v154
  %v211 = vadd.f32 %v140, %v154
  %v212 = vadd.f32 %v141, %v154
  %v213 = vadd.f32 %v142, %v154
  %v214 = vadd.f32 %v143, %v154
  %v215 = vadd.f32 %v144, %v154
  %v216 = vadd.f32 %v145, %v154
  %v217 = vadd.f32 %v146, %v154
  %v218 = vadd.f32 %v147, %v154
  %v219 = vadd.f32 %v148, %v154
  %v220 = vmax.f32 %v156, 0.0
  %v221 = vmax.f32 %v157, 0.0
  %v222 = vmax.f32 %v158, 0.0
  %v223 = vmax.f32 %v159, 0.0
  %v224 = vmax.f32 %v160, 0.0
  %v225 = vmax.f32 %v161, 0.0
  %v226 = vmax.f32 %v162, 0.0
  %v227 = vmax.f32 %v163, 0.0
  %v228 = vmax.f32 %v164, 0.0
  %v229 = vmax.f32 %v165, 0.0
  %v230 = vmax.f32 %v166, 0.0
  %v231 = vmax.f32 %v167, 0.0
  %v232 = vmax.f32 %v168, 0.0
  %v233 = vmax.f32 %v169, 0.0
  %v234 = vmax.f32 %v170, 0.0
  %v235 = vmax.f32 %v171, 0.0
  %v236 = vmax.f32 %v172, 0.0
  %v237 = vmax.f32 %v173, 0.0
  %v238 = vmax.f32 %v174, 0.0
  %v239 = vmax.f32 %v175, 0.0
  %v240 = vmax.f32 %v176, 0.0
  %v241 = vmax.f32 %v177, 0.0
  %v242 = vmax.f32 %v178, 0.0
  %v243 = vmax.f32 %v179, 0.0
  %v244 = vmax.f32 %v180, 0.0
  %v245 = vmax.f32 %v181, 0.0
  %v246 = vmax.f32 %v182, 0.0
  %v247 = vmax.f32 %v183, 0.0
  %v248 = vmax.f32 %v184, 0.0
  %v249 = vmax.f32 %v185, 0.0
  %v250 = vmax.f32 %v186, 0.0
  %v251 = vmax.f32 %v187, 0.0
  %v252 = vmax.f32 %v188, 0.0
  %v253 = vmax.f32 %v189, 0.0
  %v254 = vmax.f32 %v190, 0.0
  %v255 = vmax.f32 %v191, 0.0
  %v256 = vmax.f32 %v192, 0.0
  %v257 = vmax.f32 %v193, 0.0
  %v258 = vmax.f32 %v194, 0.0
  %v259 = vmax.f32 %v195, 0.0
  %v260 = vmax.f32 %v196, 0.0
  %v261 = vmax.f32 %v197, 0.0
  %v262 = vmax.f32 %v198, 0.0
  %v263 = vmax.f32 %v199, 0.0
  %v264 = vmax.f32 %v200, 0.0
  %v265 = vmax.f32 %v201, 0.0
  %v266 = vmax.f32 %v202, 0.0
  %v267 = vmax.f32 %v203, 0.0
  %v268 = vmax.f32 %v204, 0.0
  %v269 = vmax.f32 %v205, 0.0
  %v270 = vmax.f32 %v206, 0.0
  %v271 = vmax.f32 %v207, 0.0
  %v272 = vmax.f32 %v208, 0.0
  %v273 = vmax.f32 %v209, 0.0
  %v274 = vmax.f32 %v210, 0.0
  %v275 = vmax.f32 %v211, 0.0
  %v276 = vmax.f32 %v212, 0.0
  %v277 = vmax.f32 %v213, 0.0
  %v278 = vmax.f32 %v214, 0.0
  %v279 = vmax.f32 %v215, 0.0
  %v280 = vmax.f32 %v216, 0.0
  %v281 = vmax.f32 %v217, 0.0
  %v282 = vmax.f32 %v218, 0.0
  %v283 = vmax.f32 %v219, 0.0
  %284 = vst [vmem:[%s3] sm:$0xff] %v220
  %285 = vst [vmem:[%s3 + $0x8] sm:$0xff] %v221
  %286 = vst [vmem:[%s3 + $0x10] sm:$0xff] %v222
  %287 = vst [vmem:[%s3 + $0x18] sm:$0xff] %v223
  %288 = vst [vmem:[%s3 + $0x20] sm:$0xff] %v224
  %289 = vst [vmem:[%s3 + $0x28] sm:$0xff] %v225
  %290 = vst [vmem:[%s3 + $0x30] sm:$0xff] %v226
  %291 = vst [vmem:[%s3 + $0x38] sm:$0xff] %v227
  %292 = vst [vmem:[%s3 + $0x40] sm:$0xff] %v228
  %293 = vst [vmem:[%s3 + $0x48] sm:$0xff] %v229
  %294 = vst [vmem:[%s3 + $0x50] sm:$0xff] %v230
  %295 = vst [vmem:[%s3 + $0x58] sm:$0xff] %v231
  %296 = vst [vmem:[%s3 + $0x60] sm:$0xff] %v232
  %297 = vst [vmem:[%s3 + $0x68] sm:$0xff] %v233
  %298 = vst [vmem:[%s3 + $0x70] sm:$0xff] %v234
  %299 = vst [vmem:[%s3 + $0x78] sm:$0xff] %v235
  %300 = vst [vmem:[%s3 + $0x80] sm:$0xff] %v236
  %301 = vst [vmem:[%s3 + $0x88] sm:$0xff] %v237
  %302 = vst [vmem:[%s3 + $0x90] sm:$0xff] %v238
  %303 = vst [vmem:[%s3 + $0x98] sm:$0xff] %v239
  %304 = vst [vmem:[%s3 + $0xa0] sm:$0xff] %v240
  %305 = vst [vmem:[%s3 + $0xa8] sm:$0xff] %v241
  %306 = vst [vmem:[%s3 + $0xb0] sm:$0xff] %v242
  %307 = vst [vmem:[%s3 + $0xb8] sm:$0xff] %v243
  %308 = vst [vmem:[%s3 + $0xc0] sm:$0xff] %v244
  %309 = vst [vmem:[%s3 + $0xc8] sm:$0xff] %v245
  %310 = vst [vmem:[%s3 + $0xd0] sm:$0xff] %v246
  %311 = vst [vmem:[%s3 + $0xd8] sm:$0xff] %v247
  %312 = vst [vmem:[%s3 + $0xe0] sm:$0xff] %v248
  %313 = vst [vmem:[%s3 + $0xe8] sm:$0xff] %v249
  %314 = vst [vmem:[%s3 + $0xf0] sm:$0xff] %v250
  %315 = vst [vmem:[%s3 + $0xf8] sm:$0xff] %v251
  %316 = vst [vmem:[%s3 + $0x100] sm:$0xff] %v252
  %317 = vst [vmem:[%s3 + $0x108] sm:$0xff] %v253
  %318 = vst [vmem:[%s3 + $0x110] sm:$0xff] %v254
  %319 = vst [vmem:[%s3 + $0x118] sm:$0xff] %v255
  %320 = vst [vmem:[%s3 + $0x120] sm:$0xff] %v256
  %321 = vst [vmem:[%s3 + $0x128] sm:$0xff] %v257
  %322 = vst [vmem:[%s3 + $0x130] sm:$0xff] %v258
  %323 = vst [vmem:[%s3 + $0x138] sm:$0xff] %v259
  %324 = vst [vmem:[%s3 + $0x140] sm:$0xff] %v260
  %325 = vst [vmem:[%s3 + $0x148] sm:$0xff] %v261
  %326 = vst [vmem:[%s3 + $0x150] sm:$0xff] %v262
  %327 = vst [vmem:[%s3 + $0x158] sm:$0xff] %v263
  %328 = vst [vmem:[%s3 + $0x160] sm:$0xff] %v264
  %329 = vst [vmem:[%s3 + $0x168] sm:$0xff] %v265
  %330 = vst [vmem:[%s3 + $0x170] sm:$0xff] %v266
  %331 = vst [vmem:[%s3 + $0x178] sm:$0xff] %v267
  %332 = vst [vmem:[%s3 + $0x180] sm:$0xff] %v268
  %333 = vst [vmem:[%s3 + $0x188] sm:$0xff] %v269
  %334 = vst [vmem:[%s3 + $0x190] sm:$0xff] %v270
  %335 = vst [vmem:[%s3 + $0x198] sm:$0xff] %v271
  %336 = vst [vmem:[%s3 + $0x1a0] sm:$0xff] %v272
  %337 = vst [vmem:[%s3 + $0x1a8] sm:$0xff] %v273
  %338 = vst [vmem:[%s3 + $0x1b0] sm:$0xff] %v274
  %339 = vst [vmem:[%s3 + $0x1b8] sm:$0xff] %v275
  %340 = vst [vmem:[%s3 + $0x1c0] sm:$0xff] %v276
  %341 = vst [vmem:[%s3 + $0x1c8] sm:$0xff] %v277
  %342 = vst [vmem:[%s3 + $0x1d0] sm:$0xff] %v278
  %343 = vst [vmem:[%s3 + $0x1d8] sm:$0xff] %v279
  %344 = vst [vmem:[%s3 + $0x1e0] sm:$0xff] %v280
  %345 = vst [vmem:[%s3 + $0x1e8] sm:$0xff] %v281
  %346 = vst [vmem:[%s3 + $0x1f0] sm:$0xff] %v282
  %347 = vst [vmem:[%s3 + $0x1f8] sm:$0xff] %v283
  // Predicated region
  $region14: #{double_conv.5} parent=0 // pred_check
    _
  $region15: #{double_conv.5} parent=0 // pred_check_branch
    %349 = sbr.rel (0) target = $region17
  $region16: #{double_conv.5} parent=0 // pred_region
    _
  $region17: #{double_conv.5} parent=0 // pred_fallthru
    _
  // Predicated region
  $region18: #{double_conv.5} parent=0 // pred_check
    _
  $region19: #{double_conv.5} parent=0 // pred_check_branch
    %351 = sbr.rel (0) target = $region21
  $region20: #{double_conv.5} parent=0 // pred_region
    _
  $region21: #{double_conv.5} parent=0 // pred_fallthru
    _

// kernel: double_conv.3
$region0: #{double_conv.3}
  #allocation0 [shape = 'u32[]', space=smem, size = 0x4, offset = 0x4, fixed_abs, tag = 'smem constant byte address 0x4 - core index']
  #allocation1 [shape = 'u32[144,128]{1,0:T(1,128)}', space=vmem, size = 0x12000, scoped, tag = 'internal scratch']
  %s0 = inlined_call_operand.vmem [shape: f32[2,16,16,4], index: 0, kind: input, shape index: {}, may-alias: {0,1,2}]
  %s1 = inlined_call_operand.vmem [shape: f32[2,16,16,4], index: 1, kind: input, shape index: {}, may-alias: {0,1,2}]
  %s2 = inlined_call_operand.vmem [shape: f32[2,16,16,4], index: 2, kind: input, shape index: {}, may-alias: {0,1,2}]
  %s3 = inlined_call_operand.vmem [shape: f32[9,4,128], index: 3, kind: input, shape index: {}]
  %s4 = inlined_call_operand.vmem [shape: f32[512,128], index: 4, kind: output, shape index: {0}]
  %s5 = inlined_call_operand.vmem [shape: f32[4,2,128], index: 5, kind: output, shape index: {1}]
  %6 = xla_tuple %s4, %s5
  %s7 = sld [smem:[#allocation0]]
  $region57: #{double_conv.3} parent=0
    _
  %s9 = ssub.s32 1, %s7
  %s10 = scalar_select 0, %s9, %s7
  loop: start=0, step=1, limit=6
  $region2: #{double_conv.3} parent=0 // loop_pre_header
    _
  $region3: #{double_conv.3} parent=0 // loop_header
    %s12 = sphi 0, %s16
    %p13 = scmp.ge.s32.totalorder %s12, 6
    %s19 = sphi 0, %s31
    %s20 = sphi 0, %s27
    %s21 = sphi 0, %s19
    %s22 = sphi 0, %s20
    %s23 = sphi 0, %s21
    %s24 = sphi 0, %s22
    %s36 = sphi 0, %s38
    %s39 = sphi 0, %s36
    %s40 = sphi 0, %s39
    %s56 = sphi 0, %s40
    %s72 = sphi 0, %s74
    %s75 = sphi 0, %s72
    %s76 = sphi 0, %s75
    %s92 = sphi 0, %s76
    %s108 = sphi 0, %s110
    %s111 = sphi 0, %s108
    %s112 = sphi 0, %s111
    %s128 = sphi 0, %s112
    %s132 = sphi 0, %s132
    %s134 = sphi 0, %s132
    %s135 = sphi 0, %s134
    %s149 = sphi 0, %s135
    %s159 = sphi 0, %s161
    %s162 = sphi 0, %s159
    %s163 = sphi 0, %s162
    %s179 = sphi 0, %s163
    %s189 = sphi 0, %s191
    %s192 = sphi 0, %s189
    %s193 = sphi 0, %s192
    %s209 = sphi 0, %s193
  $region4: #{double_conv.3} parent=0 // loop_header_branch
    %15 = sbr.rel (%p13) target = $region8
  $region5: #{double_conv.3} parent=0 // loop_body
    %s17 = ssub.s32 %s12, 1
    %s18 = ssub.s32 %s12, 2
    %s25 = sadd.s32 1, %s20
    %p26 = scmp.ge.s32.totalorder %s25, 2
    %s27 = scalar_select %p26, 0, %s25
    %s28 = sadd.s32 1, %s19
    %s29 = scalar_select %p26, %s28, %s19
    %p30 = scmp.ge.s32.totalorder %s29, 2
    %s31 = scalar_select %p30, 0, %s29
    %s32 = ssub.s32 %s19, %s31
    %s33 = ssub.s32 %s20, %s27
    %s34 = sor.u32 %s32, %s33
    %p35 = scmp.eq.s32.totalorder %s34, 0
    %s37 = sadd.s32 %s36, 1
    %s38 = scalar_select %p35, %s36, %s37
    %p41 = pneg %p35
    %p42 = scmp.eq.s32.totalorder %s12, 3
    %p43 = por %p41, %p42
    %p44 = scmp.ne.s32.totalorder %s36, %s39
    %p45 = scmp.eq.s32.totalorder %s12, 0
    %p46 = por %p44, %p45
    %p47 = scmp.ne.s32.totalorder %s36, %s39
    %p48 = scmp.eq.s32.totalorder %s17, 3
    %p49 = por %p47, %p48
    %p50 = scmp.ne.s32.totalorder %s39, %s40
    %p51 = scmp.eq.s32.totalorder %s17, 0
    %p52 = por %p50, %p51
    %p53 = scmp.ne.s32.totalorder %s39, %s40
    %p54 = scmp.eq.s32.totalorder %s18, 3
    %p55 = por %p53, %p54
    %p57 = scmp.ne.s32.totalorder %s40, %s56
    %p58 = scmp.eq.s32.totalorder %s18, 0
    %p59 = por %p57, %p58
    %s60 = smul.u32 %s20, 8
    %s61 = ssub.s32 %s60, 1
    %p62 = scmp.gt.s32.totalorder %s61, 0
    %s63 = scalar_select %p62, %s61, 0
    %s64 = smul.u32 %s27, 8
    %s65 = ssub.s32 %s64, 1
    %p66 = scmp.gt.s32.totalorder %s65, 0
    %s67 = scalar_select %p66, %s65, 0
    %s68 = ssub.s32 %s19, %s31
    %s69 = ssub.s32 %s63, %s67
    %s70 = sor.u32 %s68, %s69
    %p71 = scmp.eq.s32.totalorder %s70, 0
    %s73 = sadd.s32 %s72, 1
    %s74 = scalar_select %p71, %s72, %s73
    %p77 = pneg %p71
    %p78 = scmp.eq.s32.totalorder %s12, 3
    %p79 = por %p77, %p78
    %p80 = scmp.ne.s32.totalorder %s72, %s75
    %p81 = scmp.eq.s32.totalorder %s12, 0
    %p82 = por %p80, %p81
    %p83 = scmp.ne.s32.totalorder %s72, %s75
    %p84 = scmp.eq.s32.totalorder %s17, 3
    %p85 = por %p83, %p84
    %p86 = scmp.ne.s32.totalorder %s75, %s76
    %p87 = scmp.eq.s32.totalorder %s17, 0
    %p88 = por %p86, %p87
    %p89 = scmp.ne.s32.totalorder %s75, %s76
    %p90 = scmp.eq.s32.totalorder %s18, 3
    %p91 = por %p89, %p90
    %p93 = scmp.ne.s32.totalorder %s76, %s92
    %p94 = scmp.eq.s32.totalorder %s18, 0
    %p95 = por %p93, %p94
    %s96 = smul.u32 %s20, 8
    %s97 = sadd.s32 %s96, 8
    %p98 = scmp.lt.s32.totalorder %s97, 15
    %s99 = scalar_select %p98, %s97, 15
    %s100 = smul.u32 %s27, 8
    %s101 = sadd.s32 %s100, 8
    %p102 = scmp.lt.s32.totalorder %s101, 15
    %s103 = scalar_select %p102, %s101, 15
    %s104 = ssub.s32 %s19, %s31
    %s105 = ssub.s32 %s99, %s103
    %s106 = sor.u32 %s104, %s105
    %p107 = scmp.eq.s32.totalorder %s106, 0
    %s109 = sadd.s32 %s108, 1
    %s110 = scalar_select %p107, %s108, %s109
    %p113 = pneg %p107
    %p114 = scmp.eq.s32.totalorder %s12, 3
    %p115 = por %p113, %p114
    %p116 = scmp.ne.s32.totalorder %s108, %s111
    %p117 = scmp.eq.s32.totalorder %s12, 0
    %p118 = por %p116, %p117
    %p119 = scmp.ne.s32.totalorder %s108, %s111
    %p120 = scmp.eq.s32.totalorder %s17, 3
    %p121 = por %p119, %p120
    %p122 = scmp.ne.s32.totalorder %s111, %s112
    %p123 = scmp.eq.s32.totalorder %s17, 0
    %p124 = por %p122, %p123
    %p125 = scmp.ne.s32.totalorder %s111, %s112
    %p126 = scmp.eq.s32.totalorder %s18, 3
    %p127 = por %p125, %p126
    %p129 = scmp.ne.s32.totalorder %s112, %s128
    %p130 = scmp.eq.s32.totalorder %s18, 0
    %p131 = por %p129, %p130
    %s133 = sadd.s32 %s132, 1
    %p136 = scmp.eq.s32.totalorder %s12, 3
    %p137 = scmp.ne.s32.totalorder %s132, %s134
    %p138 = scmp.eq.s32.totalorder %s12, 0
    %p139 = por %p137, %p138
    %p140 = scmp.ne.s32.totalorder %s132, %s134
    %p141 = scmp.eq.s32.totalorder %s17, 3
    %p142 = por %p140, %p141
    %p143 = scmp.ne.s32.totalorder %s134, %s135
    %p144 = scmp.eq.s32.totalorder %s17, 0
    %p145 = por %p143, %p144
    %p146 = scmp.ne.s32.totalorder %s134, %s135
    %p147 = scmp.eq.s32.totalorder %s18, 3
    %p148 = por %p146, %p147
    %p150 = scmp.ne.s32.totalorder %s135, %s149
    %p151 = scmp.eq.s32.totalorder %s18, 0
    %p152 = por %p150, %p151
    %s153 = smul.u32 %s19, 2
    %s154 = sadd.s32 %s153, %s20
    %s155 = smul.u32 %s31, 2
    %s156 = sadd.s32 %s155, %s27
    %s157 = ssub.s32 %s154, %s156
    %p158 = scmp.eq.s32.totalorder %s157, 0
    %s160 = sadd.s32 %s159, 1
    %s161 = scalar_select %p158, %s159, %s160
    %p164 = pneg %p158
    %p165 = scmp.eq.s32.totalorder %s12, 3
    %p166 = por %p164, %p165
    %p167 = scmp.ne.s32.totalorder %s159, %s162
    %p168 = scmp.eq.s32.totalorder %s12, 0
    %p169 = por %p167, %p168
    %p170 = scmp.ne.s32.totalorder %s159, %s162
    %p171 = scmp.eq.s32.totalorder %s17, 3
    %p172 = por %p170, %p171
    %p173 = scmp.ne.s32.totalorder %s162, %s163
    %p174 = scmp.eq.s32.totalorder %s17, 0
    %p175 = por %p173, %p174
    %p176 = scmp.ne.s32.totalorder %s162, %s163
    %p177 = scmp.eq.s32.totalorder %s18, 3
    %p178 = por %p176, %p177
    %p180 = scmp.ne.s32.totalorder %s163, %s179
    %p181 = scmp.eq.s32.totalorder %s18, 0
    %p182 = por %p180, %p181
    %s183 = smul.u32 %s19, 2
    %s184 = sadd.s32 %s183, %s20
    %s185 = smul.u32 %s31, 2
    %s186 = sadd.s32 %s185, %s27
    %s187 = ssub.s32 %s184, %s186
    %p188 = scmp.eq.s32.totalorder %s187, 0
    %s190 = sadd.s32 %s189, 1
    %s191 = scalar_select %p188, %s189, %s190
    %p194 = pneg %p188
    %p195 = scmp.eq.s32.totalorder %s12, 3
    %p196 = por %p194, %p195
    %p197 = scmp.ne.s32.totalorder %s189, %s192
    %p198 = scmp.eq.s32.totalorder %s12, 0
    %p199 = por %p197, %p198
    %p200 = scmp.ne.s32.totalorder %s189, %s192
    %p201 = scmp.eq.s32.totalorder %s17, 3
    %p202 = por %p200, %p201
    %p203 = scmp.ne.s32.totalorder %s192, %s193
    %p204 = scmp.eq.s32.totalorder %s17, 0
    %p205 = por %p203, %p204
    %p206 = scmp.ne.s32.totalorder %s192, %s193
    %p207 = scmp.eq.s32.totalorder %s18, 3
    %p208 = por %p206, %p207
    %p210 = scmp.ne.s32.totalorder %s193, %s209
    %p211 = scmp.eq.s32.totalorder %s18, 0
    %p212 = por %p210, %p211
    %p213 = scmp.le.s32.totalorder 1, %s12
    %p214 = scmp.lt.s32.totalorder %s12, 5
    %p215 = pnand %p213, %p214
    %p216 = pneg %p215
    // Predicated region
    $region9: #{double_conv.3} parent=5 // pred_check
      _
    $region10: #{double_conv.3} parent=5 // pred_check_branch
      %218 = sbr.rel (%p215) target = $region12
    $region11: #{double_conv.3} parent=5 // pred_region
      %s219 = ssub.s32 %s12, 1
      // Predicated region
      $region13: #{double_conv.3} parent=11 // pred_check
        %p220 = pneg %p145
      $region14: #{double_conv.3} parent=11 // pred_check_branch
        %222 = sbr.rel (%p220) target = $region16
      $region15: #{double_conv.3} parent=11 // pred_region
        _
      $region16: #{double_conv.3} parent=11 // pred_fallthru
        _
    $region12: #{double_conv.3} parent=5 // pred_fallthru
      _
    %p223 = scmp.lt.s32.totalorder %s12, 4
    // Predicated region
    $region17: #{double_conv.3} parent=5 // pred_check
      %p224 = pneg %p223
    $region18: #{double_conv.3} parent=5 // pred_check_branch
      %226 = sbr.rel (%p224) target = $region20
    $region19: #{double_conv.3} parent=5 // pred_region
      // Predicated region
      $region21: #{double_conv.3} parent=19 // pred_check
        %p227 = pneg %p46
      $region22: #{double_conv.3} parent=19 // pred_check_branch
        %229 = sbr.rel (%p227) target = $region24
      $region23: #{double_conv.3} parent=19 // pred_region
        %s230 = smul.u32 8, %s20
        %p231 = scmp.lt.s32.totalorder %s19, 1
        %s232 = scalar_select %p231, %s19, 1
        %p233 = scmp.lt.s32.totalorder %s230, 15
        %s234 = scalar_select %p233, %s230, 15
        %s235 = smul.addr %s234, 2
        %s236 = smul.addr %s232, 32
        %s237 = sadd.s32 %s235, %s236
        %s238 = smul.addr %s237, 8
        %s239 = scalar_lea.vmem %s0, %s238
        %s240 = smul.u32 8, %s20
      $region24: #{double_conv.3} parent=19 // pred_fallthru
        _
      // Predicated region
      $region25: #{double_conv.3} parent=19 // pred_check
        %p241 = pneg %p82
      $region26: #{double_conv.3} parent=19 // pred_check_branch
        %243 = sbr.rel (%p241) target = $region28
      $region27: #{double_conv.3} parent=19 // pred_region
        %s244 = smul.u32 %s20, 8
        %s245 = ssub.s32 %s244, 1
        %p246 = scmp.gt.s32.totalorder %s245, 0
        %s247 = scalar_select %p246, %s245, 0
        %p248 = scmp.lt.s32.totalorder %s19, 1
        %s249 = scalar_select %p248, %s19, 1
        %p250 = scmp.lt.s32.totalorder %s247, 15
        %s251 = scalar_select %p250, %s247, 15
        %s252 = smul.addr %s251, 2
        %s253 = smul.addr %s249, 32
        %s254 = sadd.s32 %s252, %s253
        %s255 = smul.addr %s254, 8
        %s256 = scalar_lea.vmem %s1, %s255
        %s257 = smul.u32 %s20, 8
        %s258 = ssub.s32 %s257, 1
        %p259 = scmp.gt.s32.totalorder %s258, 0
        %s260 = scalar_select %p259, %s258, 0
      $region28: #{double_conv.3} parent=19 // pred_fallthru
        _
      // Predicated region
      $region29: #{double_conv.3} parent=19 // pred_check
        %p261 = pneg %p118
      $region30: #{double_conv.3} parent=19 // pred_check_branch
        %263 = sbr.rel (%p261) target = $region32
      $region31: #{double_conv.3} parent=19 // pred_region
        %s264 = smul.u32 %s20, 8
        %s265 = sadd.s32 %s264, 8
        %p266 = scmp.lt.s32.totalorder %s265, 15
        %s267 = scalar_select %p266, %s265, 15
        %p268 = scmp.lt.s32.totalorder %s19, 1
        %s269 = scalar_select %p268, %s19, 1
        %p270 = scmp.lt.s32.totalorder %s267, 15
        %s271 = scalar_select %p270, %s267, 15
        %s272 = smul.addr %s271, 2
        %s273 = smul.addr %s269, 32
        %s274 = sadd.s32 %s272, %s273
        %s275 = smul.addr %s274, 8
        %s276 = scalar_lea.vmem %s2, %s275
        %s277 = smul.u32 %s20, 8
        %s278 = sadd.s32 %s277, 8
        %p279 = scmp.lt.s32.totalorder %s278, 15
        %s280 = scalar_select %p279, %s278, 15
      $region32: #{double_conv.3} parent=19 // pred_fallthru
        _
    $region20: #{double_conv.3} parent=5 // pred_fallthru
      _
    %p281 = scmp.le.s32.totalorder 1, %s12
    %p282 = scmp.lt.s32.totalorder %s12, 5
    %p283 = pnand %p281, %p282
    %p284 = pneg %p283
    // Predicated region
    $region33: #{double_conv.3} parent=5 // pred_check
      _
    $region34: #{double_conv.3} parent=5 // pred_check_branch
      %286 = sbr.rel (%p283) target = $region36
    $region35: #{double_conv.3} parent=5 // pred_region
      %s287 = ssub.s32 %s12, 1
      %s288 = smul.u32 8, %s22
      %p289 = scmp.lt.s32.totalorder %s21, 1
      %s290 = scalar_select %p289, %s21, 1
      %p291 = scmp.lt.s32.totalorder %s288, 15
      %s292 = scalar_select %p291, %s288, 15
      %s293 = smul.addr %s292, 2
      %s294 = smul.addr %s290, 32
      %s295 = sadd.s32 %s293, %s294
      %s296 = smul.addr %s295, 8
      %s297 = scalar_lea.vmem %s0, %s296
      %p298 = pneg %p52
      %p299 = pneg %p49
      %s300 = smul.u32 %s22, 8
      %s301 = ssub.s32 %s300, 1
      %p302 = scmp.gt.s32.totalorder %s301, 0
      %s303 = scalar_select %p302, %s301, 0
      %p304 = scmp.lt.s32.totalorder %s21, 1
      %s305 = scalar_select %p304, %s21, 1
      %p306 = scmp.lt.s32.totalorder %s303, 15
      %s307 = scalar_select %p306, %s303, 15
      %s308 = smul.addr %s307, 2
      %s309 = smul.addr %s305, 32
      %s310 = sadd.s32 %s308, %s309
      %s311 = smul.addr %s310, 8
      %s312 = scalar_lea.vmem %s1, %s311
      %p313 = pneg %p88
      %p314 = pneg %p85
      %s315 = smul.u32 %s22, 8
      %s316 = sadd.s32 %s315, 8
      %p317 = scmp.lt.s32.totalorder %s316, 15
      %s318 = scalar_select %p317, %s316, 15
      %p319 = scmp.lt.s32.totalorder %s21, 1
      %s320 = scalar_select %p319, %s21, 1
      %p321 = scmp.lt.s32.totalorder %s318, 15
      %s322 = scalar_select %p321, %s318, 15
      %s323 = smul.addr %s322, 2
      %s324 = smul.addr %s320, 32
      %s325 = sadd.s32 %s323, %s324
      %s326 = smul.addr %s325, 8
      %s327 = scalar_lea.vmem %s2, %s326
      %p328 = pneg %p124
      %p329 = pneg %p121
      %p330 = pneg %p145
      %p331 = pneg %p142
      %p332 = pneg %p175
      %p333 = pneg %p172
      %s334 = smul.u32 %s21, 2
      %s335 = sadd.s32 %s334, %s22
      %s336 = smul.u32 16, %s335
      %p337 = scmp.lt.s32.totalorder %s336, 63
      %s338 = scalar_select %p337, %s336, 63
      %s339 = smul.addr %s338, 8
      %s340 = scalar_lea.vmem %s4, %s339
      %p341 = pneg %p205
      %p342 = pneg %p202
      %s343 = smul.u32 %s21, 2
      %s344 = sadd.s32 %s343, %s22
      %p345 = scmp.lt.s32.totalorder %s344, 3
      %s346 = scalar_select %p345, %s344, 3
      %s347 = smul.addr %s346, 2
      %s348 = scalar_lea.vmem %s5, %s347
      %s349 = smul.u32 8, %s22
      %p350 = scmp.lt.s32.totalorder %s21, 1
      %s351 = scalar_select %p350, %s21, 1
      %p352 = scmp.lt.s32.totalorder %s349, 15
      %s353 = scalar_select %p352, %s349, 15
      %s354 = smul.addr %s353, 2
      %s355 = smul.addr %s351, 32
      %s356 = sadd.s32 %s354, %s355
      %s357 = smul.addr %s356, 8
      %s358 = scalar_lea.vmem %s0, %s357
      %s359 = smul.u32 8, %s22
      %s360 = smul.u32 %s22, 8
      %s361 = ssub.s32 %s360, 1
      %p362 = scmp.gt.s32.totalorder %s361, 0
      %s363 = scalar_select %p362, %s361, 0
      %p364 = scmp.lt.s32.totalorder %s21, 1
      %s365 = scalar_select %p364, %s21, 1
      %p366 = scmp.lt.s32.totalorder %s363, 15
      %s367 = scalar_select %p366, %s363, 15
      %s368 = smul.addr %s367, 2
      %s369 = smul.addr %s365, 32
      %s370 = sadd.s32 %s368, %s369
      %s371 = smul.addr %s370, 8
      %s372 = scalar_lea.vmem %s1, %s371
      %s373 = smul.u32 %s22, 8
      %s374 = ssub.s32 %s373, 1
      %p375 = scmp.gt.s32.totalorder %s374, 0
      %s376 = scalar_select %p375, %s374, 0
      %s377 = smul.u32 %s22, 8
      %s378 = sadd.s32 %s377, 8
      %p379 = scmp.lt.s32.totalorder %s378, 15
      %s380 = scalar_select %p379, %s378, 15
      %p381 = scmp.lt.s32.totalorder %s21, 1
      %s382 = scalar_select %p381, %s21, 1
      %p383 = scmp.lt.s32.totalorder %s380, 15
      %s384 = scalar_select %p383, %s380, 15
      %s385 = smul.addr %s384, 2
      %s386 = smul.addr %s382, 32
      %s387 = sadd.s32 %s385, %s386
      %s388 = smul.addr %s387, 8
      %s389 = scalar_lea.vmem %s2, %s388
      %s390 = smul.u32 %s22, 8
      %s391 = sadd.s32 %s390, 8
      %p392 = scmp.lt.s32.totalorder %s391, 15
      %s393 = scalar_select %p392, %s391, 15
      %s394 = smul.u32 %s21, 2
      %s395 = sadd.s32 %s394, %s22
      %s396 = smul.u32 16, %s395
      %p397 = scmp.lt.s32.totalorder %s396, 63
      %s398 = scalar_select %p397, %s396, 63
      %s399 = smul.addr %s398, 8
      %s400 = scalar_lea.vmem %s4, %s399
      %s401 = smul.u32 %s21, 2
      %s402 = sadd.s32 %s401, %s22
      %s403 = smul.u32 16, %s402
      %s404 = smul.u32 %s21, 2
      %s405 = sadd.s32 %s404, %s22
      %p406 = scmp.lt.s32.totalorder %s405, 3
      %s407 = scalar_select %p406, %s405, 3
      %s408 = smul.addr %s407, 2
      %s409 = scalar_lea.vmem %s5, %s408
      %s410 = smul.u32 %s21, 2
      %s411 = sadd.s32 %s410, %s22
      %v412 = vld [vmem:[%s372] sm:$0xff]
      %v413 = vld [vmem:[%s372 + $0x8] sm:$0xff]
      %v414 = vld [vmem:[%s358] sm:$0xff]
      %v415 = vld [vmem:[%s358 + $0x8] sm:$0xff]
      %v416 = vld [vmem:[%s358 + $0x10] sm:$0xff]
      %v417 = vld [vmem:[%s358 + $0x18] sm:$0xff]
      %v418 = vld [vmem:[%s358 + $0x20] sm:$0xff]
      %v419 = vld [vmem:[%s358 + $0x28] sm:$0xff]
      %v420 = vld [vmem:[%s358 + $0x30] sm:$0xff]
      %v421 = vld [vmem:[%s358 + $0x38] sm:$0xff]
      %v422 = vld [vmem:[%s358 + $0x40] sm:$0xff]
      %v423 = vld [vmem:[%s358 + $0x48] sm:$0xff]
      %v424 = vld [vmem:[%s358 + $0x50] sm:$0xff]
      %v425 = vld [vmem:[%s358 + $0x58] sm:$0xff]
      %v426 = vld [vmem:[%s358 + $0x60] sm:$0xff]
      %v427 = vld [vmem:[%s358 + $0x68] sm:$0xff]
      %v428 = vld [vmem:[%s358 + $0x70] sm:$0xff]
      %v429 = vld [vmem:[%s358 + $0x78] sm:$0xff]
      %v430 = vld [vmem:[%s389] sm:$0xff]
      %v431 = vld [vmem:[%s389 + $0x8] sm:$0xff]
      %p432 = scmp.eq.s32.totalorder %s22, 0
      %s433 = scalar_select %p432, 1, 0
      %v434 = vstv %s433
      %vm435 = vcmp.eq.s32.totalorder %v434, 1
      %v436 = vsel %vm435, 0.0, %v412
      %v437 = vsel %vm435, 0.0, %v413
      %p438 = scmp.eq.s32.totalorder %s22, 1
      %s439 = scalar_select %p438, 1, 0
      %v440 = vstv %s439
      %vm441 = vcmp.eq.s32.totalorder %v440, 1
      %v442 = vsel %vm441, 0.0, %v430
      %v443 = vsel %vm441, 0.0, %v431
      %vm464 = vcmask 1040384
      %v465 = vrot.slane %v436, 7
      %v466 = vrot.slane %v437, 7
      %v467 = vsel %vm464, %v465, %v466
      %v468 = vrot.slane %v414, 7
      %v469 = vrot.slane %v415, 7
      %v470 = vsel %vm464, %v468, %v469
      %v471 = vrot.slane %v416, 7
      %v472 = vrot.slane %v417, 7
      %v473 = vsel %vm464, %v471, %v472
      %v474 = vrot.slane %v418, 7
      %v475 = vrot.slane %v419, 7
      %v476 = vsel %vm464, %v474, %v475
      %v477 = vrot.slane %v420, 7
      %v478 = vrot.slane %v421, 7
      %v479 = vsel %vm464, %v477, %v478
      %v480 = vrot.slane %v422, 7
      %v481 = vrot.slane %v423, 7
      %v482 = vsel %vm464, %v480, %v481
      %v483 = vrot.slane %v424, 7
      %v484 = vrot.slane %v425, 7
      %v485 = vsel %vm464, %v483, %v484
      %v486 = vrot.slane %v426, 7
      %v487 = vrot.slane %v427, 7
      %v488 = vsel %vm464, %v486, %v487
      %v489 = vrot.slane %v428, 7
      %v490 = vrot.slane %v429, 7
      %v491 = vsel %vm464, %v489, %v490
      %v492 = vrot.slane %v442, 7
      %v493 = vrot.slane %v443, 7
      %v494 = vsel %vm464, %v492, %v493
      %v515 = vsel %vm464, 0.0, %v465
      %v516 = vsel %vm464, 0.0, %v468
      %v517 = vsel %vm464, 0.0, %v471
      %v518 = vsel %vm464, 0.0, %v474
      %v519 = vsel %vm464, 0.0, %v477
      %v520 = vsel %vm464, 0.0, %v480
      %v521 = vsel %vm464, 0.0, %v483
      %v522 = vsel %vm464, 0.0, %v486
      %v523 = vsel %vm464, 0.0, %v489
      %v524 = vsel %vm464, 0.0, %v492
      %v525 = vsel %vm464, %v466, 0.0
      %v526 = vsel %vm464, %v469, 0.0
      %v527 = vsel %vm464, %v472, 0.0
      %v528 = vsel %vm464, %v475, 0.0
      %v529 = vsel %vm464, %v478, 0.0
      %v530 = vsel %vm464, %v481, 0.0
      %v531 = vsel %vm464, %v484, 0.0
      %v532 = vsel %vm464, %v487, 0.0
      %v533 = vsel %vm464, %v490, 0.0
      %v534 = vsel %vm464, %v493, 0.0
      %v535 = vld [vmem:[%s3] sm:$0xf]
      %vm552 = vcmask 1046528
      %v553 = vrot.slane %v515, 1
      %v554 = vrot.slane %v467, 1
      %v555 = vsel %vm552, %v553, %v554
      %v556 = vrot.slane %v525, 1
      %v557 = vsel %vm552, %v554, %v556
      %v558 = vrot.slane %v516, 1
      %v559 = vrot.slane %v470, 1
      %v560 = vsel %vm552, %v558, %v559
      %v561 = vrot.slane %v526, 1
      %v562 = vsel %vm552, %v559, %v561
      %v563 = vrot.slane %v517, 1
      %v564 = vrot.slane %v473, 1
      %v565 = vsel %vm552, %v563, %v564
      %v566 = vrot.slane %v527, 1
      %v567 = vsel %vm552, %v564, %v566
      %v568 = vrot.slane %v518, 1
      %v569 = vrot.slane %v476, 1
      %v570 = vsel %vm552, %v568, %v569
      %v571 = vrot.slane %v528, 1
      %v572 = vsel %vm552, %v569, %v571
      %v573 = vrot.slane %v519, 1
      %v574 = vrot.slane %v479, 1
      %v575 = vsel %vm552, %v573, %v574
      %v576 = vrot.slane %v529, 1
      %v577 = vsel %vm552, %v574, %v576
      %v578 = vrot.slane %v520, 1
      %v579 = vrot.slane %v482, 1
      %v580 = vsel %vm552, %v578, %v579
      %v581 = vrot.slane %v530, 1
      %v582 = vsel %vm552, %v579, %v581
      %v583 = vrot.slane %v521, 1
      %v584 = vrot.slane %v485, 1
      %v585 = vsel %vm552, %v583, %v584
      %v586 = vrot.slane %v531, 1
      %v587 = vsel %vm552, %v584, %v586
      %v588 = vrot.slane %v522, 1
      %v589 = vrot.slane %v488, 1
      %v590 = vsel %vm552, %v588, %v589
      %v591 = vrot.slane %v532, 1
      %v592 = vsel %vm552, %v589, %v591
      %s593 = scalar_lea.vmem %s3, 4
      %v594 = vld [vmem:[%s593] sm:$0xf]
      %vm595 = vcmask 31744
      %v596 = vsel %vm595, %v555, 0
      %v598 = vsel %vm595, %v557, 0
      %v600 = vsel %vm595, %v560, 0
      %v602 = vsel %vm595, %v562, 0
      %v604 = vsel %vm595, %v565, 0
      %v606 = vsel %vm595, %v567, 0
      %v608 = vsel %vm595, %v570, 0
      %v610 = vsel %vm595, %v572, 0
      %v612 = vsel %vm595, %v575, 0
      %v614 = vsel %vm595, %v577, 0
      %v616 = vsel %vm595, %v580, 0
      %v618 = vsel %vm595, %v582, 0
      %v620 = vsel %vm595, %v585, 0
      %v622 = vsel %vm595, %v587, 0
      %v624 = vsel %vm595, %v590, 0
      %v626 = vsel %vm595, %v592, 0
      %vm628 = vcmask 1043456
      %v630 = vsel %vm628, %v594, 0
      %632 = vmatprep.subr.mxu0 0.0
      %633 = vmatpush1.msra.mxu0 0.0
      %634 = vmatprep.subr.mxu0 0.0
      %635 = vmatpush1.msra.mxu0 0.0
      %636 = vmatprep.subr.mxu0 0.0
      %637 = vmatpush1.msra.mxu0 0.0
      %638 = vmatprep.subr.mxu0 0.0
      %639 = vmatpush1.msra.mxu0 0.0
      %640 = vmatprep.subr.mxu0 0.0
      %641 = vmatpush1.msra.mxu0 0.0
      %642 = vmatprep.subr.mxu0 0.0
      %643 = vmatpush1.msra.mxu0 0.0
      %644 = vmatprep.subr.mxu0 0.0
      %645 = vmatpush1.msra.mxu0 0.0
      %646 = vmatprep.subr.mxu0 0.0
      %647 = vmatpush1.msra.mxu0 0.0
      %648 = vmatprep.subr.mxu0 0.0
      %649 = vmatpush1.msra.mxu0 0.0
      %650 = vmatprep.subr.mxu0 0.0
      %651 = vmatpush1.msra.mxu0 0.0
      %652 = vmatprep.subr.mxu0 0.0
      %653 = vmatpush1.msra.mxu0 0.0
      %654 = vmatprep.subr.mxu0 0.0
      %655 = vmatpush1.msra.mxu0 0.0
      %656 = vmatprep.subr.mxu0 0.0
      %657 = vmatpush1.msra.mxu0 0.0
      %658 = vmatprep.subr.mxu0 0.0
      %659 = vmatpush1.msra.mxu0 0.0
      %660 = vmatprep.subr.mxu0 0.0
      %661 = vmatpush1.msra.mxu0 0.0
      %662 = vmatprep.subr.mxu0 0.0
      %663 = vmatpush1.msra.mxu0 %v630
      %664 = vmatprep.subr.mxu0 0.0
      %665 = vmatpush2.msra.mxu0 0.0
      %666 = vmatprep.subr.mxu0 0.0
      %667 = vmatpush2.msra.mxu0 0.0
      %668 = vmatprep.subr.mxu0 0.0
      %669 = vmatpush2.msra.mxu0 0.0
      %670 = vmatprep.subr.mxu0 0.0
      %671 = vmatpush2.msra.mxu0 0.0
      %672 = vmatprep.subr.mxu0 0.0
      %673 = vmatpush2.msra.mxu0 0.0
      %674 = vmatprep.subr.mxu0 0.0
      %675 = vmatpush2.msra.mxu0 0.0
      %676 = vmatprep.subr.mxu0 0.0
      %677 = vmatpush2.msra.mxu0 0.0
      %678 = vmatprep.subr.mxu0 0.0
      %679 = vmatpush2.msra.mxu0 0.0
      %680 = vmatprep.subr.mxu0 0.0
      %681 = vmatpush2.msra.mxu0 0.0
      %682 = vmatprep.subr.mxu0 0.0
      %683 = vmatpush2.msra.mxu0 0.0
      %684 = vmatprep.subr.mxu0 0.0
      %685 = vmatpush2.msra.mxu0 0.0
      %686 = vmatprep.subr.mxu0 0.0
      %687 = vmatpush2.msra.mxu0 0.0
      %688 = vmatprep.subr.mxu0 0.0
      %689 = vmatpush2.msra.mxu0 0.0
      %690 = vmatprep.subr.mxu0 0.0
      %691 = vmatpush2.msra.mxu0 0.0
      %692 = vmatprep.subr.mxu0 0.0
      %693 = vmatpush2.msra.mxu0 0.0
      %694 = vmatprep.subr.mxu0 0.0
      %695 = vmatpush2.msra.mxu0 0.0
      %696 = vmatprep.mubr.f32.mxu0 0.0
      %697 = vmatmul.mubr.f32.gmra.mxu0 %v596
      %v698 = vpop.f32.mrf.mxu0
      %v699 = vadd.f32 0.0, %v698
      %v700 = vpop.f32.mrf.mxu0
      %701 = vmatprep.mubr.f32.mxu0 0.0
      %702 = vmatmul.mubr.f32.gmra.mxu0 %v598
      %v703 = vpop.f32.mrf.mxu0
      %v704 = vadd.f32 0.0, %v703
      %v705 = vpop.f32.mrf.mxu0
      %706 = vmatprep.mubr.f32.mxu0 0.0
      %707 = vmatmul.mubr.f32.gmra.mxu0 %v600
      %v708 = vpop.f32.mrf.mxu0
      %v709 = vadd.f32 0.0, %v708
      %v710 = vpop.f32.mrf.mxu0
      %711 = vmatprep.mubr.f32.mxu0 0.0
      %712 = vmatmul.mubr.f32.gmra.mxu0 %v602
      %v713 = vpop.f32.mrf.mxu0
      %v714 = vadd.f32 0.0, %v713
      %v715 = vpop.f32.mrf.mxu0
      %716 = vmatprep.mubr.f32.mxu0 0.0
      %717 = vmatmul.mubr.f32.gmra.mxu0 %v604
      %v718 = vpop.f32.mrf.mxu0
      %v719 = vadd.f32 0.0, %v718
      %v720 = vpop.f32.mrf.mxu0
      %721 = vmatprep.mubr.f32.mxu0 0.0
      %722 = vmatmul.mubr.f32.gmra.mxu0 %v606
      %v723 = vpop.f32.mrf.mxu0
      %v724 = vadd.f32 0.0, %v723
      %v725 = vpop.f32.mrf.mxu0
      %726 = vmatprep.mubr.f32.mxu0 0.0
      %727 = vmatmul.mubr.f32.gmra.mxu0 %v608
      %v728 = vpop.f32.mrf.mxu0
      %v729 = vadd.f32 0.0, %v728
      %v730 = vpop.f32.mrf.mxu0
      %731 = vmatprep.mubr.f32.mxu0 0.0
      %732 = vmatmul.mubr.f32.gmra.mxu0 %v610
      %v733 = vpop.f32.mrf.mxu0
      %v734 = vadd.f32 0.0, %v733
      %v735 = vpop.f32.mrf.mxu0
      %736 = vmatprep.mubr.f32.mxu0 0.0
      %737 = vmatmul.mubr.f32.gmra.mxu0 %v612
      %v738 = vpop.f32.mrf.mxu0
      %v739 = vadd.f32 0.0, %v738
      %v740 = vpop.f32.mrf.mxu0
      %741 = vmatprep.mubr.f32.mxu0 0.0
      %742 = vmatmul.mubr.f32.gmra.mxu0 %v614
      %v743 = vpop.f32.mrf.mxu0
      %v744 = vadd.f32 0.0, %v743
      %v745 = vpop.f32.mrf.mxu0
      %746 = vmatprep.mubr.f32.mxu0 0.0
      %747 = vmatmul.mubr.f32.gmra.mxu0 %v616
      %v748 = vpop.f32.mrf.mxu0
      %v749 = vadd.f32 0.0, %v748
      %v750 = vpop.f32.mrf.mxu0
      %751 = vmatprep.mubr.f32.mxu0 0.0
      %752 = vmatmul.mubr.f32.gmra.mxu0 %v618
      %v753 = vpop.f32.mrf.mxu0
      %v754 = vadd.f32 0.0, %v753
      %v755 = vpop.f32.mrf.mxu0
      %756 = vmatprep.mubr.f32.mxu0 0.0
      %757 = vmatmul.mubr.f32.gmra.mxu0 %v620
      %v758 = vpop.f32.mrf.mxu0
      %v759 = vadd.f32 0.0, %v758
      %v760 = vpop.f32.mrf.mxu0
      %761 = vmatprep.mubr.f32.mxu0 0.0
      %762 = vmatmul.mubr.f32.gmra.mxu0 %v622
      %v763 = vpop.f32.mrf.mxu0
      %v764 = vadd.f32 0.0, %v763
      %v765 = vpop.f32.mrf.mxu0
      %766 = vmatprep.mubr.f32.mxu0 0.0
      %767 = vmatmul.mubr.f32.gmra.mxu0 %v624
      %v768 = vpop.f32.mrf.mxu0
      %v769 = vadd.f32 0.0, %v768
      %v770 = vpop.f32.mrf.mxu0
      %771 = vmatprep.mubr.f32.mxu0 0.0
      %772 = vmatmul.mubr.f32.gmra.mxu0 %v626
      %v773 = vpop.f32.mrf.mxu0
      %v774 = vadd.f32 0.0, %v773
      %v775 = vpop.f32.mrf.mxu0
      %776 = vdwg.mxu0
      %v777 = vsel %vm595, %v515, 0
      %v779 = vsel %vm595, %v467, 0
      %v781 = vsel %vm595, %v516, 0
      %v783 = vsel %vm595, %v470, 0
      %v785 = vsel %vm595, %v517, 0
      %v787 = vsel %vm595, %v473, 0
      %v789 = vsel %vm595, %v518, 0
      %v791 = vsel %vm595, %v476, 0
      %v793 = vsel %vm595, %v519, 0
      %v795 = vsel %vm595, %v479, 0
      %v797 = vsel %vm595, %v520, 0
      %v799 = vsel %vm595, %v482, 0
      %v801 = vsel %vm595, %v521, 0
      %v803 = vsel %vm595, %v485, 0
      %v805 = vsel %vm595, %v522, 0
      %v807 = vsel %vm595, %v488, 0
      %v810 = vsel %vm628, %v535, 0
      %812 = vmatprep.subr.mxu0 0.0
      %813 = vmatpush1.msra.mxu0 0.0
      %814 = vmatprep.subr.mxu0 0.0
      %815 = vmatpush1.msra.mxu0 0.0
      %816 = vmatprep.subr.mxu0 0.0
      %817 = vmatpush1.msra.mxu0 0.0
      %818 = vmatprep.subr.mxu0 0.0
      %819 = vmatpush1.msra.mxu0 0.0
      %820 = vmatprep.subr.mxu0 0.0
      %821 = vmatpush1.msra.mxu0 0.0
      %822 = vmatprep.subr.mxu0 0.0
      %823 = vmatpush1.msra.mxu0 0.0
      %824 = vmatprep.subr.mxu0 0.0
      %825 = vmatpush1.msra.mxu0 0.0
      %826 = vmatprep.subr.mxu0 0.0
      %827 = vmatpush1.msra.mxu0 0.0
      %828 = vmatprep.subr.mxu0 0.0
      %829 = vmatpush1.msra.mxu0 0.0
      %830 = vmatprep.subr.mxu0 0.0
      %831 = vmatpush1.msra.mxu0 0.0
      %832 = vmatprep.subr.mxu0 0.0
      %833 = vmatpush1.msra.mxu0 0.0
      %834 = vmatprep.subr.mxu0 0.0
      %835 = vmatpush1.msra.mxu0 0.0
      %836 = vmatprep.subr.mxu0 0.0
      %837 = vmatpush1.msra.mxu0 0.0
      %838 = vmatprep.subr.mxu0 0.0
      %839 = vmatpush1.msra.mxu0 0.0
      %840 = vmatprep.subr.mxu0 0.0
      %841 = vmatpush1.msra.mxu0 0.0
      %842 = vmatprep.subr.mxu0 0.0
      %843 = vmatpush1.msra.mxu0 %v810
      %844 = vmatprep.subr.mxu0 0.0
      %845 = vmatpush2.msra.mxu0 0.0
      %846 = vmatprep.subr.mxu0 0.0
      %847 = vmatpush2.msra.mxu0 0.0
      %848 = vmatprep.subr.mxu0 0.0
      %849 = vmatpush2.msra.mxu0 0.0
      %850 = vmatprep.subr.mxu0 0.0
      %851 = vmatpush2.msra.mxu0 0.0
      %852 = vmatprep.subr.mxu0 0.0
      %853 = vmatpush2.msra.mxu0 0.0
      %854 = vmatprep.subr.mxu0 0.0
      %855 = vmatpush2.msra.mxu0 0.0
      %856 = vmatprep.subr.mxu0 0.0
      %857 = vmatpush2.msra.mxu0 0.0
      %858 = vmatprep.subr.mxu0 0.0
      %859 = vmatpush2.msra.mxu0 0.0
      %860 = vmatprep.subr.mxu0 0.0
      %861 = vmatpush2.msra.mxu0 0.0
      %862 = vmatprep.subr.mxu0 0.0
      %863 = vmatpush2.msra.mxu0 0.0
      %864 = vmatprep.subr.mxu0 0.0
      %865 = vmatpush2.msra.mxu0 0.0
      %866 = vmatprep.subr.mxu0 0.0
      %867 = vmatpush2.msra.mxu0 0.0
      %868 = vmatprep.subr.mxu0 0.0
      %869 = vmatpush2.msra.mxu0 0.0
      %870 = vmatprep.subr.mxu0 0.0
      %871 = vmatpush2.msra.mxu0 0.0
      %872 = vmatprep.subr.mxu0 0.0
      %873 = vmatpush2.msra.mxu0 0.0
      %874 = vmatprep.subr.mxu0 0.0
      %875 = vmatpush2.msra.mxu0 0.0
      %876 = vmatprep.mubr.f32.mxu0 0.0
      %877 = vmatmul.mubr.f32.gmra.mxu0 %v777
      %v878 = vpop.f32.mrf.mxu0
      %v879 = vadd.f32 %v699, %v878
      %v880 = vpop.f32.mrf.mxu0
      %881 = vmatprep.mubr.f32.mxu0 0.0
      %882 = vmatmul.mubr.f32.gmra.mxu0 %v779
      %v883 = vpop.f32.mrf.mxu0
      %v884 = vadd.f32 %v704, %v883
      %v885 = vpop.f32.mrf.mxu0
      %886 = vmatprep.mubr.f32.mxu0 0.0
      %887 = vmatmul.mubr.f32.gmra.mxu0 %v781
      %v888 = vpop.f32.mrf.mxu0
      %v889 = vadd.f32 %v709, %v888
      %v890 = vpop.f32.mrf.mxu0
      %891 = vmatprep.mubr.f32.mxu0 0.0
      %892 = vmatmul.mubr.f32.gmra.mxu0 %v783
      %v893 = vpop.f32.mrf.mxu0
      %v894 = vadd.f32 %v714, %v893
      %v895 = vpop.f32.mrf.mxu0
      %896 = vmatprep.mubr.f32.mxu0 0.0
      %897 = vmatmul.mubr.f32.gmra.mxu0 %v785
      %v898 = vpop.f32.mrf.mxu0
      %v899 = vadd.f32 %v719, %v898
      %v900 = vpop.f32.mrf.mxu0
      %901 = vmatprep.mubr.f32.mxu0 0.0
      %902 = vmatmul.mubr.f32.gmra.mxu0 %v787
      %v903 = vpop.f32.mrf.mxu0
      %v904 = vadd.f32 %v724, %v903
      %v905 = vpop.f32.mrf.mxu0
      %906 = vmatprep.mubr.f32.mxu0 0.0
      %907 = vmatmul.mubr.f32.gmra.mxu0 %v789
      %v908 = vpop.f32.mrf.mxu0
      %v909 = vadd.f32 %v729, %v908
      %v910 = vpop.f32.mrf.mxu0
      %911 = vmatprep.mubr.f32.mxu0 0.0
      %912 = vmatmul.mubr.f32.gmra.mxu0 %v791
      %v913 = vpop.f32.mrf.mxu0
      %v914 = vadd.f32 %v734, %v913
      %v915 = vpop.f32.mrf.mxu0
      %916 = vmatprep.mubr.f32.mxu0 0.0
      %917 = vmatmul.mubr.f32.gmra.mxu0 %v793
      %v918 = vpop.f32.mrf.mxu0
      %v919 = vadd.f32 %v739, %v918
      %v920 = vpop.f32.mrf.mxu0
      %921 = vmatprep.mubr.f32.mxu0 0.0
      %922 = vmatmul.mubr.f32.gmra.mxu0 %v795
      %v923 = vpop.f32.mrf.mxu0
      %v924 = vadd.f32 %v744, %v923
      %v925 = vpop.f32.mrf.mxu0
      %926 = vmatprep.mubr.f32.mxu0 0.0
      %927 = vmatmul.mubr.f32.gmra.mxu0 %v797
      %v928 = vpop.f32.mrf.mxu0
      %v929 = vadd.f32 %v749, %v928
      %v930 = vpop.f32.mrf.mxu0
      %931 = vmatprep.mubr.f32.mxu0 0.0
      %932 = vmatmul.mubr.f32.gmra.mxu0 %v799
      %v933 = vpop.f32.mrf.mxu0
      %v934 = vadd.f32 %v754, %v933
      %v935 = vpop.f32.mrf.mxu0
      %936 = vmatprep.mubr.f32.mxu0 0.0
      %937 = vmatmul.mubr.f32.gmra.mxu0 %v801
      %v938 = vpop.f32.mrf.mxu0
      %v939 = vadd.f32 %v759, %v938
      %v940 = vpop.f32.mrf.mxu0
      %941 = vmatprep.mubr.f32.mxu0 0.0
      %942 = vmatmul.mubr.f32.gmra.mxu0 %v803
      %v943 = vpop.f32.mrf.mxu0
      %v944 = vadd.f32 %v764, %v943
      %v945 = vpop.f32.mrf.mxu0
      %946 = vmatprep.mubr.f32.mxu0 0.0
      %947 = vmatmul.mubr.f32.gmra.mxu0 %v805
      %v948 = vpop.f32.mrf.mxu0
      %v949 = vadd.f32 %v769, %v948
      %v950 = vpop.f32.mrf.mxu0
      %951 = vmatprep.mubr.f32.mxu0 0.0
      %952 = vmatmul.mubr.f32.gmra.mxu0 %v807
      %v953 = vpop.f32.mrf.mxu0
      %v954 = vadd.f32 %v774, %v953
      %v955 = vpop.f32.mrf.mxu0
      %956 = vdwg.mxu0
      %vm957 = vcmask 1045504
      %v958 = vrot.slane %v515, 2
      %v959 = vrot.slane %v467, 2
      %v960 = vsel %vm957, %v958, %v959
      %v961 = vrot.slane %v525, 2
      %v962 = vsel %vm957, %v959, %v961
      %v963 = vrot.slane %v516, 2
      %v964 = vrot.slane %v470, 2
      %v965 = vsel %vm957, %v963, %v964
      %v966 = vrot.slane %v526, 2
      %v967 = vsel %vm957, %v964, %v966
      %v968 = vrot.slane %v517, 2
      %v969 = vrot.slane %v473, 2
      %v970 = vsel %vm957, %v968, %v969
      %v971 = vrot.slane %v527, 2
      %v972 = vsel %vm957, %v969, %v971
      %v973 = vrot.slane %v518, 2
      %v974 = vrot.slane %v476, 2
      %v975 = vsel %vm957, %v973, %v974
      %v976 = vrot.slane %v528, 2
      %v977 = vsel %vm957, %v974, %v976
      %v978 = vrot.slane %v519, 2
      %v979 = vrot.slane %v479, 2
      %v980 = vsel %vm957, %v978, %v979
      %v981 = vrot.slane %v529, 2
      %v982 = vsel %vm957, %v979, %v981
      %v983 = vrot.slane %v520, 2
      %v984 = vrot.slane %v482, 2
      %v985 = vsel %vm957, %v983, %v984
      %v986 = vrot.slane %v530, 2
      %v987 = vsel %vm957, %v984, %v986
      %v988 = vrot.slane %v521, 2
      %v989 = vrot.slane %v485, 2
      %v990 = vsel %vm957, %v988, %v989
      %v991 = vrot.slane %v531, 2
      %v992 = vsel %vm957, %v989, %v991
      %v993 = vrot.slane %v522, 2
      %v994 = vrot.slane %v488, 2
      %v995 = vsel %vm957, %v993, %v994
      %v996 = vrot.slane %v532, 2
      %v997 = vsel %vm957, %v994, %v996
      %s998 = scalar_lea.vmem %s3, 8
      %v999 = vld [vmem:[%s998] sm:$0xf]
      %v1000 = vsel %vm595, %v960, 0
      %v1002 = vsel %vm595, %v962, 0
      %v1004 = vsel %vm595, %v965, 0
      %v1006 = vsel %vm595, %v967, 0
      %v1008 = vsel %vm595, %v970, 0
      %v1010 = vsel %vm595, %v972, 0
      %v1012 = vsel %vm595, %v975, 0
      %v1014 = vsel %vm595, %v977, 0
      %v1016 = vsel %vm595, %v980, 0
      %v1018 = vsel %vm595, %v982, 0
      %v1020 = vsel %vm595, %v985, 0
      %v1022 = vsel %vm595, %v987, 0
      %v1024 = vsel %vm595, %v990, 0
      %v1026 = vsel %vm595, %v992, 0
      %v1028 = vsel %vm595, %v995, 0
      %v1030 = vsel %vm595, %v997, 0
      %v1033 = vsel %vm628, %v999, 0
      %1035 = vmatprep.subr.mxu0 0.0
      %1036 = vmatpush1.msra.mxu0 0.0
      %1037 = vmatprep.subr.mxu0 0.0
      %1038 = vmatpush1.msra.mxu0 0.0
      %1039 = vmatprep.subr.mxu0 0.0
      %1040 = vmatpush1.msra.mxu0 0.0
      %1041 = vmatprep.subr.mxu0 0.0
      %1042 = vmatpush1.msra.mxu0 0.0
      %1043 = vmatprep.subr.mxu0 0.0
      %1044 = vmatpush1.msra.mxu0 0.0
      %1045 = vmatprep.subr.mxu0 0.0
      %1046 = vmatpush1.msra.mxu0 0.0
      %1047 = vmatprep.subr.mxu0 0.0
      %1048 = vmatpush1.msra.mxu0 0.0
      %1049 = vmatprep.subr.mxu0 0.0
      %1050 = vmatpush1.msra.mxu0 0.0
      %1051 = vmatprep.subr.mxu0 0.0
      %1052 = vmatpush1.msra.mxu0 0.0
      %1053 = vmatprep.subr.mxu0 0.0
      %1054 = vmatpush1.msra.mxu0 0.0
      %1055 = vmatprep.subr.mxu0 0.0
      %1056 = vmatpush1.msra.mxu0 0.0
      %1057 = vmatprep.subr.mxu0 0.0
      %1058 = vmatpush1.msra.mxu0 0.0
      %1059 = vmatprep.subr.mxu0 0.0
      %1060 = vmatpush1.msra.mxu0 0.0
      %1061 = vmatprep.subr.mxu0 0.0
      %1062 = vmatpush1.msra.mxu0 0.0
      %1063 = vmatprep.subr.mxu0 0.0
      %1064 = vmatpush1.msra.mxu0 0.0
      %1065 = vmatprep.subr.mxu0 0.0
      %1066 = vmatpush1.msra.mxu0 %v1033
      %1067 = vmatprep.subr.mxu0 0.0
      %1068 = vmatpush2.msra.mxu0 0.0
      %1069 = vmatprep.subr.mxu0 0.0
      %1070 = vmatpush2.msra.mxu0 0.0
      %1071 = vmatprep.subr.mxu0 0.0
      %1072 = vmatpush2.msra.mxu0 0.0
      %1073 = vmatprep.subr.mxu0 0.0
      %1074 = vmatpush2.msra.mxu0 0.0
      %1075 = vmatprep.subr.mxu0 0.0
      %1076 = vmatpush2.msra.mxu0 0.0
      %1077 = vmatprep.subr.mxu0 0.0
      %1078 = vmatpush2.msra.mxu0 0.0
      %1079 = vmatprep.subr.mxu0 0.0
      %1080 = vmatpush2.msra.mxu0 0.0
      %1081 = vmatprep.subr.mxu0 0.0
      %1082 = vmatpush2.msra.mxu0 0.0
      %1083 = vmatprep.subr.mxu0 0.0
      %1084 = vmatpush2.msra.mxu0 0.0
      %1085 = vmatprep.subr.mxu0 0.0
      %1086 = vmatpush2.msra.mxu0 0.0
      %1087 = vmatprep.subr.mxu0 0.0
      %1088 = vmatpush2.msra.mxu0 0.0
      %1089 = vmatprep.subr.mxu0 0.0
      %1090 = vmatpush2.msra.mxu0 0.0
      %1091 = vmatprep.subr.mxu0 0.0
      %1092 = vmatpush2.msra.mxu0 0.0
      %1093 = vmatprep.subr.mxu0 0.0
      %1094 = vmatpush2.msra.mxu0 0.0
      %1095 = vmatprep.subr.mxu0 0.0
      %1096 = vmatpush2.msra.mxu0 0.0
      %1097 = vmatprep.subr.mxu0 0.0
      %1098 = vmatpush2.msra.mxu0 0.0
      %1099 = vmatprep.mubr.f32.mxu0 0.0
      %1100 = vmatmul.mubr.f32.gmra.mxu0 %v1000
      %v1101 = vpop.f32.mrf.mxu0
      %v1102 = vadd.f32 0.0, %v1101
      %v1103 = vpop.f32.mrf.mxu0
      %1104 = vmatprep.mubr.f32.mxu0 0.0
      %1105 = vmatmul.mubr.f32.gmra.mxu0 %v1002
      %v1106 = vpop.f32.mrf.mxu0
      %v1107 = vadd.f32 0.0, %v1106
      %v1108 = vpop.f32.mrf.mxu0
      %1109 = vmatprep.mubr.f32.mxu0 0.0
      %1110 = vmatmul.mubr.f32.gmra.mxu0 %v1004
      %v1111 = vpop.f32.mrf.mxu0
      %v1112 = vadd.f32 0.0, %v1111
      %v1113 = vpop.f32.mrf.mxu0
      %1114 = vmatprep.mubr.f32.mxu0 0.0
      %1115 = vmatmul.mubr.f32.gmra.mxu0 %v1006
      %v1116 = vpop.f32.mrf.mxu0
      %v1117 = vadd.f32 0.0, %v1116
      %v1118 = vpop.f32.mrf.mxu0
      %1119 = vmatprep.mubr.f32.mxu0 0.0
      %1120 = vmatmul.mubr.f32.gmra.mxu0 %v1008
      %v1121 = vpop.f32.mrf.mxu0
      %v1122 = vadd.f32 0.0, %v1121
      %v1123 = vpop.f32.mrf.mxu0
      %1124 = vmatprep.mubr.f32.mxu0 0.0
      %1125 = vmatmul.mubr.f32.gmra.mxu0 %v1010
      %v1126 = vpop.f32.mrf.mxu0
      %v1127 = vadd.f32 0.0, %v1126
      %v1128 = vpop.f32.mrf.mxu0
      %1129 = vmatprep.mubr.f32.mxu0 0.0
      %1130 = vmatmul.mubr.f32.gmra.mxu0 %v1012
      %v1131 = vpop.f32.mrf.mxu0
      %v1132 = vadd.f32 0.0, %v1131
      %v1133 = vpop.f32.mrf.mxu0
      %1134 = vmatprep.mubr.f32.mxu0 0.0
      %1135 = vmatmul.mubr.f32.gmra.mxu0 %v1014
      %v1136 = vpop.f32.mrf.mxu0
      %v1137 = vadd.f32 0.0, %v1136
      %v1138 = vpop.f32.mrf.mxu0
      %1139 = vmatprep.mubr.f32.mxu0 0.0
      %1140 = vmatmul.mubr.f32.gmra.mxu0 %v1016
      %v1141 = vpop.f32.mrf.mxu0
      %v1142 = vadd.f32 0.0, %v1141
      %v1143 = vpop.f32.mrf.mxu0
      %1144 = vmatprep.mubr.f32.mxu0 0.0
      %1145 = vmatmul.mubr.f32.gmra.mxu0 %v1018
      %v1146 = vpop.f32.mrf.mxu0
      %v1147 = vadd.f32 0.0, %v1146
      %v1148 = vpop.f32.mrf.mxu0
      %1149 = vmatprep.mubr.f32.mxu0 0.0
      %1150 = vmatmul.mubr.f32.gmra.mxu0 %v1020
      %v1151 = vpop.f32.mrf.mxu0
      %v1152 = vadd.f32 0.0, %v1151
      %v1153 = vpop.f32.mrf.mxu0
      %1154 = vmatprep.mubr.f32.mxu0 0.0
      %1155 = vmatmul.mubr.f32.gmra.mxu0 %v1022
      %v1156 = vpop.f32.mrf.mxu0
      %v1157 = vadd.f32 0.0, %v1156
      %v1158 = vpop.f32.mrf.mxu0
      %1159 = vmatprep.mubr.f32.mxu0 0.0
      %1160 = vmatmul.mubr.f32.gmra.mxu0 %v1024
      %v1161 = vpop.f32.mrf.mxu0
      %v1162 = vadd.f32 0.0, %v1161
      %v1163 = vpop.f32.mrf.mxu0
      %1164 = vmatprep.mubr.f32.mxu0 0.0
      %1165 = vmatmul.mubr.f32.gmra.mxu0 %v1026
      %v1166 = vpop.f32.mrf.mxu0
      %v1167 = vadd.f32 0.0, %v1166
      %v1168 = vpop.f32.mrf.mxu0
      %1169 = vmatprep.mubr.f32.mxu0 0.0
      %1170 = vmatmul.mubr.f32.gmra.mxu0 %v1028
      %v1171 = vpop.f32.mrf.mxu0
      %v1172 = vadd.f32 0.0, %v1171
      %v1173 = vpop.f32.mrf.mxu0
      %1174 = vmatprep.mubr.f32.mxu0 0.0
      %1175 = vmatmul.mubr.f32.gmra.mxu0 %v1030
      %v1176 = vpop.f32.mrf.mxu0
      %v1177 = vadd.f32 0.0, %v1176
      %v1178 = vpop.f32.mrf.mxu0
      %1179 = vdwg.mxu0
      %v1180 = vadd.f32 %v879, %v1102
      %v1181 = vadd.f32 %v884, %v1107
      %v1182 = vadd.f32 %v889, %v1112
      %v1183 = vadd.f32 %v894, %v1117
      %v1184 = vadd.f32 %v899, %v1122
      %v1185 = vadd.f32 %v904, %v1127
      %v1186 = vadd.f32 %v909, %v1132
      %v1187 = vadd.f32 %v914, %v1137
      %v1188 = vadd.f32 %v919, %v1142
      %v1189 = vadd.f32 %v924, %v1147
      %v1190 = vadd.f32 %v929, %v1152
      %v1191 = vadd.f32 %v934, %v1157
      %v1192 = vadd.f32 %v939, %v1162
      %v1193 = vadd.f32 %v944, %v1167
      %v1194 = vadd.f32 %v949, %v1172
      %v1195 = vadd.f32 %v954, %v1177
      %s1196 = scalar_lea.vmem %s3, 12
      %v1197 = vld [vmem:[%s1196] sm:$0xf]
      %v1199 = vsel %vm595, %v523, 0
      %v1201 = vsel %vm595, %v491, 0
      %v1204 = vsel %vm628, %v1197, 0
      %1206 = vmatprep.subr.mxu0 0.0
      %1207 = vmatpush1.msra.mxu0 0.0
      %1208 = vmatprep.subr.mxu0 0.0
      %1209 = vmatpush1.msra.mxu0 0.0
      %1210 = vmatprep.subr.mxu0 0.0
      %1211 = vmatpush1.msra.mxu0 0.0
      %1212 = vmatprep.subr.mxu0 0.0
      %1213 = vmatpush1.msra.mxu0 0.0
      %1214 = vmatprep.subr.mxu0 0.0
      %1215 = vmatpush1.msra.mxu0 0.0
      %1216 = vmatprep.subr.mxu0 0.0
      %1217 = vmatpush1.msra.mxu0 0.0
      %1218 = vmatprep.subr.mxu0 0.0
      %1219 = vmatpush1.msra.mxu0 0.0
      %1220 = vmatprep.subr.mxu0 0.0
      %1221 = vmatpush1.msra.mxu0 0.0
      %1222 = vmatprep.subr.mxu0 0.0
      %1223 = vmatpush1.msra.mxu0 0.0
      %1224 = vmatprep.subr.mxu0 0.0
      %1225 = vmatpush1.msra.mxu0 0.0
      %1226 = vmatprep.subr.mxu0 0.0
      %1227 = vmatpush1.msra.mxu0 0.0
      %1228 = vmatprep.subr.mxu0 0.0
      %1229 = vmatpush1.msra.mxu0 0.0
      %1230 = vmatprep.subr.mxu0 0.0
      %1231 = vmatpush1.msra.mxu0 0.0
      %1232 = vmatprep.subr.mxu0 0.0
      %1233 = vmatpush1.msra.mxu0 0.0
      %1234 = vmatprep.subr.mxu0 0.0
      %1235 = vmatpush1.msra.mxu0 0.0
      %1236 = vmatprep.subr.mxu0 0.0
      %1237 = vmatpush1.msra.mxu0 %v1204
      %1238 = vmatprep.subr.mxu0 0.0
      %1239 = vmatpush2.msra.mxu0 0.0
      %1240 = vmatprep.subr.mxu0 0.0
      %1241 = vmatpush2.msra.mxu0 0.0
      %1242 = vmatprep.subr.mxu0 0.0
      %1243 = vmatpush2.msra.mxu0 0.0
      %1244 = vmatprep.subr.mxu0 0.0
      %1245 = vmatpush2.msra.mxu0 0.0
      %1246 = vmatprep.subr.mxu0 0.0
      %1247 = vmatpush2.msra.mxu0 0.0
      %1248 = vmatprep.subr.mxu0 0.0
      %1249 = vmatpush2.msra.mxu0 0.0
      %1250 = vmatprep.subr.mxu0 0.0
      %1251 = vmatpush2.msra.mxu0 0.0
      %1252 = vmatprep.subr.mxu0 0.0
      %1253 = vmatpush2.msra.mxu0 0.0
      %1254 = vmatprep.subr.mxu0 0.0
      %1255 = vmatpush2.msra.mxu0 0.0
      %1256 = vmatprep.subr.mxu0 0.0
      %1257 = vmatpush2.msra.mxu0 0.0
      %1258 = vmatprep.subr.mxu0 0.0
      %1259 = vmatpush2.msra.mxu0 0.0
      %1260 = vmatprep.subr.mxu0 0.0
      %1261 = vmatpush2.msra.mxu0 0.0
      %1262 = vmatprep.subr.mxu0 0.0
      %1263 = vmatpush2.msra.mxu0 0.0
      %1264 = vmatprep.subr.mxu0 0.0
      %1265 = vmatpush2.msra.mxu0 0.0
      %1266 = vmatprep.subr.mxu0 0.0
      %1267 = vmatpush2.msra.mxu0 0.0
      %1268 = vmatprep.subr.mxu0 0.0
      %1269 = vmatpush2.msra.mxu0 0.0
      %1270 = vmatprep.mubr.f32.mxu0 0.0
      %1271 = vmatmul.mubr.f32.gmra.mxu0 %v781
      %v1272 = vpop.f32.mrf.mxu0
      %v1273 = vadd.f32 0.0, %v1272
      %v1274 = vpop.f32.mrf.mxu0
      %1275 = vmatprep.mubr.f32.mxu0 0.0
      %1276 = vmatmul.mubr.f32.gmra.mxu0 %v783
      %v1277 = vpop.f32.mrf.mxu0
      %v1278 = vadd.f32 0.0, %v1277
      %v1279 = vpop.f32.mrf.mxu0
      %1280 = vmatprep.mubr.f32.mxu0 0.0
      %1281 = vmatmul.mubr.f32.gmra.mxu0 %v785
      %v1282 = vpop.f32.mrf.mxu0
      %v1283 = vadd.f32 0.0, %v1282
      %v1284 = vpop.f32.mrf.mxu0
      %1285 = vmatprep.mubr.f32.mxu0 0.0
      %1286 = vmatmul.mubr.f32.gmra.mxu0 %v787
      %v1287 = vpop.f32.mrf.mxu0
      %v1288 = vadd.f32 0.0, %v1287
      %v1289 = vpop.f32.mrf.mxu0
      %1290 = vmatprep.mubr.f32.mxu0 0.0
      %1291 = vmatmul.mubr.f32.gmra.mxu0 %v789
      %v1292 = vpop.f32.mrf.mxu0
      %v1293 = vadd.f32 0.0, %v1292
      %v1294 = vpop.f32.mrf.mxu0
      %1295 = vmatprep.mubr.f32.mxu0 0.0
      %1296 = vmatmul.mubr.f32.gmra.mxu0 %v791
      %v1297 = vpop.f32.mrf.mxu0
      %v1298 = vadd.f32 0.0, %v1297
      %v1299 = vpop.f32.mrf.mxu0
      %1300 = vmatprep.mubr.f32.mxu0 0.0
      %1301 = vmatmul.mubr.f32.gmra.mxu0 %v793
      %v1302 = vpop.f32.mrf.mxu0
      %v1303 = vadd.f32 0.0, %v1302
      %v1304 = vpop.f32.mrf.mxu0
      %1305 = vmatprep.mubr.f32.mxu0 0.0
      %1306 = vmatmul.mubr.f32.gmra.mxu0 %v795
      %v1307 = vpop.f32.mrf.mxu0
      %v1308 = vadd.f32 0.0, %v1307
      %v1309 = vpop.f32.mrf.mxu0
      %1310 = vmatprep.mubr.f32.mxu0 0.0
      %1311 = vmatmul.mubr.f32.gmra.mxu0 %v797
      %v1312 = vpop.f32.mrf.mxu0
      %v1313 = vadd.f32 0.0, %v1312
      %v1314 = vpop.f32.mrf.mxu0
      %1315 = vmatprep.mubr.f32.mxu0 0.0
      %1316 = vmatmul.mubr.f32.gmra.mxu0 %v799
      %v1317 = vpop.f32.mrf.mxu0
      %v1318 = vadd.f32 0.0, %v1317
      %v1319 = vpop.f32.mrf.mxu0
      %1320 = vmatprep.mubr.f32.mxu0 0.0
      %1321 = vmatmul.mubr.f32.gmra.mxu0 %v801
      %v1322 = vpop.f32.mrf.mxu0
      %v1323 = vadd.f32 0.0, %v1322
      %v1324 = vpop.f32.mrf.mxu0
      %1325 = vmatprep.mubr.f32.mxu0 0.0
      %1326 = vmatmul.mubr.f32.gmra.mxu0 %v803
      %v1327 = vpop.f32.mrf.mxu0
      %v1328 = vadd.f32 0.0, %v1327
      %v1329 = vpop.f32.mrf.mxu0
      %1330 = vmatprep.mubr.f32.mxu0 0.0
      %1331 = vmatmul.mubr.f32.gmra.mxu0 %v805
      %v1332 = vpop.f32.mrf.mxu0
      %v1333 = vadd.f32 0.0, %v1332
      %v1334 = vpop.f32.mrf.mxu0
      %1335 = vmatprep.mubr.f32.mxu0 0.0
      %1336 = vmatmul.mubr.f32.gmra.mxu0 %v807
      %v1337 = vpop.f32.mrf.mxu0
      %v1338 = vadd.f32 0.0, %v1337
      %v1339 = vpop.f32.mrf.mxu0
      %1340 = vmatprep.mubr.f32.mxu0 0.0
      %1341 = vmatmul.mubr.f32.gmra.mxu0 %v1199
      %v1342 = vpop.f32.mrf.mxu0
      %v1343 = vadd.f32 0.0, %v1342
      %v1344 = vpop.f32.mrf.mxu0
      %1345 = vmatprep.mubr.f32.mxu0 0.0
      %1346 = vmatmul.mubr.f32.gmra.mxu0 %v1201
      %v1347 = vpop.f32.mrf.mxu0
      %v1348 = vadd.f32 0.0, %v1347
      %v1349 = vpop.f32.mrf.mxu0
      %1350 = vdwg.mxu0
      %v1351 = vadd.f32 %v1180, %v1273
      %v1352 = vadd.f32 %v1181, %v1278
      %v1353 = vadd.f32 %v1182, %v1283
      %v1354 = vadd.f32 %v1183, %v1288
      %v1355 = vadd.f32 %v1184, %v1293
      %v1356 = vadd.f32 %v1185, %v1298
      %v1357 = vadd.f32 %v1186, %v1303
      %v1358 = vadd.f32 %v1187, %v1308
      %v1359 = vadd.f32 %v1188, %v1313
      %v1360 = vadd.f32 %v1189, %v1318
      %v1361 = vadd.f32 %v1190, %v1323
      %v1362 = vadd.f32 %v1191, %v1328
      %v1363 = vadd.f32 %v1192, %v1333
      %v1364 = vadd.f32 %v1193, %v1338
      %v1365 = vadd.f32 %v1194, %v1343
      %v1366 = vadd.f32 %v1195, %v1348
      %v1368 = vrot.slane %v523, 1
      %v1369 = vrot.slane %v491, 1
      %v1370 = vsel %vm552, %v1368, %v1369
      %v1371 = vrot.slane %v533, 1
      %v1372 = vsel %vm552, %v1369, %v1371
      %s1373 = scalar_lea.vmem %s3, 16
      %v1374 = vld [vmem:[%s1373] sm:$0xf]
      %v1375 = vsel %vm595, %v1370, 0
      %v1377 = vsel %vm595, %v1372, 0
      %v1380 = vsel %vm628, %v1374, 0
      %1382 = vmatprep.subr.mxu0 0.0
      %1383 = vmatpush1.msra.mxu0 0.0
      %1384 = vmatprep.subr.mxu0 0.0
      %1385 = vmatpush1.msra.mxu0 0.0
      %1386 = vmatprep.subr.mxu0 0.0
      %1387 = vmatpush1.msra.mxu0 0.0
      %1388 = vmatprep.subr.mxu0 0.0
      %1389 = vmatpush1.msra.mxu0 0.0
      %1390 = vmatprep.subr.mxu0 0.0
      %1391 = vmatpush1.msra.mxu0 0.0
      %1392 = vmatprep.subr.mxu0 0.0
      %1393 = vmatpush1.msra.mxu0 0.0
      %1394 = vmatprep.subr.mxu0 0.0
      %1395 = vmatpush1.msra.mxu0 0.0
      %1396 = vmatprep.subr.mxu0 0.0
      %1397 = vmatpush1.msra.mxu0 0.0
      %1398 = vmatprep.subr.mxu0 0.0
      %1399 = vmatpush1.msra.mxu0 0.0
      %1400 = vmatprep.subr.mxu0 0.0
      %1401 = vmatpush1.msra.mxu0 0.0
      %1402 = vmatprep.subr.mxu0 0.0
      %1403 = vmatpush1.msra.mxu0 0.0
      %1404 = vmatprep.subr.mxu0 0.0
      %1405 = vmatpush1.msra.mxu0 0.0
      %1406 = vmatprep.subr.mxu0 0.0
      %1407 = vmatpush1.msra.mxu0 0.0
      %1408 = vmatprep.subr.mxu0 0.0
      %1409 = vmatpush1.msra.mxu0 0.0
      %1410 = vmatprep.subr.mxu0 0.0
      %1411 = vmatpush1.msra.mxu0 0.0
      %1412 = vmatprep.subr.mxu0 0.0
      %1413 = vmatpush1.msra.mxu0 %v1380
      %1414 = vmatprep.subr.mxu0 0.0
      %1415 = vmatpush2.msra.mxu0 0.0
      %1416 = vmatprep.subr.mxu0 0.0
      %1417 = vmatpush2.msra.mxu0 0.0
      %1418 = vmatprep.subr.mxu0 0.0
      %1419 = vmatpush2.msra.mxu0 0.0
      %1420 = vmatprep.subr.mxu0 0.0
      %1421 = vmatpush2.msra.mxu0 0.0
      %1422 = vmatprep.subr.mxu0 0.0
      %1423 = vmatpush2.msra.mxu0 0.0
      %1424 = vmatprep.subr.mxu0 0.0
      %1425 = vmatpush2.msra.mxu0 0.0
      %1426 = vmatprep.subr.mxu0 0.0
      %1427 = vmatpush2.msra.mxu0 0.0
      %1428 = vmatprep.subr.mxu0 0.0
      %1429 = vmatpush2.msra.mxu0 0.0
      %1430 = vmatprep.subr.mxu0 0.0
      %1431 = vmatpush2.msra.mxu0 0.0
      %1432 = vmatprep.subr.mxu0 0.0
      %1433 = vmatpush2.msra.mxu0 0.0
      %1434 = vmatprep.subr.mxu0 0.0
      %1435 = vmatpush2.msra.mxu0 0.0
      %1436 = vmatprep.subr.mxu0 0.0
      %1437 = vmatpush2.msra.mxu0 0.0
      %1438 = vmatprep.subr.mxu0 0.0
      %1439 = vmatpush2.msra.mxu0 0.0
      %1440 = vmatprep.subr.mxu0 0.0
      %1441 = vmatpush2.msra.mxu0 0.0
      %1442 = vmatprep.subr.mxu0 0.0
      %1443 = vmatpush2.msra.mxu0 0.0
      %1444 = vmatprep.subr.mxu0 0.0
      %1445 = vmatpush2.msra.mxu0 0.0
      %1446 = vmatprep.mubr.f32.mxu0 0.0
      %1447 = vmatmul.mubr.f32.gmra.mxu0 %v600
      %v1448 = vpop.f32.mrf.mxu0
      %v1449 = vadd.f32 0.0, %v1448
      %v1450 = vpop.f32.mrf.mxu0
      %1451 = vmatprep.mubr.f32.mxu0 0.0
      %1452 = vmatmul.mubr.f32.gmra.mxu0 %v602
      %v1453 = vpop.f32.mrf.mxu0
      %v1454 = vadd.f32 0.0, %v1453
      %v1455 = vpop.f32.mrf.mxu0
      %1456 = vmatprep.mubr.f32.mxu0 0.0
      %1457 = vmatmul.mubr.f32.gmra.mxu0 %v604
      %v1458 = vpop.f32.mrf.mxu0
      %v1459 = vadd.f32 0.0, %v1458
      %v1460 = vpop.f32.mrf.mxu0
      %1461 = vmatprep.mubr.f32.mxu0 0.0
      %1462 = vmatmul.mubr.f32.gmra.mxu0 %v606
      %v1463 = vpop.f32.mrf.mxu0
      %v1464 = vadd.f32 0.0, %v1463
      %v1465 = vpop.f32.mrf.mxu0
      %1466 = vmatprep.mubr.f32.mxu0 0.0
      %1467 = vmatmul.mubr.f32.gmra.mxu0 %v608
      %v1468 = vpop.f32.mrf.mxu0
      %v1469 = vadd.f32 0.0, %v1468
      %v1470 = vpop.f32.mrf.mxu0
      %1471 = vmatprep.mubr.f32.mxu0 0.0
      %1472 = vmatmul.mubr.f32.gmra.mxu0 %v610
      %v1473 = vpop.f32.mrf.mxu0
      %v1474 = vadd.f32 0.0, %v1473
      %v1475 = vpop.f32.mrf.mxu0
      %1476 = vmatprep.mubr.f32.mxu0 0.0
      %1477 = vmatmul.mubr.f32.gmra.mxu0 %v612
      %v1478 = vpop.f32.mrf.mxu0
      %v1479 = vadd.f32 0.0, %v1478
      %v1480 = vpop.f32.mrf.mxu0
      %1481 = vmatprep.mubr.f32.mxu0 0.0
      %1482 = vmatmul.mubr.f32.gmra.mxu0 %v614
      %v1483 = vpop.f32.mrf.mxu0
      %v1484 = vadd.f32 0.0, %v1483
      %v1485 = vpop.f32.mrf.mxu0
      %1486 = vmatprep.mubr.f32.mxu0 0.0
      %1487 = vmatmul.mubr.f32.gmra.mxu0 %v616
      %v1488 = vpop.f32.mrf.mxu0
      %v1489 = vadd.f32 0.0, %v1488
      %v1490 = vpop.f32.mrf.mxu0
      %1491 = vmatprep.mubr.f32.mxu0 0.0
      %1492 = vmatmul.mubr.f32.gmra.mxu0 %v618
      %v1493 = vpop.f32.mrf.mxu0
      %v1494 = vadd.f32 0.0, %v1493
      %v1495 = vpop.f32.mrf.mxu0
      %1496 = vmatprep.mubr.f32.mxu0 0.0
      %1497 = vmatmul.mubr.f32.gmra.mxu0 %v620
      %v1498 = vpop.f32.mrf.mxu0
      %v1499 = vadd.f32 0.0, %v1498
      %v1500 = vpop.f32.mrf.mxu0
      %1501 = vmatprep.mubr.f32.mxu0 0.0
      %1502 = vmatmul.mubr.f32.gmra.mxu0 %v622
      %v1503 = vpop.f32.mrf.mxu0
      %v1504 = vadd.f32 0.0, %v1503
      %v1505 = vpop.f32.mrf.mxu0
      %1506 = vmatprep.mubr.f32.mxu0 0.0
      %1507 = vmatmul.mubr.f32.gmra.mxu0 %v624
      %v1508 = vpop.f32.mrf.mxu0
      %v1509 = vadd.f32 0.0, %v1508
      %v1510 = vpop.f32.mrf.mxu0
      %1511 = vmatprep.mubr.f32.mxu0 0.0
      %1512 = vmatmul.mubr.f32.gmra.mxu0 %v626
      %v1513 = vpop.f32.mrf.mxu0
      %v1514 = vadd.f32 0.0, %v1513
      %v1515 = vpop.f32.mrf.mxu0
      %1516 = vmatprep.mubr.f32.mxu0 0.0
      %1517 = vmatmul.mubr.f32.gmra.mxu0 %v1375
      %v1518 = vpop.f32.mrf.mxu0
      %v1519 = vadd.f32 0.0, %v1518
      %v1520 = vpop.f32.mrf.mxu0
      %1521 = vmatprep.mubr.f32.mxu0 0.0
      %1522 = vmatmul.mubr.f32.gmra.mxu0 %v1377
      %v1523 = vpop.f32.mrf.mxu0
      %v1524 = vadd.f32 0.0, %v1523
      %v1525 = vpop.f32.mrf.mxu0
      %1526 = vdwg.mxu0
      %v1527 = vadd.f32 %v1351, %v1449
      %v1528 = vadd.f32 %v1352, %v1454
      %v1529 = vadd.f32 %v1353, %v1459
      %v1530 = vadd.f32 %v1354, %v1464
      %v1531 = vadd.f32 %v1355, %v1469
      %v1532 = vadd.f32 %v1356, %v1474
      %v1533 = vadd.f32 %v1357, %v1479
      %v1534 = vadd.f32 %v1358, %v1484
      %v1535 = vadd.f32 %v1359, %v1489
      %v1536 = vadd.f32 %v1360, %v1494
      %v1537 = vadd.f32 %v1361, %v1499
      %v1538 = vadd.f32 %v1362, %v1504
      %v1539 = vadd.f32 %v1363, %v1509
      %v1540 = vadd.f32 %v1364, %v1514
      %v1541 = vadd.f32 %v1365, %v1519
      %v1542 = vadd.f32 %v1366, %v1524
      %v1543 = vrot.slane %v523, 2
      %v1544 = vrot.slane %v491, 2
      %v1545 = vsel %vm957, %v1543, %v1544
      %v1546 = vrot.slane %v533, 2
      %v1547 = vsel %vm957, %v1544, %v1546
      %s1548 = scalar_lea.vmem %s3, 20
      %v1549 = vld [vmem:[%s1548] sm:$0xf]
      %v1550 = vsel %vm595, %v1545, 0
      %v1552 = vsel %vm595, %v1547, 0
      %v1555 = vsel %vm628, %v1549, 0
      %1557 = vmatprep.subr.mxu0 0.0
      %1558 = vmatpush1.msra.mxu0 0.0
      %1559 = vmatprep.subr.mxu0 0.0
      %1560 = vmatpush1.msra.mxu0 0.0
      %1561 = vmatprep.subr.mxu0 0.0
      %1562 = vmatpush1.msra.mxu0 0.0
      %1563 = vmatprep.subr.mxu0 0.0
      %1564 = vmatpush1.msra.mxu0 0.0
      %1565 = vmatprep.subr.mxu0 0.0
      %1566 = vmatpush1.msra.mxu0 0.0
      %1567 = vmatprep.subr.mxu0 0.0
      %1568 = vmatpush1.msra.mxu0 0.0
      %1569 = vmatprep.subr.mxu0 0.0
      %1570 = vmatpush1.msra.mxu0 0.0
      %1571 = vmatprep.subr.mxu0 0.0
      %1572 = vmatpush1.msra.mxu0 0.0
      %1573 = vmatprep.subr.mxu0 0.0
      %1574 = vmatpush1.msra.mxu0 0.0
      %1575 = vmatprep.subr.mxu0 0.0
      %1576 = vmatpush1.msra.mxu0 0.0
      %1577 = vmatprep.subr.mxu0 0.0
      %1578 = vmatpush1.msra.mxu0 0.0
      %1579 = vmatprep.subr.mxu0 0.0
      %1580 = vmatpush1.msra.mxu0 0.0
      %1581 = vmatprep.subr.mxu0 0.0
      %1582 = vmatpush1.msra.mxu0 0.0
      %1583 = vmatprep.subr.mxu0 0.0
      %1584 = vmatpush1.msra.mxu0 0.0
      %1585 = vmatprep.subr.mxu0 0.0
      %1586 = vmatpush1.msra.mxu0 0.0
      %1587 = vmatprep.subr.mxu0 0.0
      %1588 = vmatpush1.msra.mxu0 %v1555
      %1589 = vmatprep.subr.mxu0 0.0
      %1590 = vmatpush2.msra.mxu0 0.0
      %1591 = vmatprep.subr.mxu0 0.0
      %1592 = vmatpush2.msra.mxu0 0.0
      %1593 = vmatprep.subr.mxu0 0.0
      %1594 = vmatpush2.msra.mxu0 0.0
      %1595 = vmatprep.subr.mxu0 0.0
      %1596 = vmatpush2.msra.mxu0 0.0
      %1597 = vmatprep.subr.mxu0 0.0
      %1598 = vmatpush2.msra.mxu0 0.0
      %1599 = vmatprep.subr.mxu0 0.0
      %1600 = vmatpush2.msra.mxu0 0.0
      %1601 = vmatprep.subr.mxu0 0.0
      %1602 = vmatpush2.msra.mxu0 0.0
      %1603 = vmatprep.subr.mxu0 0.0
      %1604 = vmatpush2.msra.mxu0 0.0
      %1605 = vmatprep.subr.mxu0 0.0
      %1606 = vmatpush2.msra.mxu0 0.0
      %1607 = vmatprep.subr.mxu0 0.0
      %1608 = vmatpush2.msra.mxu0 0.0
      %1609 = vmatprep.subr.mxu0 0.0
      %1610 = vmatpush2.msra.mxu0 0.0
      %1611 = vmatprep.subr.mxu0 0.0
      %1612 = vmatpush2.msra.mxu0 0.0
      %1613 = vmatprep.subr.mxu0 0.0
      %1614 = vmatpush2.msra.mxu0 0.0
      %1615 = vmatprep.subr.mxu0 0.0
      %1616 = vmatpush2.msra.mxu0 0.0
      %1617 = vmatprep.subr.mxu0 0.0
      %1618 = vmatpush2.msra.mxu0 0.0
      %1619 = vmatprep.subr.mxu0 0.0
      %1620 = vmatpush2.msra.mxu0 0.0
      %1621 = vmatprep.mubr.f32.mxu0 0.0
      %1622 = vmatmul.mubr.f32.gmra.mxu0 %v1004
      %v1623 = vpop.f32.mrf.mxu0
      %v1624 = vadd.f32 0.0, %v1623
      %v1625 = vpop.f32.mrf.mxu0
      %1626 = vmatprep.mubr.f32.mxu0 0.0
      %1627 = vmatmul.mubr.f32.gmra.mxu0 %v1006
      %v1628 = vpop.f32.mrf.mxu0
      %v1629 = vadd.f32 0.0, %v1628
      %v1630 = vpop.f32.mrf.mxu0
      %1631 = vmatprep.mubr.f32.mxu0 0.0
      %1632 = vmatmul.mubr.f32.gmra.mxu0 %v1008
      %v1633 = vpop.f32.mrf.mxu0
      %v1634 = vadd.f32 0.0, %v1633
      %v1635 = vpop.f32.mrf.mxu0
      %1636 = vmatprep.mubr.f32.mxu0 0.0
      %1637 = vmatmul.mubr.f32.gmra.mxu0 %v1010
      %v1638 = vpop.f32.mrf.mxu0
      %v1639 = vadd.f32 0.0, %v1638
      %v1640 = vpop.f32.mrf.mxu0
      %1641 = vmatprep.mubr.f32.mxu0 0.0
      %1642 = vmatmul.mubr.f32.gmra.mxu0 %v1012
      %v1643 = vpop.f32.mrf.mxu0
      %v1644 = vadd.f32 0.0, %v1643
      %v1645 = vpop.f32.mrf.mxu0
      %1646 = vmatprep.mubr.f32.mxu0 0.0
      %1647 = vmatmul.mubr.f32.gmra.mxu0 %v1014
      %v1648 = vpop.f32.mrf.mxu0
      %v1649 = vadd.f32 0.0, %v1648
      %v1650 = vpop.f32.mrf.mxu0
      %1651 = vmatprep.mubr.f32.mxu0 0.0
      %1652 = vmatmul.mubr.f32.gmra.mxu0 %v1016
      %v1653 = vpop.f32.mrf.mxu0
      %v1654 = vadd.f32 0.0, %v1653
      %v1655 = vpop.f32.mrf.mxu0
      %1656 = vmatprep.mubr.f32.mxu0 0.0
      %1657 = vmatmul.mubr.f32.gmra.mxu0 %v1018
      %v1658 = vpop.f32.mrf.mxu0
      %v1659 = vadd.f32 0.0, %v1658
      %v1660 = vpop.f32.mrf.mxu0
      %1661 = vmatprep.mubr.f32.mxu0 0.0
      %1662 = vmatmul.mubr.f32.gmra.mxu0 %v1020
      %v1663 = vpop.f32.mrf.mxu0
      %v1664 = vadd.f32 0.0, %v1663
      %v1665 = vpop.f32.mrf.mxu0
      %1666 = vmatprep.mubr.f32.mxu0 0.0
      %1667 = vmatmul.mubr.f32.gmra.mxu0 %v1022
      %v1668 = vpop.f32.mrf.mxu0
      %v1669 = vadd.f32 0.0, %v1668
      %v1670 = vpop.f32.mrf.mxu0
      %1671 = vmatprep.mubr.f32.mxu0 0.0
      %1672 = vmatmul.mubr.f32.gmra.mxu0 %v1024
      %v1673 = vpop.f32.mrf.mxu0
      %v1674 = vadd.f32 0.0, %v1673
      %v1675 = vpop.f32.mrf.mxu0
      %1676 = vmatprep.mubr.f32.mxu0 0.0
      %1677 = vmatmul.mubr.f32.gmra.mxu0 %v1026
      %v1678 = vpop.f32.mrf.mxu0
      %v1679 = vadd.f32 0.0, %v1678
      %v1680 = vpop.f32.mrf.mxu0
      %1681 = vmatprep.mubr.f32.mxu0 0.0
      %1682 = vmatmul.mubr.f32.gmra.mxu0 %v1028
      %v1683 = vpop.f32.mrf.mxu0
      %v1684 = vadd.f32 0.0, %v1683
      %v1685 = vpop.f32.mrf.mxu0
      %1686 = vmatprep.mubr.f32.mxu0 0.0
      %1687 = vmatmul.mubr.f32.gmra.mxu0 %v1030
      %v1688 = vpop.f32.mrf.mxu0
      %v1689 = vadd.f32 0.0, %v1688
      %v1690 = vpop.f32.mrf.mxu0
      %1691 = vmatprep.mubr.f32.mxu0 0.0
      %1692 = vmatmul.mubr.f32.gmra.mxu0 %v1550
      %v1693 = vpop.f32.mrf.mxu0
      %v1694 = vadd.f32 0.0, %v1693
      %v1695 = vpop.f32.mrf.mxu0
      %1696 = vmatprep.mubr.f32.mxu0 0.0
      %1697 = vmatmul.mubr.f32.gmra.mxu0 %v1552
      %v1698 = vpop.f32.mrf.mxu0
      %v1699 = vadd.f32 0.0, %v1698
      %v1700 = vpop.f32.mrf.mxu0
      %1701 = vdwg.mxu0
      %v1702 = vadd.f32 %v1527, %v1624
      %v1703 = vadd.f32 %v1528, %v1629
      %v1704 = vadd.f32 %v1529, %v1634
      %v1705 = vadd.f32 %v1530, %v1639
      %v1706 = vadd.f32 %v1531, %v1644
      %v1707 = vadd.f32 %v1532, %v1649
      %v1708 = vadd.f32 %v1533, %v1654
      %v1709 = vadd.f32 %v1534, %v1659
      %v1710 = vadd.f32 %v1535, %v1664
      %v1711 = vadd.f32 %v1536, %v1669
      %v1712 = vadd.f32 %v1537, %v1674
      %v1713 = vadd.f32 %v1538, %v1679
      %v1714 = vadd.f32 %v1539, %v1684
      %v1715 = vadd.f32 %v1540, %v1689
      %v1716 = vadd.f32 %v1541, %v1694
      %v1717 = vadd.f32 %v1542, %v1699
      %s1718 = scalar_lea.vmem %s3, 24
      %v1719 = vld [vmem:[%s1718] sm:$0xf]
      %v1721 = vsel %vm595, %v524, 0
      %v1723 = vsel %vm595, %v494, 0
      %v1726 = vsel %vm628, %v1719, 0
      %1728 = vmatprep.subr.mxu0 0.0
      %1729 = vmatpush1.msra.mxu0 0.0
      %1730 = vmatprep.subr.mxu0 0.0
      %1731 = vmatpush1.msra.mxu0 0.0
      %1732 = vmatprep.subr.mxu0 0.0
      %1733 = vmatpush1.msra.mxu0 0.0
      %1734 = vmatprep.subr.mxu0 0.0
      %1735 = vmatpush1.msra.mxu0 0.0
      %1736 = vmatprep.subr.mxu0 0.0
      %1737 = vmatpush1.msra.mxu0 0.0
      %1738 = vmatprep.subr.mxu0 0.0
      %1739 = vmatpush1.msra.mxu0 0.0
      %1740 = vmatprep.subr.mxu0 0.0
      %1741 = vmatpush1.msra.mxu0 0.0
      %1742 = vmatprep.subr.mxu0 0.0
      %1743 = vmatpush1.msra.mxu0 0.0
      %1744 = vmatprep.subr.mxu0 0.0
      %1745 = vmatpush1.msra.mxu0 0.0
      %1746 = vmatprep.subr.mxu0 0.0
      %1747 = vmatpush1.msra.mxu0 0.0
      %1748 = vmatprep.subr.mxu0 0.0
      %1749 = vmatpush1.msra.mxu0 0.0
      %1750 = vmatprep.subr.mxu0 0.0
      %1751 = vmatpush1.msra.mxu0 0.0
      %1752 = vmatprep.subr.mxu0 0.0
      %1753 = vmatpush1.msra.mxu0 0.0
      %1754 = vmatprep.subr.mxu0 0.0
      %1755 = vmatpush1.msra.mxu0 0.0
      %1756 = vmatprep.subr.mxu0 0.0
      %1757 = vmatpush1.msra.mxu0 0.0
      %1758 = vmatprep.subr.mxu0 0.0
      %1759 = vmatpush1.msra.mxu0 %v1726
      %1760 = vmatprep.subr.mxu0 0.0
      %1761 = vmatpush2.msra.mxu0 0.0
      %1762 = vmatprep.subr.mxu0 0.0
      %1763 = vmatpush2.msra.mxu0 0.0
      %1764 = vmatprep.subr.mxu0 0.0
      %1765 = vmatpush2.msra.mxu0 0.0
      %1766 = vmatprep.subr.mxu0 0.0
      %1767 = vmatpush2.msra.mxu0 0.0
      %1768 = vmatprep.subr.mxu0 0.0
      %1769 = vmatpush2.msra.mxu0 0.0
      %1770 = vmatprep.subr.mxu0 0.0
      %1771 = vmatpush2.msra.mxu0 0.0
      %1772 = vmatprep.subr.mxu0 0.0
      %1773 = vmatpush2.msra.mxu0 0.0
      %1774 = vmatprep.subr.mxu0 0.0
      %1775 = vmatpush2.msra.mxu0 0.0
      %1776 = vmatprep.subr.mxu0 0.0
      %1777 = vmatpush2.msra.mxu0 0.0
      %1778 = vmatprep.subr.mxu0 0.0
      %1779 = vmatpush2.msra.mxu0 0.0
      %1780 = vmatprep.subr.mxu0 0.0
      %1781 = vmatpush2.msra.mxu0 0.0
      %1782 = vmatprep.subr.mxu0 0.0
      %1783 = vmatpush2.msra.mxu0 0.0
      %1784 = vmatprep.subr.mxu0 0.0
      %1785 = vmatpush2.msra.mxu0 0.0
      %1786 = vmatprep.subr.mxu0 0.0
      %1787 = vmatpush2.msra.mxu0 0.0
      %1788 = vmatprep.subr.mxu0 0.0
      %1789 = vmatpush2.msra.mxu0 0.0
      %1790 = vmatprep.subr.mxu0 0.0
      %1791 = vmatpush2.msra.mxu0 0.0
      %1792 = vmatprep.mubr.f32.mxu0 0.0
      %1793 = vmatmul.mubr.f32.gmra.mxu0 %v785
      %v1794 = vpop.f32.mrf.mxu0
      %v1795 = vadd.f32 0.0, %v1794
      %v1796 = vpop.f32.mrf.mxu0
      %1797 = vmatprep.mubr.f32.mxu0 0.0
      %1798 = vmatmul.mubr.f32.gmra.mxu0 %v787
      %v1799 = vpop.f32.mrf.mxu0
      %v1800 = vadd.f32 0.0, %v1799
      %v1801 = vpop.f32.mrf.mxu0
      %1802 = vmatprep.mubr.f32.mxu0 0.0
      %1803 = vmatmul.mubr.f32.gmra.mxu0 %v789
      %v1804 = vpop.f32.mrf.mxu0
      %v1805 = vadd.f32 0.0, %v1804
      %v1806 = vpop.f32.mrf.mxu0
      %1807 = vmatprep.mubr.f32.mxu0 0.0
      %1808 = vmatmul.mubr.f32.gmra.mxu0 %v791
      %v1809 = vpop.f32.mrf.mxu0
      %v1810 = vadd.f32 0.0, %v1809
      %v1811 = vpop.f32.mrf.mxu0
      %1812 = vmatprep.mubr.f32.mxu0 0.0
      %1813 = vmatmul.mubr.f32.gmra.mxu0 %v793
      %v1814 = vpop.f32.mrf.mxu0
      %v1815 = vadd.f32 0.0, %v1814
      %v1816 = vpop.f32.mrf.mxu0
      %1817 = vmatprep.mubr.f32.mxu0 0.0
      %1818 = vmatmul.mubr.f32.gmra.mxu0 %v795
      %v1819 = vpop.f32.mrf.mxu0
      %v1820 = vadd.f32 0.0, %v1819
      %v1821 = vpop.f32.mrf.mxu0
      %1822 = vmatprep.mubr.f32.mxu0 0.0
      %1823 = vmatmul.mubr.f32.gmra.mxu0 %v797
      %v1824 = vpop.f32.mrf.mxu0
      %v1825 = vadd.f32 0.0, %v1824
      %v1826 = vpop.f32.mrf.mxu0
      %1827 = vmatprep.mubr.f32.mxu0 0.0
      %1828 = vmatmul.mubr.f32.gmra.mxu0 %v799
      %v1829 = vpop.f32.mrf.mxu0
      %v1830 = vadd.f32 0.0, %v1829
      %v1831 = vpop.f32.mrf.mxu0
      %1832 = vmatprep.mubr.f32.mxu0 0.0
      %1833 = vmatmul.mubr.f32.gmra.mxu0 %v801
      %v1834 = vpop.f32.mrf.mxu0
      %v1835 = vadd.f32 0.0, %v1834
      %v1836 = vpop.f32.mrf.mxu0
      %1837 = vmatprep.mubr.f32.mxu0 0.0
      %1838 = vmatmul.mubr.f32.gmra.mxu0 %v803
      %v1839 = vpop.f32.mrf.mxu0
      %v1840 = vadd.f32 0.0, %v1839
      %v1841 = vpop.f32.mrf.mxu0
      %1842 = vmatprep.mubr.f32.mxu0 0.0
      %1843 = vmatmul.mubr.f32.gmra.mxu0 %v805
      %v1844 = vpop.f32.mrf.mxu0
      %v1845 = vadd.f32 0.0, %v1844
      %v1846 = vpop.f32.mrf.mxu0
      %1847 = vmatprep.mubr.f32.mxu0 0.0
      %1848 = vmatmul.mubr.f32.gmra.mxu0 %v807
      %v1849 = vpop.f32.mrf.mxu0
      %v1850 = vadd.f32 0.0, %v1849
      %v1851 = vpop.f32.mrf.mxu0
      %1852 = vmatprep.mubr.f32.mxu0 0.0
      %1853 = vmatmul.mubr.f32.gmra.mxu0 %v1199
      %v1854 = vpop.f32.mrf.mxu0
      %v1855 = vadd.f32 0.0, %v1854
      %v1856 = vpop.f32.mrf.mxu0
      %1857 = vmatprep.mubr.f32.mxu0 0.0
      %1858 = vmatmul.mubr.f32.gmra.mxu0 %v1201
      %v1859 = vpop.f32.mrf.mxu0
      %v1860 = vadd.f32 0.0, %v1859
      %v1861 = vpop.f32.mrf.mxu0
      %1862 = vmatprep.mubr.f32.mxu0 0.0
      %1863 = vmatmul.mubr.f32.gmra.mxu0 %v1721
      %v1864 = vpop.f32.mrf.mxu0
      %v1865 = vadd.f32 0.0, %v1864
      %v1866 = vpop.f32.mrf.mxu0
      %1867 = vmatprep.mubr.f32.mxu0 0.0
      %1868 = vmatmul.mubr.f32.gmra.mxu0 %v1723
      %v1869 = vpop.f32.mrf.mxu0
      %v1870 = vadd.f32 0.0, %v1869
      %v1871 = vpop.f32.mrf.mxu0
      %1872 = vdwg.mxu0
      %v1873 = vadd.f32 %v1702, %v1795
      %v1874 = vadd.f32 %v1703, %v1800
      %v1875 = vadd.f32 %v1704, %v1805
      %v1876 = vadd.f32 %v1705, %v1810
      %v1877 = vadd.f32 %v1706, %v1815
      %v1878 = vadd.f32 %v1707, %v1820
      %v1879 = vadd.f32 %v1708, %v1825
      %v1880 = vadd.f32 %v1709, %v1830
      %v1881 = vadd.f32 %v1710, %v1835
      %v1882 = vadd.f32 %v1711, %v1840
      %v1883 = vadd.f32 %v1712, %v1845
      %v1884 = vadd.f32 %v1713, %v1850
      %v1885 = vadd.f32 %v1714, %v1855
      %v1886 = vadd.f32 %v1715, %v1860
      %v1887 = vadd.f32 %v1716, %v1865
      %v1888 = vadd.f32 %v1717, %v1870
      %v1890 = vrot.slane %v524, 1
      %v1891 = vrot.slane %v494, 1
      %v1892 = vsel %vm552, %v1890, %v1891
      %v1893 = vrot.slane %v534, 1
      %v1894 = vsel %vm552, %v1891, %v1893
      %s1895 = scalar_lea.vmem %s3, 28
      %v1896 = vld [vmem:[%s1895] sm:$0xf]
      %v1897 = vsel %vm595, %v1892, 0
      %v1899 = vsel %vm595, %v1894, 0
      %v1902 = vsel %vm628, %v1896, 0
      %1904 = vmatprep.subr.mxu0 0.0
      %1905 = vmatpush1.msra.mxu0 0.0
      %1906 = vmatprep.subr.mxu0 0.0
      %1907 = vmatpush1.msra.mxu0 0.0
      %1908 = vmatprep.subr.mxu0 0.0
      %1909 = vmatpush1.msra.mxu0 0.0
      %1910 = vmatprep.subr.mxu0 0.0
      %1911 = vmatpush1.msra.mxu0 0.0
      %1912 = vmatprep.subr.mxu0 0.0
      %1913 = vmatpush1.msra.mxu0 0.0
      %1914 = vmatprep.subr.mxu0 0.0
      %1915 = vmatpush1.msra.mxu0 0.0
      %1916 = vmatprep.subr.mxu0 0.0
      %1917 = vmatpush1.msra.mxu0 0.0
      %1918 = vmatprep.subr.mxu0 0.0
      %1919 = vmatpush1.msra.mxu0 0.0
      %1920 = vmatprep.subr.mxu0 0.0
      %1921 = vmatpush1.msra.mxu0 0.0
      %1922 = vmatprep.subr.mxu0 0.0
      %1923 = vmatpush1.msra.mxu0 0.0
      %1924 = vmatprep.subr.mxu0 0.0
      %1925 = vmatpush1.msra.mxu0 0.0
      %1926 = vmatprep.subr.mxu0 0.0
      %1927 = vmatpush1.msra.mxu0 0.0
      %1928 = vmatprep.subr.mxu0 0.0
      %1929 = vmatpush1.msra.mxu0 0.0
      %1930 = vmatprep.subr.mxu0 0.0
      %1931 = vmatpush1.msra.mxu0 0.0
      %1932 = vmatprep.subr.mxu0 0.0
      %1933 = vmatpush1.msra.mxu0 0.0
      %1934 = vmatprep.subr.mxu0 0.0
      %1935 = vmatpush1.msra.mxu0 %v1902
      %1936 = vmatprep.subr.mxu0 0.0
      %1937 = vmatpush2.msra.mxu0 0.0
      %1938 = vmatprep.subr.mxu0 0.0
      %1939 = vmatpush2.msra.mxu0 0.0
      %1940 = vmatprep.subr.mxu0 0.0
      %1941 = vmatpush2.msra.mxu0 0.0
      %1942 = vmatprep.subr.mxu0 0.0
      %1943 = vmatpush2.msra.mxu0 0.0
      %1944 = vmatprep.subr.mxu0 0.0
      %1945 = vmatpush2.msra.mxu0 0.0
      %1946 = vmatprep.subr.mxu0 0.0
      %1947 = vmatpush2.msra.mxu0 0.0
      %1948 = vmatprep.subr.mxu0 0.0
      %1949 = vmatpush2.msra.mxu0 0.0
      %1950 = vmatprep.subr.mxu0 0.0
      %1951 = vmatpush2.msra.mxu0 0.0
      %1952 = vmatprep.subr.mxu0 0.0
      %1953 = vmatpush2.msra.mxu0 0.0
      %1954 = vmatprep.subr.mxu0 0.0
      %1955 = vmatpush2.msra.mxu0 0.0
      %1956 = vmatprep.subr.mxu0 0.0
      %1957 = vmatpush2.msra.mxu0 0.0
      %1958 = vmatprep.subr.mxu0 0.0
      %1959 = vmatpush2.msra.mxu0 0.0
      %1960 = vmatprep.subr.mxu0 0.0
      %1961 = vmatpush2.msra.mxu0 0.0
      %1962 = vmatprep.subr.mxu0 0.0
      %1963 = vmatpush2.msra.mxu0 0.0
      %1964 = vmatprep.subr.mxu0 0.0
      %1965 = vmatpush2.msra.mxu0 0.0
      %1966 = vmatprep.subr.mxu0 0.0
      %1967 = vmatpush2.msra.mxu0 0.0
      %1968 = vmatprep.mubr.f32.mxu0 0.0
      %1969 = vmatmul.mubr.f32.gmra.mxu0 %v604
      %v1970 = vpop.f32.mrf.mxu0
      %v1971 = vadd.f32 0.0, %v1970
      %v1972 = vpop.f32.mrf.mxu0
      %1973 = vmatprep.mubr.f32.mxu0 0.0
      %1974 = vmatmul.mubr.f32.gmra.mxu0 %v606
      %v1975 = vpop.f32.mrf.mxu0
      %v1976 = vadd.f32 0.0, %v1975
      %v1977 = vpop.f32.mrf.mxu0
      %1978 = vmatprep.mubr.f32.mxu0 0.0
      %1979 = vmatmul.mubr.f32.gmra.mxu0 %v608
      %v1980 = vpop.f32.mrf.mxu0
      %v1981 = vadd.f32 0.0, %v1980
      %v1982 = vpop.f32.mrf.mxu0
      %1983 = vmatprep.mubr.f32.mxu0 0.0
      %1984 = vmatmul.mubr.f32.gmra.mxu0 %v610
      %v1985 = vpop.f32.mrf.mxu0
      %v1986 = vadd.f32 0.0, %v1985
      %v1987 = vpop.f32.mrf.mxu0
      %1988 = vmatprep.mubr.f32.mxu0 0.0
      %1989 = vmatmul.mubr.f32.gmra.mxu0 %v612
      %v1990 = vpop.f32.mrf.mxu0
      %v1991 = vadd.f32 0.0, %v1990
      %v1992 = vpop.f32.mrf.mxu0
      %1993 = vmatprep.mubr.f32.mxu0 0.0
      %1994 = vmatmul.mubr.f32.gmra.mxu0 %v614
      %v1995 = vpop.f32.mrf.mxu0
      %v1996 = vadd.f32 0.0, %v1995
      %v1997 = vpop.f32.mrf.mxu0
      %1998 = vmatprep.mubr.f32.mxu0 0.0
      %1999 = vmatmul.mubr.f32.gmra.mxu0 %v616
      %v2000 = vpop.f32.mrf.mxu0
      %v2001 = vadd.f32 0.0, %v2000
      %v2002 = vpop.f32.mrf.mxu0
      %2003 = vmatprep.mubr.f32.mxu0 0.0
      %2004 = vmatmul.mubr.f32.gmra.mxu0 %v618
      %v2005 = vpop.f32.mrf.mxu0
      %v2006 = vadd.f32 0.0, %v2005
      %v2007 = vpop.f32.mrf.mxu0
      %2008 = vmatprep.mubr.f32.mxu0 0.0
      %2009 = vmatmul.mubr.f32.gmra.mxu0 %v620
      %v2010 = vpop.f32.mrf.mxu0
      %v2011 = vadd.f32 0.0, %v2010
      %v2012 = vpop.f32.mrf.mxu0
      %2013 = vmatprep.mubr.f32.mxu0 0.0
      %2014 = vmatmul.mubr.f32.gmra.mxu0 %v622
      %v2015 = vpop.f32.mrf.mxu0
      %v2016 = vadd.f32 0.0, %v2015
      %v2017 = vpop.f32.mrf.mxu0
      %2018 = vmatprep.mubr.f32.mxu0 0.0
      %2019 = vmatmul.mubr.f32.gmra.mxu0 %v624
      %v2020 = vpop.f32.mrf.mxu0
      %v2021 = vadd.f32 0.0, %v2020
      %v2022 = vpop.f32.mrf.mxu0
      %2023 = vmatprep.mubr.f32.mxu0 0.0
      %2024 = vmatmul.mubr.f32.gmra.mxu0 %v626
      %v2025 = vpop.f32.mrf.mxu0
      %v2026 = vadd.f32 0.0, %v2025
      %v2027 = vpop.f32.mrf.mxu0
      %2028 = vmatprep.mubr.f32.mxu0 0.0
      %2029 = vmatmul.mubr.f32.gmra.mxu0 %v1375
      %v2030 = vpop.f32.mrf.mxu0
      %v2031 = vadd.f32 0.0, %v2030
      %v2032 = vpop.f32.mrf.mxu0
      %2033 = vmatprep.mubr.f32.mxu0 0.0
      %2034 = vmatmul.mubr.f32.gmra.mxu0 %v1377
      %v2035 = vpop.f32.mrf.mxu0
      %v2036 = vadd.f32 0.0, %v2035
      %v2037 = vpop.f32.mrf.mxu0
      %2038 = vmatprep.mubr.f32.mxu0 0.0
      %2039 = vmatmul.mubr.f32.gmra.mxu0 %v1897
      %v2040 = vpop.f32.mrf.mxu0
      %v2041 = vadd.f32 0.0, %v2040
      %v2042 = vpop.f32.mrf.mxu0
      %2043 = vmatprep.mubr.f32.mxu0 0.0
      %2044 = vmatmul.mubr.f32.gmra.mxu0 %v1899
      %v2045 = vpop.f32.mrf.mxu0
      %v2046 = vadd.f32 0.0, %v2045
      %v2047 = vpop.f32.mrf.mxu0
      %2048 = vdwg.mxu0
      %v2049 = vadd.f32 %v1873, %v1971
      %v2050 = vadd.f32 %v1874, %v1976
      %v2051 = vadd.f32 %v1875, %v1981
      %v2052 = vadd.f32 %v1876, %v1986
      %v2053 = vadd.f32 %v1877, %v1991
      %v2054 = vadd.f32 %v1878, %v1996
      %v2055 = vadd.f32 %v1879, %v2001
      %v2056 = vadd.f32 %v1880, %v2006
      %v2057 = vadd.f32 %v1881, %v2011
      %v2058 = vadd.f32 %v1882, %v2016
      %v2059 = vadd.f32 %v1883, %v2021
      %v2060 = vadd.f32 %v1884, %v2026
      %v2061 = vadd.f32 %v1885, %v2031
      %v2062 = vadd.f32 %v1886, %v2036
      %v2063 = vadd.f32 %v1887, %v2041
      %v2064 = vadd.f32 %v1888, %v2046
      %v2065 = vrot.slane %v524, 2
      %v2066 = vrot.slane %v494, 2
      %v2067 = vsel %vm957, %v2065, %v2066
      %v2068 = vrot.slane %v534, 2
      %v2069 = vsel %vm957, %v2066, %v2068
      %s2070 = scalar_lea.vmem %s3, 32
      %v2071 = vld [vmem:[%s2070] sm:$0xf]
      %v2072 = vsel %vm595, %v2067, 0
      %v2074 = vsel %vm595, %v2069, 0
      %v2077 = vsel %vm628, %v2071, 0
      %2079 = vmatprep.subr.mxu0 0.0
      %2080 = vmatpush1.msra.mxu0 0.0
      %2081 = vmatprep.subr.mxu0 0.0
      %2082 = vmatpush1.msra.mxu0 0.0
      %2083 = vmatprep.subr.mxu0 0.0
      %2084 = vmatpush1.msra.mxu0 0.0
      %2085 = vmatprep.subr.mxu0 0.0
      %2086 = vmatpush1.msra.mxu0 0.0
      %2087 = vmatprep.subr.mxu0 0.0
      %2088 = vmatpush1.msra.mxu0 0.0
      %2089 = vmatprep.subr.mxu0 0.0
      %2090 = vmatpush1.msra.mxu0 0.0
      %2091 = vmatprep.subr.mxu0 0.0
      %2092 = vmatpush1.msra.mxu0 0.0
      %2093 = vmatprep.subr.mxu0 0.0
      %2094 = vmatpush1.msra.mxu0 0.0
      %2095 = vmatprep.subr.mxu0 0.0
      %2096 = vmatpush1.msra.mxu0 0.0
      %2097 = vmatprep.subr.mxu0 0.0
      %2098 = vmatpush1.msra.mxu0 0.0
      %2099 = vmatprep.subr.mxu0 0.0
      %2100 = vmatpush1.msra.mxu0 0.0
      %2101 = vmatprep.subr.mxu0 0.0
      %2102 = vmatpush1.msra.mxu0 0.0
      %2103 = vmatprep.subr.mxu0 0.0
      %2104 = vmatpush1.msra.mxu0 0.0
      %2105 = vmatprep.subr.mxu0 0.0
      %2106 = vmatpush1.msra.mxu0 0.0
      %2107 = vmatprep.subr.mxu0 0.0
      %2108 = vmatpush1.msra.mxu0 0.0
      %2109 = vmatprep.subr.mxu0 0.0
      %2110 = vmatpush1.msra.mxu0 %v2077
      %2111 = vmatprep.subr.mxu0 0.0
      %2112 = vmatpush2.msra.mxu0 0.0
      %2113 = vmatprep.subr.mxu0 0.0
      %2114 = vmatpush2.msra.mxu0 0.0
      %2115 = vmatprep.subr.mxu0 0.0
      %2116 = vmatpush2.msra.mxu0 0.0
      %2117 = vmatprep.subr.mxu0 0.0
      %2118 = vmatpush2.msra.mxu0 0.0
      %2119 = vmatprep.subr.mxu0 0.0
      %2120 = vmatpush2.msra.mxu0 0.0
      %2121 = vmatprep.subr.mxu0 0.0
      %2122 = vmatpush2.msra.mxu0 0.0
      %2123 = vmatprep.subr.mxu0 0.0
      %2124 = vmatpush2.msra.mxu0 0.0
      %2125 = vmatprep.subr.mxu0 0.0
      %2126 = vmatpush2.msra.mxu0 0.0
      %2127 = vmatprep.subr.mxu0 0.0
      %2128 = vmatpush2.msra.mxu0 0.0
      %2129 = vmatprep.subr.mxu0 0.0
      %2130 = vmatpush2.msra.mxu0 0.0
      %2131 = vmatprep.subr.mxu0 0.0
      %2132 = vmatpush2.msra.mxu0 0.0
      %2133 = vmatprep.subr.mxu0 0.0
      %2134 = vmatpush2.msra.mxu0 0.0
      %2135 = vmatprep.subr.mxu0 0.0
      %2136 = vmatpush2.msra.mxu0 0.0
      %2137 = vmatprep.subr.mxu0 0.0
      %2138 = vmatpush2.msra.mxu0 0.0
      %2139 = vmatprep.subr.mxu0 0.0
      %2140 = vmatpush2.msra.mxu0 0.0
      %2141 = vmatprep.subr.mxu0 0.0
      %2142 = vmatpush2.msra.mxu0 0.0
      %2143 = vmatprep.mubr.f32.mxu0 0.0
      %2144 = vmatmul.mubr.f32.gmra.mxu0 %v1008
      %v2145 = vpop.f32.mrf.mxu0
      %v2146 = vadd.f32 0.0, %v2145
      %v2147 = vpop.f32.mrf.mxu0
      %2148 = vmatprep.mubr.f32.mxu0 0.0
      %2149 = vmatmul.mubr.f32.gmra.mxu0 %v1010
      %v2150 = vpop.f32.mrf.mxu0
      %v2151 = vadd.f32 0.0, %v2150
      %v2152 = vpop.f32.mrf.mxu0
      %2153 = vmatprep.mubr.f32.mxu0 0.0
      %2154 = vmatmul.mubr.f32.gmra.mxu0 %v1012
      %v2155 = vpop.f32.mrf.mxu0
      %v2156 = vadd.f32 0.0, %v2155
      %v2157 = vpop.f32.mrf.mxu0
      %2158 = vmatprep.mubr.f32.mxu0 0.0
      %2159 = vmatmul.mubr.f32.gmra.mxu0 %v1014
      %v2160 = vpop.f32.mrf.mxu0
      %v2161 = vadd.f32 0.0, %v2160
      %v2162 = vpop.f32.mrf.mxu0
      %2163 = vmatprep.mubr.f32.mxu0 0.0
      %2164 = vmatmul.mubr.f32.gmra.mxu0 %v1016
      %v2165 = vpop.f32.mrf.mxu0
      %v2166 = vadd.f32 0.0, %v2165
      %v2167 = vpop.f32.mrf.mxu0
      %2168 = vmatprep.mubr.f32.mxu0 0.0
      %2169 = vmatmul.mubr.f32.gmra.mxu0 %v1018
      %v2170 = vpop.f32.mrf.mxu0
      %v2171 = vadd.f32 0.0, %v2170
      %v2172 = vpop.f32.mrf.mxu0
      %2173 = vmatprep.mubr.f32.mxu0 0.0
      %2174 = vmatmul.mubr.f32.gmra.mxu0 %v1020
      %v2175 = vpop.f32.mrf.mxu0
      %v2176 = vadd.f32 0.0, %v2175
      %v2177 = vpop.f32.mrf.mxu0
      %2178 = vmatprep.mubr.f32.mxu0 0.0
      %2179 = vmatmul.mubr.f32.gmra.mxu0 %v1022
      %v2180 = vpop.f32.mrf.mxu0
      %v2181 = vadd.f32 0.0, %v2180
      %v2182 = vpop.f32.mrf.mxu0
      %2183 = vmatprep.mubr.f32.mxu0 0.0
      %2184 = vmatmul.mubr.f32.gmra.mxu0 %v1024
      %v2185 = vpop.f32.mrf.mxu0
      %v2186 = vadd.f32 0.0, %v2185
      %v2187 = vpop.f32.mrf.mxu0
      %2188 = vmatprep.mubr.f32.mxu0 0.0
      %2189 = vmatmul.mubr.f32.gmra.mxu0 %v1026
      %v2190 = vpop.f32.mrf.mxu0
      %v2191 = vadd.f32 0.0, %v2190
      %v2192 = vpop.f32.mrf.mxu0
      %2193 = vmatprep.mubr.f32.mxu0 0.0
      %2194 = vmatmul.mubr.f32.gmra.mxu0 %v1028
      %v2195 = vpop.f32.mrf.mxu0
      %v2196 = vadd.f32 0.0, %v2195
      %v2197 = vpop.f32.mrf.mxu0
      %2198 = vmatprep.mubr.f32.mxu0 0.0
      %2199 = vmatmul.mubr.f32.gmra.mxu0 %v1030
      %v2200 = vpop.f32.mrf.mxu0
      %v2201 = vadd.f32 0.0, %v2200
      %v2202 = vpop.f32.mrf.mxu0
      %2203 = vmatprep.mubr.f32.mxu0 0.0
      %2204 = vmatmul.mubr.f32.gmra.mxu0 %v1550
      %v2205 = vpop.f32.mrf.mxu0
      %v2206 = vadd.f32 0.0, %v2205
      %v2207 = vpop.f32.mrf.mxu0
      %2208 = vmatprep.mubr.f32.mxu0 0.0
      %2209 = vmatmul.mubr.f32.gmra.mxu0 %v1552
      %v2210 = vpop.f32.mrf.mxu0
      %v2211 = vadd.f32 0.0, %v2210
      %v2212 = vpop.f32.mrf.mxu0
      %2213 = vmatprep.mubr.f32.mxu0 0.0
      %2214 = vmatmul.mubr.f32.gmra.mxu0 %v2072
      %v2215 = vpop.f32.mrf.mxu0
      %v2216 = vadd.f32 0.0, %v2215
      %v2217 = vpop.f32.mrf.mxu0
      %2218 = vmatprep.mubr.f32.mxu0 0.0
      %2219 = vmatmul.mubr.f32.gmra.mxu0 %v2074
      %v2220 = vpop.f32.mrf.mxu0
      %v2221 = vadd.f32 0.0, %v2220
      %v2222 = vpop.f32.mrf.mxu0
      %2223 = vdwg.mxu0
      %v2224 = vadd.f32 %v2049, %v2146
      %v2225 = vadd.f32 %v2050, %v2151
      %v2226 = vadd.f32 %v2051, %v2156
      %v2227 = vadd.f32 %v2052, %v2161
      %v2228 = vadd.f32 %v2053, %v2166
      %v2229 = vadd.f32 %v2054, %v2171
      %v2230 = vadd.f32 %v2055, %v2176
      %v2231 = vadd.f32 %v2056, %v2181
      %v2232 = vadd.f32 %v2057, %v2186
      %v2233 = vadd.f32 %v2058, %v2191
      %v2234 = vadd.f32 %v2059, %v2196
      %v2235 = vadd.f32 %v2060, %v2201
      %v2236 = vadd.f32 %v2061, %v2206
      %v2237 = vadd.f32 %v2062, %v2211
      %v2238 = vadd.f32 %v2063, %v2216
      %v2239 = vadd.f32 %v2064, %v2221
      %2240 = vst [vmem:[%s400] sm:$0xff] %v2224
      %2241 = vst [vmem:[%s400 + $0x8] sm:$0xff] %v2225
      %2242 = vst [vmem:[%s400 + $0x10] sm:$0xff] %v2226
      %2243 = vst [vmem:[%s400 + $0x18] sm:$0xff] %v2227
      %2244 = vst [vmem:[%s400 + $0x20] sm:$0xff] %v2228
      %2245 = vst [vmem:[%s400 + $0x28] sm:$0xff] %v2229
      %2246 = vst [vmem:[%s400 + $0x30] sm:$0xff] %v2230
      %2247 = vst [vmem:[%s400 + $0x38] sm:$0xff] %v2231
      %2248 = vst [vmem:[%s400 + $0x40] sm:$0xff] %v2232
      %2249 = vst [vmem:[%s400 + $0x48] sm:$0xff] %v2233
      %2250 = vst [vmem:[%s400 + $0x50] sm:$0xff] %v2234
      %2251 = vst [vmem:[%s400 + $0x58] sm:$0xff] %v2235
      %2252 = vst [vmem:[%s400 + $0x60] sm:$0xff] %v2236
      %2253 = vst [vmem:[%s400 + $0x68] sm:$0xff] %v2237
      %2254 = vst [vmem:[%s400 + $0x70] sm:$0xff] %v2238
      %2255 = vst [vmem:[%s400 + $0x78] sm:$0xff] %v2239
      %v2256 = vadd.f32 %v2224, %v2225
      %v2257 = vadd.f32 %v2256, %v2226
      %v2258 = vadd.f32 %v2257, %v2227
      %v2259 = vadd.f32 %v2258, %v2228
      %v2260 = vadd.f32 %v2259, %v2229
      %v2261 = vadd.f32 %v2260, %v2230
      %v2262 = vadd.f32 %v2261, %v2231
      %v2263 = vadd.f32 %v2262, %v2232
      %v2264 = vadd.f32 %v2263, %v2233
      %v2265 = vadd.f32 %v2264, %v2234
      %v2266 = vadd.f32 %v2265, %v2235
      %v2267 = vadd.f32 %v2266, %v2236
      %v2268 = vadd.f32 %v2267, %v2237
      %v2269 = vadd.f32 %v2268, %v2238
      %v2270 = vadd.f32 %v2269, %v2239
      %v2271 = vrot.slane %v2270, 4
      %v2272 = vadd.f32 %v2270, %v2271
      %v2273 = vrot.slane %v2272, 2
      %v2274 = vadd.f32 %v2272, %v2273
      %v2275 = vrot.slane %v2274, 1
      %v2276 = vadd.f32 %v2274, %v2275
      %v2277 = vmul.f32 %v2224, %v2224
      %v2278 = vmul.f32 %v2225, %v2225
      %v2279 = vmul.f32 %v2226, %v2226
      %v2280 = vmul.f32 %v2227, %v2227
      %v2281 = vmul.f32 %v2228, %v2228
      %v2282 = vmul.f32 %v2229, %v2229
      %v2283 = vmul.f32 %v2230, %v2230
      %v2284 = vmul.f32 %v2231, %v2231
      %v2285 = vmul.f32 %v2232, %v2232
      %v2286 = vmul.f32 %v2233, %v2233
      %v2287 = vmul.f32 %v2234, %v2234
      %v2288 = vmul.f32 %v2235, %v2235
      %v2289 = vmul.f32 %v2236, %v2236
      %v2290 = vmul.f32 %v2237, %v2237
      %v2291 = vmul.f32 %v2238, %v2238
      %v2292 = vmul.f32 %v2239, %v2239
      %v2293 = vadd.f32 %v2277, %v2278
      %v2294 = vadd.f32 %v2293, %v2279
      %v2295 = vadd.f32 %v2294, %v2280
      %v2296 = vadd.f32 %v2295, %v2281
      %v2297 = vadd.f32 %v2296, %v2282
      %v2298 = vadd.f32 %v2297, %v2283
      %v2299 = vadd.f32 %v2298, %v2284
      %v2300 = vadd.f32 %v2299, %v2285
      %v2301 = vadd.f32 %v2300, %v2286
      %v2302 = vadd.f32 %v2301, %v2287
      %v2303 = vadd.f32 %v2302, %v2288
      %v2304 = vadd.f32 %v2303, %v2289
      %v2305 = vadd.f32 %v2304, %v2290
      %v2306 = vadd.f32 %v2305, %v2291
      %v2307 = vadd.f32 %v2306, %v2292
      %v2308 = vrot.slane %v2307, 4
      %v2309 = vadd.f32 %v2307, %v2308
      %v2310 = vrot.slane %v2309, 2
      %v2311 = vadd.f32 %v2309, %v2310
      %v2312 = vrot.slane %v2311, 1
      %v2313 = vadd.f32 %v2311, %v2312
      %v2314 = vsel %vm464, %v2276, %v2313
      %2315 = vst [vmem:[%s409] sm:$0x3] %v2314
      %s2316 = smul.u32 %s21, 2
      %s2317 = sadd.s32 %s2316, %s22
      %s2318 = smul.u32 16, %s2317
      %p2319 = scmp.lt.s32.totalorder %s2318, 63
      %s2320 = scalar_select %p2319, %s2318, 63
      %s2321 = smul.addr %s2320, 8
      %s2322 = scalar_lea.vmem %s4, %s2321
      %s2323 = smul.u32 %s21, 2
      %s2324 = sadd.s32 %s2323, %s22
      %p2325 = scmp.lt.s32.totalorder %s2324, 3
      %s2326 = scalar_select %p2325, %s2324, 3
      %s2327 = smul.addr %s2326, 2
      %s2328 = scalar_lea.vmem %s5, %s2327
      // Predicated region
      $region37: #{double_conv.3} parent=35 // pred_check
        %p2329 = pneg %p172
      $region38: #{double_conv.3} parent=35 // pred_check_branch
        %2331 = sbr.rel (%p2329) target = $region40
      $region39: #{double_conv.3} parent=35 // pred_region
        %s2332 = smul.u32 %s21, 2
        %s2333 = sadd.s32 %s2332, %s22
        %s2334 = smul.u32 16, %s2333
      $region40: #{double_conv.3} parent=35 // pred_fallthru
        _
      // Predicated region
      $region41: #{double_conv.3} parent=35 // pred_check
        %p2335 = pneg %p202
      $region42: #{double_conv.3} parent=35 // pred_check_branch
        %2337 = sbr.rel (%p2335) target = $region44
      $region43: #{double_conv.3} parent=35 // pred_region
        %s2338 = smul.u32 %s21, 2
        %s2339 = sadd.s32 %s2338, %s22
      $region44: #{double_conv.3} parent=35 // pred_fallthru
        _
    $region36: #{double_conv.3} parent=5 // pred_fallthru
      _
    %p2340 = scmp.le.s32.totalorder 2, %s12
    // Predicated region
    $region45: #{double_conv.3} parent=5 // pred_check
      %p2341 = pneg %p2340
    $region46: #{double_conv.3} parent=5 // pred_check_branch
      %2343 = sbr.rel (%p2341) target = $region48
    $region47: #{double_conv.3} parent=5 // pred_region
      %s2344 = ssub.s32 %s12, 2
      // Predicated region
      $region49: #{double_conv.3} parent=47 // pred_check
        %p2345 = pneg %p178
      $region50: #{double_conv.3} parent=47 // pred_check_branch
        %2347 = sbr.rel (%p2345) target = $region52
      $region51: #{double_conv.3} parent=47 // pred_region
        %s2348 = smul.u32 %s23, 2
        %s2349 = sadd.s32 %s2348, %s24
        %s2350 = smul.u32 16, %s2349
        %p2351 = scmp.lt.s32.totalorder %s2350, 63
        %s2352 = scalar_select %p2351, %s2350, 63
        %s2353 = smul.addr %s2352, 8
        %s2354 = scalar_lea.vmem %s4, %s2353
      $region52: #{double_conv.3} parent=47 // pred_fallthru
        _
      // Predicated region
      $region53: #{double_conv.3} parent=47 // pred_check
        %p2355 = pneg %p208
      $region54: #{double_conv.3} parent=47 // pred_check_branch
        %2357 = sbr.rel (%p2355) target = $region56
      $region55: #{double_conv.3} parent=47 // pred_region
        %s2358 = smul.u32 %s23, 2
        %s2359 = sadd.s32 %s2358, %s24
        %p2360 = scmp.lt.s32.totalorder %s2359, 3
        %s2361 = scalar_select %p2360, %s2359, 3
        %s2362 = smul.addr %s2361, 2
        %s2363 = scalar_lea.vmem %s5, %s2362
      $region56: #{double_conv.3} parent=47 // pred_fallthru
        _
    $region48: #{double_conv.3} parent=5 // pred_fallthru
      _
  $region6: #{double_conv.3} parent=0 // loop_footer
    %s16 = sadd.s32 1, %s12
  $region7: #{double_conv.3} parent=0 // loop_footer_branch
    %11 = sbr.rel target = $region3
  $region8: #{double_conv.3} parent=0 // loop_exit
    _

// kernel: double_conv.4
$region0: #{double_conv.4}
  #allocation0 [shape = 'u32[]', space=smem, size = 0x4, offset = 0x4, fixed_abs, tag = 'smem constant byte address 0x4 - core index']
  #allocation1 [shape = 'u32[144,128]{1,0:T(1,128)}', space=vmem, size = 0x12000, scoped, tag = 'internal scratch']
  %s0 = inlined_call_operand.vmem [shape: f32[2,16,16,128], index: 0, kind: input, shape index: {}, may-alias: {0,1,2}]
  %s1 = inlined_call_operand.vmem [shape: f32[2,16,16,128], index: 1, kind: input, shape index: {}, may-alias: {0,1,2}]
  %s2 = inlined_call_operand.vmem [shape: f32[2,16,16,128], index: 2, kind: input, shape index: {}, may-alias: {0,1,2}]
  %s3 = inlined_call_operand.vmem [shape: f32[1,128], index: 3, kind: input, shape index: {}]
  %s4 = inlined_call_operand.vmem [shape: f32[1,128], index: 4, kind: input, shape index: {}]
  %s5 = inlined_call_operand.vmem [shape: f32[9,128,128], index: 5, kind: input, shape index: {}]
  %s6 = inlined_call_operand.vmem [shape: f32[512,128], index: 6, kind: output, shape index: {0}]
  %s7 = inlined_call_operand.vmem [shape: f32[4,2,128], index: 7, kind: output, shape index: {1}]
  %8 = xla_tuple %s6, %s7
  %s9 = sld [smem:[#allocation0]]
  $region65: #{double_conv.4} parent=0
    _
  %s11 = ssub.s32 1, %s9
  %s12 = scalar_select 0, %s11, %s9
  loop: start=0, step=1, limit=6
  $region2: #{double_conv.4} parent=0 // loop_pre_header
    _
  $region3: #{double_conv.4} parent=0 // loop_header
    %s14 = sphi 0, %s18
    %p15 = scmp.ge.s32.totalorder %s14, 6
    %s21 = sphi 0, %s33
    %s22 = sphi 0, %s29
    %s23 = sphi 0, %s21
    %s24 = sphi 0, %s22
    %s25 = sphi 0, %s23
    %s26 = sphi 0, %s24
    %s38 = sphi 0, %s40
    %s41 = sphi 0, %s38
    %s42 = sphi 0, %s41
    %s58 = sphi 0, %s42
    %s74 = sphi 0, %s76
    %s77 = sphi 0, %s74
    %s78 = sphi 0, %s77
    %s94 = sphi 0, %s78
    %s110 = sphi 0, %s112
    %s113 = sphi 0, %s110
    %s114 = sphi 0, %s113
    %s130 = sphi 0, %s114
    %s134 = sphi 0, %s134
    %s136 = sphi 0, %s134
    %s137 = sphi 0, %s136
    %s151 = sphi 0, %s137
    %s155 = sphi 0, %s155
    %s157 = sphi 0, %s155
    %s158 = sphi 0, %s157
    %s172 = sphi 0, %s158
    %s176 = sphi 0, %s176
    %s178 = sphi 0, %s176
    %s179 = sphi 0, %s178
    %s193 = sphi 0, %s179
    %s203 = sphi 0, %s205
    %s206 = sphi 0, %s203
    %s207 = sphi 0, %s206
    %s223 = sphi 0, %s207
    %s233 = sphi 0, %s235
    %s236 = sphi 0, %s233
    %s237 = sphi 0, %s236
    %s253 = sphi 0, %s237
  $region4: #{double_conv.4} parent=0 // loop_header_branch
    %17 = sbr.rel (%p15) target = $region8
  $region5: #{double_conv.4} parent=0 // loop_body
    %s19 = ssub.s32 %s14, 1
    %s20 = ssub.s32 %s14, 2
    %s27 = sadd.s32 1, %s22
    %p28 = scmp.ge.s32.totalorder %s27, 2
    %s29 = scalar_select %p28, 0, %s27
    %s30 = sadd.s32 1, %s21
    %s31 = scalar_select %p28, %s30, %s21
    %p32 = scmp.ge.s32.totalorder %s31, 2
    %s33 = scalar_select %p32, 0, %s31
    %s34 = ssub.s32 %s21, %s33
    %s35 = ssub.s32 %s22, %s29
    %s36 = sor.u32 %s34, %s35
    %p37 = scmp.eq.s32.totalorder %s36, 0
    %s39 = sadd.s32 %s38, 1
    %s40 = scalar_select %p37, %s38, %s39
    %p43 = pneg %p37
    %p44 = scmp.eq.s32.totalorder %s14, 3
    %p45 = por %p43, %p44
    %p46 = scmp.ne.s32.totalorder %s38, %s41
    %p47 = scmp.eq.s32.totalorder %s14, 0
    %p48 = por %p46, %p47
    %p49 = scmp.ne.s32.totalorder %s38, %s41
    %p50 = scmp.eq.s32.totalorder %s19, 3
    %p51 = por %p49, %p50
    %p52 = scmp.ne.s32.totalorder %s41, %s42
    %p53 = scmp.eq.s32.totalorder %s19, 0
    %p54 = por %p52, %p53
    %p55 = scmp.ne.s32.totalorder %s41, %s42
    %p56 = scmp.eq.s32.totalorder %s20, 3
    %p57 = por %p55, %p56
    %p59 = scmp.ne.s32.totalorder %s42, %s58
    %p60 = scmp.eq.s32.totalorder %s20, 0
    %p61 = por %p59, %p60
    %s62 = smul.u32 %s22, 8
    %s63 = ssub.s32 %s62, 1
    %p64 = scmp.gt.s32.totalorder %s63, 0
    %s65 = scalar_select %p64, %s63, 0
    %s66 = smul.u32 %s29, 8
    %s67 = ssub.s32 %s66, 1
    %p68 = scmp.gt.s32.totalorder %s67, 0
    %s69 = scalar_select %p68, %s67, 0
    %s70 = ssub.s32 %s21, %s33
    %s71 = ssub.s32 %s65, %s69
    %s72 = sor.u32 %s70, %s71
    %p73 = scmp.eq.s32.totalorder %s72, 0
    %s75 = sadd.s32 %s74, 1
    %s76 = scalar_select %p73, %s74, %s75
    %p79 = pneg %p73
    %p80 = scmp.eq.s32.totalorder %s14, 3
    %p81 = por %p79, %p80
    %p82 = scmp.ne.s32.totalorder %s74, %s77
    %p83 = scmp.eq.s32.totalorder %s14, 0
    %p84 = por %p82, %p83
    %p85 = scmp.ne.s32.totalorder %s74, %s77
    %p86 = scmp.eq.s32.totalorder %s19, 3
    %p87 = por %p85, %p86
    %p88 = scmp.ne.s32.totalorder %s77, %s78
    %p89 = scmp.eq.s32.totalorder %s19, 0
    %p90 = por %p88, %p89
    %p91 = scmp.ne.s32.totalorder %s77, %s78
    %p92 = scmp.eq.s32.totalorder %s20, 3
    %p93 = por %p91, %p92
    %p95 = scmp.ne.s32.totalorder %s78, %s94
    %p96 = scmp.eq.s32.totalorder %s20, 0
    %p97 = por %p95, %p96
    %s98 = smul.u32 %s22, 8
    %s99 = sadd.s32 %s98, 8
    %p100 = scmp.lt.s32.totalorder %s99, 15
    %s101 = scalar_select %p100, %s99, 15
    %s102 = smul.u32 %s29, 8
    %s103 = sadd.s32 %s102, 8
    %p104 = scmp.lt.s32.totalorder %s103, 15
    %s105 = scalar_select %p104, %s103, 15
    %s106 = ssub.s32 %s21, %s33
    %s107 = ssub.s32 %s101, %s105
    %s108 = sor.u32 %s106, %s107
    %p109 = scmp.eq.s32.totalorder %s108, 0
    %s111 = sadd.s32 %s110, 1
    %s112 = scalar_select %p109, %s110, %s111
    %p115 = pneg %p109
    %p116 = scmp.eq.s32.totalorder %s14, 3
    %p117 = por %p115, %p116
    %p118 = scmp.ne.s32.totalorder %s110, %s113
    %p119 = scmp.eq.s32.totalorder %s14, 0
    %p120 = por %p118, %p119
    %p121 = scmp.ne.s32.totalorder %s110, %s113
    %p122 = scmp.eq.s32.totalorder %s19, 3
    %p123 = por %p121, %p122
    %p124 = scmp.ne.s32.totalorder %s113, %s114
    %p125 = scmp.eq.s32.totalorder %s19, 0
    %p126 = por %p124, %p125
    %p127 = scmp.ne.s32.totalorder %s113, %s114
    %p128 = scmp.eq.s32.totalorder %s20, 3
    %p129 = por %p127, %p128
    %p131 = scmp.ne.s32.totalorder %s114, %s130
    %p132 = scmp.eq.s32.totalorder %s20, 0
    %p133 = por %p131, %p132
    %s135 = sadd.s32 %s134, 1
    %p138 = scmp.eq.s32.totalorder %s14, 3
    %p139 = scmp.ne.s32.totalorder %s134, %s136
    %p140 = scmp.eq.s32.totalorder %s14, 0
    %p141 = por %p139, %p140
    %p142 = scmp.ne.s32.totalorder %s134, %s136
    %p143 = scmp.eq.s32.totalorder %s19, 3
    %p144 = por %p142, %p143
    %p145 = scmp.ne.s32.totalorder %s136, %s137
    %p146 = scmp.eq.s32.totalorder %s19, 0
    %p147 = por %p145, %p146
    %p148 = scmp.ne.s32.totalorder %s136, %s137
    %p149 = scmp.eq.s32.totalorder %s20, 3
    %p150 = por %p148, %p149
    %p152 = scmp.ne.s32.totalorder %s137, %s151
    %p153 = scmp.eq.s32.totalorder %s20, 0
    %p154 = por %p152, %p153
    %s156 = sadd.s32 %s155, 1
    %p159 = scmp.eq.s32.totalorder %s14, 3
    %p160 = scmp.ne.s32.totalorder %s155, %s157
    %p161 = scmp.eq.s32.totalorder %s14, 0
    %p162 = por %p160, %p161
    %p163 = scmp.ne.s32.totalorder %s155, %s157
    %p164 = scmp.eq.s32.totalorder %s19, 3
    %p165 = por %p163, %p164
    %p166 = scmp.ne.s32.totalorder %s157, %s158
    %p167 = scmp.eq.s32.totalorder %s19, 0
    %p168 = por %p166, %p167
    %p169 = scmp.ne.s32.totalorder %s157, %s158
    %p170 = scmp.eq.s32.totalorder %s20, 3
    %p171 = por %p169, %p170
    %p173 = scmp.ne.s32.totalorder %s158, %s172
    %p174 = scmp.eq.s32.totalorder %s20, 0
    %p175 = por %p173, %p174
    %s177 = sadd.s32 %s176, 1
    %p180 = scmp.eq.s32.totalorder %s14, 3
    %p181 = scmp.ne.s32.totalorder %s176, %s178
    %p182 = scmp.eq.s32.totalorder %s14, 0
    %p183 = por %p181, %p182
    %p184 = scmp.ne.s32.totalorder %s176, %s178
    %p185 = scmp.eq.s32.totalorder %s19, 3
    %p186 = por %p184, %p185
    %p187 = scmp.ne.s32.totalorder %s178, %s179
    %p188 = scmp.eq.s32.totalorder %s19, 0
    %p189 = por %p187, %p188
    %p190 = scmp.ne.s32.totalorder %s178, %s179
    %p191 = scmp.eq.s32.totalorder %s20, 3
    %p192 = por %p190, %p191
    %p194 = scmp.ne.s32.totalorder %s179, %s193
    %p195 = scmp.eq.s32.totalorder %s20, 0
    %p196 = por %p194, %p195
    %s197 = smul.u32 %s21, 2
    %s198 = sadd.s32 %s197, %s22
    %s199 = smul.u32 %s33, 2
    %s200 = sadd.s32 %s199, %s29
    %s201 = ssub.s32 %s198, %s200
    %p202 = scmp.eq.s32.totalorder %s201, 0
    %s204 = sadd.s32 %s203, 1
    %s205 = scalar_select %p202, %s203, %s204
    %p208 = pneg %p202
    %p209 = scmp.eq.s32.totalorder %s14, 3
    %p210 = por %p208, %p209
    %p211 = scmp.ne.s32.totalorder %s203, %s206
    %p212 = scmp.eq.s32.totalorder %s14, 0
    %p213 = por %p211, %p212
    %p214 = scmp.ne.s32.totalorder %s203, %s206
    %p215 = scmp.eq.s32.totalorder %s19, 3
    %p216 = por %p214, %p215
    %p217 = scmp.ne.s32.totalorder %s206, %s207
    %p218 = scmp.eq.s32.totalorder %s19, 0
    %p219 = por %p217, %p218
    %p220 = scmp.ne.s32.totalorder %s206, %s207
    %p221 = scmp.eq.s32.totalorder %s20, 3
    %p222 = por %p220, %p221
    %p224 = scmp.ne.s32.totalorder %s207, %s223
    %p225 = scmp.eq.s32.totalorder %s20, 0
    %p226 = por %p224, %p225
    %s227 = smul.u32 %s21, 2
    %s228 = sadd.s32 %s227, %s22
    %s229 = smul.u32 %s33, 2
    %s230 = sadd.s32 %s229, %s29
    %s231 = ssub.s32 %s228, %s230
    %p232 = scmp.eq.s32.totalorder %s231, 0
    %s234 = sadd.s32 %s233, 1
    %s235 = scalar_select %p232, %s233, %s234
    %p238 = pneg %p232
    %p239 = scmp.eq.s32.totalorder %s14, 3
    %p240 = por %p238, %p239
    %p241 = scmp.ne.s32.totalorder %s233, %s236
    %p242 = scmp.eq.s32.totalorder %s14, 0
    %p243 = por %p241, %p242
    %p244 = scmp.ne.s32.totalorder %s233, %s236
    %p245 = scmp.eq.s32.totalorder %s19, 3
    %p246 = por %p244, %p245
    %p247 = scmp.ne.s32.totalorder %s236, %s237
    %p248 = scmp.eq.s32.totalorder %s19, 0
    %p249 = por %p247, %p248
    %p250 = scmp.ne.s32.totalorder %s236, %s237
    %p251 = scmp.eq.s32.totalorder %s20, 3
    %p252 = por %p250, %p251
    %p254 = scmp.ne.s32.totalorder %s237, %s253
    %p255 = scmp.eq.s32.totalorder %s20, 0
    %p256 = por %p254, %p255
    %p257 = scmp.le.s32.totalorder 1, %s14
    %p258 = scmp.lt.s32.totalorder %s14, 5
    %p259 = pnand %p257, %p258
    %p260 = pneg %p259
    // Predicated region
    $region9: #{double_conv.4} parent=5 // pred_check
      _
    $region10: #{double_conv.4} parent=5 // pred_check_branch
      %262 = sbr.rel (%p259) target = $region12
    $region11: #{double_conv.4} parent=5 // pred_region
      %s263 = ssub.s32 %s14, 1
      // Predicated region
      $region13: #{double_conv.4} parent=11 // pred_check
        %p264 = pneg %p147
      $region14: #{double_conv.4} parent=11 // pred_check_branch
        %266 = sbr.rel (%p264) target = $region16
      $region15: #{double_conv.4} parent=11 // pred_region
        _
      $region16: #{double_conv.4} parent=11 // pred_fallthru
        _
      // Predicated region
      $region17: #{double_conv.4} parent=11 // pred_check
        %p267 = pneg %p168
      $region18: #{double_conv.4} parent=11 // pred_check_branch
        %269 = sbr.rel (%p267) target = $region20
      $region19: #{double_conv.4} parent=11 // pred_region
        _
      $region20: #{double_conv.4} parent=11 // pred_fallthru
        _
      // Predicated region
      $region21: #{double_conv.4} parent=11 // pred_check
        %p270 = pneg %p189
      $region22: #{double_conv.4} parent=11 // pred_check_branch
        %272 = sbr.rel (%p270) target = $region24
      $region23: #{double_conv.4} parent=11 // pred_region
        _
      $region24: #{double_conv.4} parent=11 // pred_fallthru
        _
    $region12: #{double_conv.4} parent=5 // pred_fallthru
      _
    %p273 = scmp.lt.s32.totalorder %s14, 4
    // Predicated region
    $region25: #{double_conv.4} parent=5 // pred_check
      %p274 = pneg %p273
    $region26: #{double_conv.4} parent=5 // pred_check_branch
      %276 = sbr.rel (%p274) target = $region28
    $region27: #{double_conv.4} parent=5 // pred_region
      // Predicated region
      $region29: #{double_conv.4} parent=27 // pred_check
        %p277 = pneg %p48
      $region30: #{double_conv.4} parent=27 // pred_check_branch
        %279 = sbr.rel (%p277) target = $region32
      $region31: #{double_conv.4} parent=27 // pred_region
        %s280 = smul.u32 8, %s22
        %p281 = scmp.lt.s32.totalorder %s21, 1
        %s282 = scalar_select %p281, %s21, 1
        %p283 = scmp.lt.s32.totalorder %s280, 15
        %s284 = scalar_select %p283, %s280, 15
        %s285 = smul.addr %s284, 2
        %s286 = smul.addr %s282, 32
        %s287 = sadd.s32 %s285, %s286
        %s288 = smul.addr %s287, 8
        %s289 = scalar_lea.vmem %s0, %s288
        %s290 = smul.u32 8, %s22
      $region32: #{double_conv.4} parent=27 // pred_fallthru
        _
      // Predicated region
      $region33: #{double_conv.4} parent=27 // pred_check
        %p291 = pneg %p84
      $region34: #{double_conv.4} parent=27 // pred_check_branch
        %293 = sbr.rel (%p291) target = $region36
      $region35: #{double_conv.4} parent=27 // pred_region
        %s294 = smul.u32 %s22, 8
        %s295 = ssub.s32 %s294, 1
        %p296 = scmp.gt.s32.totalorder %s295, 0
        %s297 = scalar_select %p296, %s295, 0
        %p298 = scmp.lt.s32.totalorder %s21, 1
        %s299 = scalar_select %p298, %s21, 1
        %p300 = scmp.lt.s32.totalorder %s297, 15
        %s301 = scalar_select %p300, %s297, 15
        %s302 = smul.addr %s301, 2
        %s303 = smul.addr %s299, 32
        %s304 = sadd.s32 %s302, %s303
        %s305 = smul.addr %s304, 8
        %s306 = scalar_lea.vmem %s1, %s305
        %s307 = smul.u32 %s22, 8
        %s308 = ssub.s32 %s307, 1
        %p309 = scmp.gt.s32.totalorder %s308, 0
        %s310 = scalar_select %p309, %s308, 0
      $region36: #{double_conv.4} parent=27 // pred_fallthru
        _
      // Predicated region
      $region37: #{double_conv.4} parent=27 // pred_check
        %p311 = pneg %p120
      $region38: #{double_conv.4} parent=27 // pred_check_branch
        %313 = sbr.rel (%p311) target = $region40
      $region39: #{double_conv.4} parent=27 // pred_region
        %s314 = smul.u32 %s22, 8
        %s315 = sadd.s32 %s314, 8
        %p316 = scmp.lt.s32.totalorder %s315, 15
        %s317 = scalar_select %p316, %s315, 15
        %p318 = scmp.lt.s32.totalorder %s21, 1
        %s319 = scalar_select %p318, %s21, 1
        %p320 = scmp.lt.s32.totalorder %s317, 15
        %s321 = scalar_select %p320, %s317, 15
        %s322 = smul.addr %s321, 2
        %s323 = smul.addr %s319, 32
        %s324 = sadd.s32 %s322, %s323
        %s325 = smul.addr %s324, 8
        %s326 = scalar_lea.vmem %s2, %s325
        %s327 = smul.u32 %s22, 8
        %s328 = sadd.s32 %s327, 8
        %p329 = scmp.lt.s32.totalorder %s328, 15
        %s330 = scalar_select %p329, %s328, 15
      $region40: #{double_conv.4} parent=27 // pred_fallthru
        _
    $region28: #{double_conv.4} parent=5 // pred_fallthru
      _
    %p331 = scmp.le.s32.totalorder 1, %s14
    %p332 = scmp.lt.s32.totalorder %s14, 5
    %p333 = pnand %p331, %p332
    %p334 = pneg %p333
    // Predicated region
    $region41: #{double_conv.4} parent=5 // pred_check
      _
    $region42: #{double_conv.4} parent=5 // pred_check_branch
      %336 = sbr.rel (%p333) target = $region44
    $region43: #{double_conv.4} parent=5 // pred_region
      %s337 = ssub.s32 %s14, 1
      %s338 = smul.u32 8, %s24
      %p339 = scmp.lt.s32.totalorder %s23, 1
      %s340 = scalar_select %p339, %s23, 1
      %p341 = scmp.lt.s32.totalorder %s338, 15
      %s342 = scalar_select %p341, %s338, 15
      %s343 = smul.addr %s342, 2
      %s344 = smul.addr %s340, 32
      %s345 = sadd.s32 %s343, %s344
      %s346 = smul.addr %s345, 8
      %s347 = scalar_lea.vmem %s0, %s346
      %p348 = pneg %p54
      %p349 = pneg %p51
      %s350 = smul.u32 %s24, 8
      %s351 = ssub.s32 %s350, 1
      %p352 = scmp.gt.s32.totalorder %s351, 0
      %s353 = scalar_select %p352, %s351, 0
      %p354 = scmp.lt.s32.totalorder %s23, 1
      %s355 = scalar_select %p354, %s23, 1
      %p356 = scmp.lt.s32.totalorder %s353, 15
      %s357 = scalar_select %p356, %s353, 15
      %s358 = smul.addr %s357, 2
      %s359 = smul.addr %s355, 32
      %s360 = sadd.s32 %s358, %s359
      %s361 = smul.addr %s360, 8
      %s362 = scalar_lea.vmem %s1, %s361
      %p363 = pneg %p90
      %p364 = pneg %p87
      %s365 = smul.u32 %s24, 8
      %s366 = sadd.s32 %s365, 8
      %p367 = scmp.lt.s32.totalorder %s366, 15
      %s368 = scalar_select %p367, %s366, 15
      %p369 = scmp.lt.s32.totalorder %s23, 1
      %s370 = scalar_select %p369, %s23, 1
      %p371 = scmp.lt.s32.totalorder %s368, 15
      %s372 = scalar_select %p371, %s368, 15
      %s373 = smul.addr %s372, 2
      %s374 = smul.addr %s370, 32
      %s375 = sadd.s32 %s373, %s374
      %s376 = smul.addr %s375, 8
      %s377 = scalar_lea.vmem %s2, %s376
      %p378 = pneg %p126
      %p379 = pneg %p123
      %p380 = pneg %p147
      %p381 = pneg %p144
      %p382 = pneg %p168
      %p383 = pneg %p165
      %p384 = pneg %p189
      %p385 = pneg %p186
      %p386 = pneg %p219
      %p387 = pneg %p216
      %s388 = smul.u32 %s23, 2
      %s389 = sadd.s32 %s388, %s24
      %s390 = smul.u32 16, %s389
      %p391 = scmp.lt.s32.totalorder %s390, 63
      %s392 = scalar_select %p391, %s390, 63
      %s393 = smul.addr %s392, 8
      %s394 = scalar_lea.vmem %s6, %s393
      %p395 = pneg %p249
      %p396 = pneg %p246
      %s397 = smul.u32 %s23, 2
      %s398 = sadd.s32 %s397, %s24
      %p399 = scmp.lt.s32.totalorder %s398, 3
      %s400 = scalar_select %p399, %s398, 3
      %s401 = smul.addr %s400, 2
      %s402 = scalar_lea.vmem %s7, %s401
      %s403 = smul.u32 8, %s24
      %p404 = scmp.lt.s32.totalorder %s23, 1
      %s405 = scalar_select %p404, %s23, 1
      %p406 = scmp.lt.s32.totalorder %s403, 15
      %s407 = scalar_select %p406, %s403, 15
      %s408 = smul.addr %s407, 2
      %s409 = smul.addr %s405, 32
      %s410 = sadd.s32 %s408, %s409
      %s411 = smul.addr %s410, 8
      %s412 = scalar_lea.vmem %s0, %s411
      %s413 = smul.u32 8, %s24
      %s414 = smul.u32 %s24, 8
      %s415 = ssub.s32 %s414, 1
      %p416 = scmp.gt.s32.totalorder %s415, 0
      %s417 = scalar_select %p416, %s415, 0
      %p418 = scmp.lt.s32.totalorder %s23, 1
      %s419 = scalar_select %p418, %s23, 1
      %p420 = scmp.lt.s32.totalorder %s417, 15
      %s421 = scalar_select %p420, %s417, 15
      %s422 = smul.addr %s421, 2
      %s423 = smul.addr %s419, 32
      %s424 = sadd.s32 %s422, %s423
      %s425 = smul.addr %s424, 8
      %s426 = scalar_lea.vmem %s1, %s425
      %s427 = smul.u32 %s24, 8
      %s428 = ssub.s32 %s427, 1
      %p429 = scmp.gt.s32.totalorder %s428, 0
      %s430 = scalar_select %p429, %s428, 0
      %s431 = smul.u32 %s24, 8
      %s432 = sadd.s32 %s431, 8
      %p433 = scmp.lt.s32.totalorder %s432, 15
      %s434 = scalar_select %p433, %s432, 15
      %p435 = scmp.lt.s32.totalorder %s23, 1
      %s436 = scalar_select %p435, %s23, 1
      %p437 = scmp.lt.s32.totalorder %s434, 15
      %s438 = scalar_select %p437, %s434, 15
      %s439 = smul.addr %s438, 2
      %s440 = smul.addr %s436, 32
      %s441 = sadd.s32 %s439, %s440
      %s442 = smul.addr %s441, 8
      %s443 = scalar_lea.vmem %s2, %s442
      %s444 = smul.u32 %s24, 8
      %s445 = sadd.s32 %s444, 8
      %p446 = scmp.lt.s32.totalorder %s445, 15
      %s447 = scalar_select %p446, %s445, 15
      %s448 = smul.u32 %s23, 2
      %s449 = sadd.s32 %s448, %s24
      %s450 = smul.u32 16, %s449
      %p451 = scmp.lt.s32.totalorder %s450, 63
      %s452 = scalar_select %p451, %s450, 63
      %s453 = smul.addr %s452, 8
      %s454 = scalar_lea.vmem %s6, %s453
      %s455 = smul.u32 %s23, 2
      %s456 = sadd.s32 %s455, %s24
      %s457 = smul.u32 16, %s456
      %s458 = smul.u32 %s23, 2
      %s459 = sadd.s32 %s458, %s24
      %p460 = scmp.lt.s32.totalorder %s459, 3
      %s461 = scalar_select %p460, %s459, 3
      %s462 = smul.addr %s461, 2
      %s463 = scalar_lea.vmem %s7, %s462
      %s464 = smul.u32 %s23, 2
      %s465 = sadd.s32 %s464, %s24
      %v466 = vld [vmem:[%s3] sm:$0x1]
      %v467 = vld [vmem:[%s4] sm:$0x1]
      %v468 = vld [vmem:[%s426] sm:$0xff]
      %v469 = vld [vmem:[%s426 + $0x8] sm:$0xff]
      %v471 = vlaneseq
      %v472 = vshrl.u32 %v471, 7
      %v473 = vsub.s32 0, %v472
      %v474 = vrot.slane %v466, %v473
      %v476 = vmul.f32 %v468, %v474
      %v477 = vmul.f32 %v469, %v474
      %v479 = vlaneseq
      %v480 = vshrl.u32 %v479, 7
      %v481 = vsub.s32 0, %v480
      %v482 = vrot.slane %v467, %v481
      %v484 = vadd.f32 %v476, %v482
      %v485 = vadd.f32 %v477, %v482
      %v486 = vmax.f32 %v484, 0.0
      %v487 = vmax.f32 %v485, 0.0
      %v488 = vld [vmem:[%s412] sm:$0xff]
      %v489 = vld [vmem:[%s412 + $0x8] sm:$0xff]
      %v490 = vld [vmem:[%s412 + $0x10] sm:$0xff]
      %v491 = vld [vmem:[%s412 + $0x18] sm:$0xff]
      %v492 = vld [vmem:[%s412 + $0x20] sm:$0xff]
      %v493 = vld [vmem:[%s412 + $0x28] sm:$0xff]
      %v494 = vld [vmem:[%s412 + $0x30] sm:$0xff]
      %v495 = vld [vmem:[%s412 + $0x38] sm:$0xff]
      %v496 = vld [vmem:[%s412 + $0x40] sm:$0xff]
      %v497 = vld [vmem:[%s412 + $0x48] sm:$0xff]
      %v498 = vld [vmem:[%s412 + $0x50] sm:$0xff]
      %v499 = vld [vmem:[%s412 + $0x58] sm:$0xff]
      %v500 = vld [vmem:[%s412 + $0x60] sm:$0xff]
      %v501 = vld [vmem:[%s412 + $0x68] sm:$0xff]
      %v502 = vld [vmem:[%s412 + $0x70] sm:$0xff]
      %v503 = vld [vmem:[%s412 + $0x78] sm:$0xff]
      %v504 = vmul.f32 %v488, %v474
      %v505 = vmul.f32 %v489, %v474
      %v506 = vmul.f32 %v490, %v474
      %v507 = vmul.f32 %v491, %v474
      %v508 = vmul.f32 %v492, %v474
      %v509 = vmul.f32 %v493, %v474
      %v510 = vmul.f32 %v494, %v474
      %v511 = vmul.f32 %v495, %v474
      %v512 = vmul.f32 %v496, %v474
      %v513 = vmul.f32 %v497, %v474
      %v514 = vmul.f32 %v498, %v474
      %v515 = vmul.f32 %v499, %v474
      %v516 = vmul.f32 %v500, %v474
      %v517 = vmul.f32 %v501, %v474
      %v518 = vmul.f32 %v502, %v474
      %v519 = vmul.f32 %v503, %v474
      %v520 = vadd.f32 %v504, %v482
      %v521 = vadd.f32 %v505, %v482
      %v522 = vadd.f32 %v506, %v482
      %v523 = vadd.f32 %v507, %v482
      %v524 = vadd.f32 %v508, %v482
      %v525 = vadd.f32 %v509, %v482
      %v526 = vadd.f32 %v510, %v482
      %v527 = vadd.f32 %v511, %v482
      %v528 = vadd.f32 %v512, %v482
      %v529 = vadd.f32 %v513, %v482
      %v530 = vadd.f32 %v514, %v482
      %v531 = vadd.f32 %v515, %v482
      %v532 = vadd.f32 %v516, %v482
      %v533 = vadd.f32 %v517, %v482
      %v534 = vadd.f32 %v518, %v482
      %v535 = vadd.f32 %v519, %v482
      %v536 = vmax.f32 %v520, 0.0
      %v537 = vmax.f32 %v521, 0.0
      %v538 = vmax.f32 %v522, 0.0
      %v539 = vmax.f32 %v523, 0.0
      %v540 = vmax.f32 %v524, 0.0
      %v541 = vmax.f32 %v525, 0.0
      %v542 = vmax.f32 %v526, 0.0
      %v543 = vmax.f32 %v527, 0.0
      %v544 = vmax.f32 %v528, 0.0
      %v545 = vmax.f32 %v529, 0.0
      %v546 = vmax.f32 %v530, 0.0
      %v547 = vmax.f32 %v531, 0.0
      %v548 = vmax.f32 %v532, 0.0
      %v549 = vmax.f32 %v533, 0.0
      %v550 = vmax.f32 %v534, 0.0
      %v551 = vmax.f32 %v535, 0.0
      %v552 = vld [vmem:[%s443] sm:$0xff]
      %v553 = vld [vmem:[%s443 + $0x8] sm:$0xff]
      %v554 = vmul.f32 %v552, %v474
      %v555 = vmul.f32 %v553, %v474
      %v556 = vadd.f32 %v554, %v482
      %v557 = vadd.f32 %v555, %v482
      %v558 = vmax.f32 %v556, 0.0
      %v559 = vmax.f32 %v557, 0.0
      %p560 = scmp.eq.s32.totalorder %s24, 0
      %s561 = scalar_select %p560, 1, 0
      %v562 = vstv %s561
      %vm563 = vcmp.eq.s32.totalorder %v562, 1
      %v564 = vsel %vm563, 0.0, %v486
      %v565 = vsel %vm563, 0.0, %v487
      %p566 = scmp.eq.s32.totalorder %s24, 1
      %s567 = scalar_select %p566, 1, 0
      %v568 = vstv %s567
      %vm569 = vcmp.eq.s32.totalorder %v568, 1
      %v570 = vsel %vm569, 0.0, %v558
      %v571 = vsel %vm569, 0.0, %v559
      %vm592 = vcmask 1040384
      %v593 = vrot.slane %v564, 7
      %v594 = vrot.slane %v565, 7
      %v595 = vsel %vm592, %v593, %v594
      %v596 = vrot.slane %v536, 7
      %v597 = vrot.slane %v537, 7
      %v598 = vsel %vm592, %v596, %v597
      %v599 = vrot.slane %v538, 7
      %v600 = vrot.slane %v539, 7
      %v601 = vsel %vm592, %v599, %v600
      %v602 = vrot.slane %v540, 7
      %v603 = vrot.slane %v541, 7
      %v604 = vsel %vm592, %v602, %v603
      %v605 = vrot.slane %v542, 7
      %v606 = vrot.slane %v543, 7
      %v607 = vsel %vm592, %v605, %v606
      %v608 = vrot.slane %v544, 7
      %v609 = vrot.slane %v545, 7
      %v610 = vsel %vm592, %v608, %v609
      %v611 = vrot.slane %v546, 7
      %v612 = vrot.slane %v547, 7
      %v613 = vsel %vm592, %v611, %v612
      %v614 = vrot.slane %v548, 7
      %v615 = vrot.slane %v549, 7
      %v616 = vsel %vm592, %v614, %v615
      %v617 = vrot.slane %v550, 7
      %v618 = vrot.slane %v551, 7
      %v619 = vsel %vm592, %v617, %v618
      %v620 = vrot.slane %v570, 7
      %v621 = vrot.slane %v571, 7
      %v622 = vsel %vm592, %v620, %v621
      %v653 = vsel %vm592, 0.0, %v593
      %v654 = vsel %vm592, 0.0, %v596
      %v655 = vsel %vm592, 0.0, %v599
      %v656 = vsel %vm592, 0.0, %v602
      %v657 = vsel %vm592, 0.0, %v605
      %v658 = vsel %vm592, 0.0, %v608
      %v659 = vsel %vm592, 0.0, %v611
      %v660 = vsel %vm592, 0.0, %v614
      %v661 = vsel %vm592, 0.0, %v617
      %v662 = vsel %vm592, 0.0, %v620
      %v663 = vsel %vm592, %v594, 0.0
      %v664 = vsel %vm592, %v597, 0.0
      %v665 = vsel %vm592, %v600, 0.0
      %v666 = vsel %vm592, %v603, 0.0
      %v667 = vsel %vm592, %v606, 0.0
      %v668 = vsel %vm592, %v609, 0.0
      %v669 = vsel %vm592, %v612, 0.0
      %v670 = vsel %vm592, %v615, 0.0
      %v671 = vsel %vm592, %v618, 0.0
      %v672 = vsel %vm592, %v621, 0.0
      %v673 = vld [vmem:[%s5] sm:$0xff]
      %v674 = vld [vmem:[%s5 + $0x8] sm:$0xff]
      %v675 = vld [vmem:[%s5 + $0x10] sm:$0xff]
      %v676 = vld [vmem:[%s5 + $0x18] sm:$0xff]
      %v677 = vld [vmem:[%s5 + $0x20] sm:$0xff]
      %v678 = vld [vmem:[%s5 + $0x28] sm:$0xff]
      %v679 = vld [vmem:[%s5 + $0x30] sm:$0xff]
      %v680 = vld [vmem:[%s5 + $0x38] sm:$0xff]
      %v681 = vld [vmem:[%s5 + $0x40] sm:$0xff]
      %v682 = vld [vmem:[%s5 + $0x48] sm:$0xff]
      %v683 = vld [vmem:[%s5 + $0x50] sm:$0xff]
      %v684 = vld [vmem:[%s5 + $0x58] sm:$0xff]
      %v685 = vld [vmem:[%s5 + $0x60] sm:$0xff]
      %v686 = vld [vmem:[%s5 + $0x68] sm:$0xff]
      %v687 = vld [vmem:[%s5 + $0x70] sm:$0xff]
      %v688 = vld [vmem:[%s5 + $0x78] sm:$0xff]
      %vm705 = vcmask 1046528
      %v706 = vrot.slane %v653, 1
      %v707 = vrot.slane %v595, 1
      %v708 = vsel %vm705, %v706, %v707
      %v709 = vrot.slane %v663, 1
      %v710 = vsel %vm705, %v707, %v709
      %v711 = vrot.slane %v654, 1
      %v712 = vrot.slane %v598, 1
      %v713 = vsel %vm705, %v711, %v712
      %v714 = vrot.slane %v664, 1
      %v715 = vsel %vm705, %v712, %v714
      %v716 = vrot.slane %v655, 1
      %v717 = vrot.slane %v601, 1
      %v718 = vsel %vm705, %v716, %v717
      %v719 = vrot.slane %v665, 1
      %v720 = vsel %vm705, %v717, %v719
      %v721 = vrot.slane %v656, 1
      %v722 = vrot.slane %v604, 1
      %v723 = vsel %vm705, %v721, %v722
      %v724 = vrot.slane %v666, 1
      %v725 = vsel %vm705, %v722, %v724
      %v726 = vrot.slane %v657, 1
      %v727 = vrot.slane %v607, 1
      %v728 = vsel %vm705, %v726, %v727
      %v729 = vrot.slane %v667, 1
      %v730 = vsel %vm705, %v727, %v729
      %v731 = vrot.slane %v658, 1
      %v732 = vrot.slane %v610, 1
      %v733 = vsel %vm705, %v731, %v732
      %v734 = vrot.slane %v668, 1
      %v735 = vsel %vm705, %v732, %v734
      %v736 = vrot.slane %v659, 1
      %v737 = vrot.slane %v613, 1
      %v738 = vsel %vm705, %v736, %v737
      %v739 = vrot.slane %v669, 1
      %v740 = vsel %vm705, %v737, %v739
      %v741 = vrot.slane %v660, 1
      %v742 = vrot.slane %v616, 1
      %v743 = vsel %vm705, %v741, %v742
      %v744 = vrot.slane %v670, 1
      %v745 = vsel %vm705, %v742, %v744
      %s762 = scalar_lea.vmem %s5, 128
      %v763 = vld [vmem:[%s762] sm:$0xff]
      %v764 = vld [vmem:[%s762 + $0x8] sm:$0xff]
      %v765 = vld [vmem:[%s762 + $0x10] sm:$0xff]
      %v766 = vld [vmem:[%s762 + $0x18] sm:$0xff]
      %v767 = vld [vmem:[%s762 + $0x20] sm:$0xff]
      %v768 = vld [vmem:[%s762 + $0x28] sm:$0xff]
      %v769 = vld [vmem:[%s762 + $0x30] sm:$0xff]
      %v770 = vld [vmem:[%s762 + $0x38] sm:$0xff]
      %v771 = vld [vmem:[%s762 + $0x40] sm:$0xff]
      %v772 = vld [vmem:[%s762 + $0x48] sm:$0xff]
      %v773 = vld [vmem:[%s762 + $0x50] sm:$0xff]
      %v774 = vld [vmem:[%s762 + $0x58] sm:$0xff]
      %v775 = vld [vmem:[%s762 + $0x60] sm:$0xff]
      %v776 = vld [vmem:[%s762 + $0x68] sm:$0xff]
      %v777 = vld [vmem:[%s762 + $0x70] sm:$0xff]
      %v778 = vld [vmem:[%s762 + $0x78] sm:$0xff]
      %779 = vmatprep.subr.mxu0 0.0
      %780 = vmatpush1.msra.mxu0 %v778
      %781 = vmatprep.subr.mxu0 0.0
      %782 = vmatpush1.msra.mxu0 %v777
      %783 = vmatprep.subr.mxu0 0.0
      %784 = vmatpush1.msra.mxu0 %v776
      %785 = vmatprep.subr.mxu0 0.0
      %786 = vmatpush1.msra.mxu0 %v775
      %787 = vmatprep.subr.mxu0 0.0
      %788 = vmatpush1.msra.mxu0 %v774
      %789 = vmatprep.subr.mxu0 0.0
      %790 = vmatpush1.msra.mxu0 %v773
      %791 = vmatprep.subr.mxu0 0.0
      %792 = vmatpush1.msra.mxu0 %v772
      %793 = vmatprep.subr.mxu0 0.0
      %794 = vmatpush1.msra.mxu0 %v771
      %795 = vmatprep.subr.mxu0 0.0
      %796 = vmatpush1.msra.mxu0 %v770
      %797 = vmatprep.subr.mxu0 0.0
      %798 = vmatpush1.msra.mxu0 %v769
      %799 = vmatprep.subr.mxu0 0.0
      %800 = vmatpush1.msra.mxu0 %v768
      %801 = vmatprep.subr.mxu0 0.0
      %802 = vmatpush1.msra.mxu0 %v767
      %803 = vmatprep.subr.mxu0 0.0
      %804 = vmatpush1.msra.mxu0 %v766
      %805 = vmatprep.subr.mxu0 0.0
      %806 = vmatpush1.msra.mxu0 %v765
      %807 = vmatprep.subr.mxu0 0.0
      %808 = vmatpush1.msra.mxu0 %v764
      %809 = vmatprep.subr.mxu0 0.0
      %810 = vmatpush1.msra.mxu0 %v763
      %811 = vmatprep.subr.mxu0 0.0
      %812 = vmatpush2.msra.mxu0 0.0
      %813 = vmatprep.subr.mxu0 0.0
      %814 = vmatpush2.msra.mxu0 0.0
      %815 = vmatprep.subr.mxu0 0.0
      %816 = vmatpush2.msra.mxu0 0.0
      %817 = vmatprep.subr.mxu0 0.0
      %818 = vmatpush2.msra.mxu0 0.0
      %819 = vmatprep.subr.mxu0 0.0
      %820 = vmatpush2.msra.mxu0 0.0
      %821 = vmatprep.subr.mxu0 0.0
      %822 = vmatpush2.msra.mxu0 0.0
      %823 = vmatprep.subr.mxu0 0.0
      %824 = vmatpush2.msra.mxu0 0.0
      %825 = vmatprep.subr.mxu0 0.0
      %826 = vmatpush2.msra.mxu0 0.0
      %827 = vmatprep.subr.mxu0 0.0
      %828 = vmatpush2.msra.mxu0 0.0
      %829 = vmatprep.subr.mxu0 0.0
      %830 = vmatpush2.msra.mxu0 0.0
      %831 = vmatprep.subr.mxu0 0.0
      %832 = vmatpush2.msra.mxu0 0.0
      %833 = vmatprep.subr.mxu0 0.0
      %834 = vmatpush2.msra.mxu0 0.0
      %835 = vmatprep.subr.mxu0 0.0
      %836 = vmatpush2.msra.mxu0 0.0
      %837 = vmatprep.subr.mxu0 0.0
      %838 = vmatpush2.msra.mxu0 0.0
      %839 = vmatprep.subr.mxu0 0.0
      %840 = vmatpush2.msra.mxu0 0.0
      %841 = vmatprep.subr.mxu0 0.0
      %842 = vmatpush2.msra.mxu0 0.0
      %843 = vmatprep.mubr.f32.mxu0 0.0
      %844 = vmatmul.mubr.f32.gmra.mxu0 %v708
      %v845 = vpop.f32.mrf.mxu0
      %v846 = vadd.f32 0.0, %v845
      %v847 = vpop.f32.mrf.mxu0
      %848 = vmatprep.mubr.f32.mxu0 0.0
      %849 = vmatmul.mubr.f32.gmra.mxu0 %v710
      %v850 = vpop.f32.mrf.mxu0
      %v851 = vadd.f32 0.0, %v850
      %v852 = vpop.f32.mrf.mxu0
      %853 = vmatprep.mubr.f32.mxu0 0.0
      %854 = vmatmul.mubr.f32.gmra.mxu0 %v713
      %v855 = vpop.f32.mrf.mxu0
      %v856 = vadd.f32 0.0, %v855
      %v857 = vpop.f32.mrf.mxu0
      %858 = vmatprep.mubr.f32.mxu0 0.0
      %859 = vmatmul.mubr.f32.gmra.mxu0 %v715
      %v860 = vpop.f32.mrf.mxu0
      %v861 = vadd.f32 0.0, %v860
      %v862 = vpop.f32.mrf.mxu0
      %863 = vmatprep.mubr.f32.mxu0 0.0
      %864 = vmatmul.mubr.f32.gmra.mxu0 %v718
      %v865 = vpop.f32.mrf.mxu0
      %v866 = vadd.f32 0.0, %v865
      %v867 = vpop.f32.mrf.mxu0
      %868 = vmatprep.mubr.f32.mxu0 0.0
      %869 = vmatmul.mubr.f32.gmra.mxu0 %v720
      %v870 = vpop.f32.mrf.mxu0
      %v871 = vadd.f32 0.0, %v870
      %v872 = vpop.f32.mrf.mxu0
      %873 = vmatprep.mubr.f32.mxu0 0.0
      %874 = vmatmul.mubr.f32.gmra.mxu0 %v723
      %v875 = vpop.f32.mrf.mxu0
      %v876 = vadd.f32 0.0, %v875
      %v877 = vpop.f32.mrf.mxu0
      %878 = vmatprep.mubr.f32.mxu0 0.0
      %879 = vmatmul.mubr.f32.gmra.mxu0 %v725
      %v880 = vpop.f32.mrf.mxu0
      %v881 = vadd.f32 0.0, %v880
      %v882 = vpop.f32.mrf.mxu0
      %883 = vmatprep.mubr.f32.mxu0 0.0
      %884 = vmatmul.mubr.f32.gmra.mxu0 %v728
      %v885 = vpop.f32.mrf.mxu0
      %v886 = vadd.f32 0.0, %v885
      %v887 = vpop.f32.mrf.mxu0
      %888 = vmatprep.mubr.f32.mxu0 0.0
      %889 = vmatmul.mubr.f32.gmra.mxu0 %v730
      %v890 = vpop.f32.mrf.mxu0
      %v891 = vadd.f32 0.0, %v890
      %v892 = vpop.f32.mrf.mxu0
      %893 = vmatprep.mubr.f32.mxu0 0.0
      %894 = vmatmul.mubr.f32.gmra.mxu0 %v733
      %v895 = vpop.f32.mrf.mxu0
      %v896 = vadd.f32 0.0, %v895
      %v897 = vpop.f32.mrf.mxu0
      %898 = vmatprep.mubr.f32.mxu0 0.0
      %899 = vmatmul.mubr.f32.gmra.mxu0 %v735
      %v900 = vpop.f32.mrf.mxu0
      %v901 = vadd.f32 0.0, %v900
      %v902 = vpop.f32.mrf.mxu0
      %903 = vmatprep.mubr.f32.mxu0 0.0
      %904 = vmatmul.mubr.f32.gmra.mxu0 %v738
      %v905 = vpop.f32.mrf.mxu0
      %v906 = vadd.f32 0.0, %v905
      %v907 = vpop.f32.mrf.mxu0
      %908 = vmatprep.mubr.f32.mxu0 0.0
      %909 = vmatmul.mubr.f32.gmra.mxu0 %v740
      %v910 = vpop.f32.mrf.mxu0
      %v911 = vadd.f32 0.0, %v910
      %v912 = vpop.f32.mrf.mxu0
      %913 = vmatprep.mubr.f32.mxu0 0.0
      %914 = vmatmul.mubr.f32.gmra.mxu0 %v743
      %v915 = vpop.f32.mrf.mxu0
      %v916 = vadd.f32 0.0, %v915
      %v917 = vpop.f32.mrf.mxu0
      %918 = vmatprep.mubr.f32.mxu0 0.0
      %919 = vmatmul.mubr.f32.gmra.mxu0 %v745
      %v920 = vpop.f32.mrf.mxu0
      %v921 = vadd.f32 0.0, %v920
      %v922 = vpop.f32.mrf.mxu0
      %923 = vdwg.mxu0
      %924 = vmatprep.subr.mxu0 0.0
      %925 = vmatpush1.msra.mxu0 %v688
      %926 = vmatprep.subr.mxu0 0.0
      %927 = vmatpush1.msra.mxu0 %v687
      %928 = vmatprep.subr.mxu0 0.0
      %929 = vmatpush1.msra.mxu0 %v686
      %930 = vmatprep.subr.mxu0 0.0
      %931 = vmatpush1.msra.mxu0 %v685
      %932 = vmatprep.subr.mxu0 0.0
      %933 = vmatpush1.msra.mxu0 %v684
      %934 = vmatprep.subr.mxu0 0.0
      %935 = vmatpush1.msra.mxu0 %v683
      %936 = vmatprep.subr.mxu0 0.0
      %937 = vmatpush1.msra.mxu0 %v682
      %938 = vmatprep.subr.mxu0 0.0
      %939 = vmatpush1.msra.mxu0 %v681
      %940 = vmatprep.subr.mxu0 0.0
      %941 = vmatpush1.msra.mxu0 %v680
      %942 = vmatprep.subr.mxu0 0.0
      %943 = vmatpush1.msra.mxu0 %v679
      %944 = vmatprep.subr.mxu0 0.0
      %945 = vmatpush1.msra.mxu0 %v678
      %946 = vmatprep.subr.mxu0 0.0
      %947 = vmatpush1.msra.mxu0 %v677
      %948 = vmatprep.subr.mxu0 0.0
      %949 = vmatpush1.msra.mxu0 %v676
      %950 = vmatprep.subr.mxu0 0.0
      %951 = vmatpush1.msra.mxu0 %v675
      %952 = vmatprep.subr.mxu0 0.0
      %953 = vmatpush1.msra.mxu0 %v674
      %954 = vmatprep.subr.mxu0 0.0
      %955 = vmatpush1.msra.mxu0 %v673
      %956 = vmatprep.subr.mxu0 0.0
      %957 = vmatpush2.msra.mxu0 0.0
      %958 = vmatprep.subr.mxu0 0.0
      %959 = vmatpush2.msra.mxu0 0.0
      %960 = vmatprep.subr.mxu0 0.0
      %961 = vmatpush2.msra.mxu0 0.0
      %962 = vmatprep.subr.mxu0 0.0
      %963 = vmatpush2.msra.mxu0 0.0
      %964 = vmatprep.subr.mxu0 0.0
      %965 = vmatpush2.msra.mxu0 0.0
      %966 = vmatprep.subr.mxu0 0.0
      %967 = vmatpush2.msra.mxu0 0.0
      %968 = vmatprep.subr.mxu0 0.0
      %969 = vmatpush2.msra.mxu0 0.0
      %970 = vmatprep.subr.mxu0 0.0
      %971 = vmatpush2.msra.mxu0 0.0
      %972 = vmatprep.subr.mxu0 0.0
      %973 = vmatpush2.msra.mxu0 0.0
      %974 = vmatprep.subr.mxu0 0.0
      %975 = vmatpush2.msra.mxu0 0.0
      %976 = vmatprep.subr.mxu0 0.0
      %977 = vmatpush2.msra.mxu0 0.0
      %978 = vmatprep.subr.mxu0 0.0
      %979 = vmatpush2.msra.mxu0 0.0
      %980 = vmatprep.subr.mxu0 0.0
      %981 = vmatpush2.msra.mxu0 0.0
      %982 = vmatprep.subr.mxu0 0.0
      %983 = vmatpush2.msra.mxu0 0.0
      %984 = vmatprep.subr.mxu0 0.0
      %985 = vmatpush2.msra.mxu0 0.0
      %986 = vmatprep.subr.mxu0 0.0
      %987 = vmatpush2.msra.mxu0 0.0
      %988 = vmatprep.mubr.f32.mxu0 0.0
      %989 = vmatmul.mubr.f32.gmra.mxu0 %v653
      %v990 = vpop.f32.mrf.mxu0
      %v991 = vadd.f32 %v846, %v990
      %v992 = vpop.f32.mrf.mxu0
      %993 = vmatprep.mubr.f32.mxu0 0.0
      %994 = vmatmul.mubr.f32.gmra.mxu0 %v595
      %v995 = vpop.f32.mrf.mxu0
      %v996 = vadd.f32 %v851, %v995
      %v997 = vpop.f32.mrf.mxu0
      %998 = vmatprep.mubr.f32.mxu0 0.0
      %999 = vmatmul.mubr.f32.gmra.mxu0 %v654
      %v1000 = vpop.f32.mrf.mxu0
      %v1001 = vadd.f32 %v856, %v1000
      %v1002 = vpop.f32.mrf.mxu0
      %1003 = vmatprep.mubr.f32.mxu0 0.0
      %1004 = vmatmul.mubr.f32.gmra.mxu0 %v598
      %v1005 = vpop.f32.mrf.mxu0
      %v1006 = vadd.f32 %v861, %v1005
      %v1007 = vpop.f32.mrf.mxu0
      %1008 = vmatprep.mubr.f32.mxu0 0.0
      %1009 = vmatmul.mubr.f32.gmra.mxu0 %v655
      %v1010 = vpop.f32.mrf.mxu0
      %v1011 = vadd.f32 %v866, %v1010
      %v1012 = vpop.f32.mrf.mxu0
      %1013 = vmatprep.mubr.f32.mxu0 0.0
      %1014 = vmatmul.mubr.f32.gmra.mxu0 %v601
      %v1015 = vpop.f32.mrf.mxu0
      %v1016 = vadd.f32 %v871, %v1015
      %v1017 = vpop.f32.mrf.mxu0
      %1018 = vmatprep.mubr.f32.mxu0 0.0
      %1019 = vmatmul.mubr.f32.gmra.mxu0 %v656
      %v1020 = vpop.f32.mrf.mxu0
      %v1021 = vadd.f32 %v876, %v1020
      %v1022 = vpop.f32.mrf.mxu0
      %1023 = vmatprep.mubr.f32.mxu0 0.0
      %1024 = vmatmul.mubr.f32.gmra.mxu0 %v604
      %v1025 = vpop.f32.mrf.mxu0
      %v1026 = vadd.f32 %v881, %v1025
      %v1027 = vpop.f32.mrf.mxu0
      %1028 = vmatprep.mubr.f32.mxu0 0.0
      %1029 = vmatmul.mubr.f32.gmra.mxu0 %v657
      %v1030 = vpop.f32.mrf.mxu0
      %v1031 = vadd.f32 %v886, %v1030
      %v1032 = vpop.f32.mrf.mxu0
      %1033 = vmatprep.mubr.f32.mxu0 0.0
      %1034 = vmatmul.mubr.f32.gmra.mxu0 %v607
      %v1035 = vpop.f32.mrf.mxu0
      %v1036 = vadd.f32 %v891, %v1035
      %v1037 = vpop.f32.mrf.mxu0
      %1038 = vmatprep.mubr.f32.mxu0 0.0
      %1039 = vmatmul.mubr.f32.gmra.mxu0 %v658
      %v1040 = vpop.f32.mrf.mxu0
      %v1041 = vadd.f32 %v896, %v1040
      %v1042 = vpop.f32.mrf.mxu0
      %1043 = vmatprep.mubr.f32.mxu0 0.0
      %1044 = vmatmul.mubr.f32.gmra.mxu0 %v610
      %v1045 = vpop.f32.mrf.mxu0
      %v1046 = vadd.f32 %v901, %v1045
      %v1047 = vpop.f32.mrf.mxu0
      %1048 = vmatprep.mubr.f32.mxu0 0.0
      %1049 = vmatmul.mubr.f32.gmra.mxu0 %v659
      %v1050 = vpop.f32.mrf.mxu0
      %v1051 = vadd.f32 %v906, %v1050
      %v1052 = vpop.f32.mrf.mxu0
      %1053 = vmatprep.mubr.f32.mxu0 0.0
      %1054 = vmatmul.mubr.f32.gmra.mxu0 %v613
      %v1055 = vpop.f32.mrf.mxu0
      %v1056 = vadd.f32 %v911, %v1055
      %v1057 = vpop.f32.mrf.mxu0
      %1058 = vmatprep.mubr.f32.mxu0 0.0
      %1059 = vmatmul.mubr.f32.gmra.mxu0 %v660
      %v1060 = vpop.f32.mrf.mxu0
      %v1061 = vadd.f32 %v916, %v1060
      %v1062 = vpop.f32.mrf.mxu0
      %1063 = vmatprep.mubr.f32.mxu0 0.0
      %1064 = vmatmul.mubr.f32.gmra.mxu0 %v616
      %v1065 = vpop.f32.mrf.mxu0
      %v1066 = vadd.f32 %v921, %v1065
      %v1067 = vpop.f32.mrf.mxu0
      %1068 = vdwg.mxu0
      %vm1069 = vcmask 1045504
      %v1070 = vrot.slane %v653, 2
      %v1071 = vrot.slane %v595, 2
      %v1072 = vsel %vm1069, %v1070, %v1071
      %v1073 = vrot.slane %v663, 2
      %v1074 = vsel %vm1069, %v1071, %v1073
      %v1075 = vrot.slane %v654, 2
      %v1076 = vrot.slane %v598, 2
      %v1077 = vsel %vm1069, %v1075, %v1076
      %v1078 = vrot.slane %v664, 2
      %v1079 = vsel %vm1069, %v1076, %v1078
      %v1080 = vrot.slane %v655, 2
      %v1081 = vrot.slane %v601, 2
      %v1082 = vsel %vm1069, %v1080, %v1081
      %v1083 = vrot.slane %v665, 2
      %v1084 = vsel %vm1069, %v1081, %v1083
      %v1085 = vrot.slane %v656, 2
      %v1086 = vrot.slane %v604, 2
      %v1087 = vsel %vm1069, %v1085, %v1086
      %v1088 = vrot.slane %v666, 2
      %v1089 = vsel %vm1069, %v1086, %v1088
      %v1090 = vrot.slane %v657, 2
      %v1091 = vrot.slane %v607, 2
      %v1092 = vsel %vm1069, %v1090, %v1091
      %v1093 = vrot.slane %v667, 2
      %v1094 = vsel %vm1069, %v1091, %v1093
      %v1095 = vrot.slane %v658, 2
      %v1096 = vrot.slane %v610, 2
      %v1097 = vsel %vm1069, %v1095, %v1096
      %v1098 = vrot.slane %v668, 2
      %v1099 = vsel %vm1069, %v1096, %v1098
      %v1100 = vrot.slane %v659, 2
      %v1101 = vrot.slane %v613, 2
      %v1102 = vsel %vm1069, %v1100, %v1101
      %v1103 = vrot.slane %v669, 2
      %v1104 = vsel %vm1069, %v1101, %v1103
      %v1105 = vrot.slane %v660, 2
      %v1106 = vrot.slane %v616, 2
      %v1107 = vsel %vm1069, %v1105, %v1106
      %v1108 = vrot.slane %v670, 2
      %v1109 = vsel %vm1069, %v1106, %v1108
      %s1126 = scalar_lea.vmem %s5, 256
      %v1127 = vld [vmem:[%s1126] sm:$0xff]
      %v1128 = vld [vmem:[%s1126 + $0x8] sm:$0xff]
      %v1129 = vld [vmem:[%s1126 + $0x10] sm:$0xff]
      %v1130 = vld [vmem:[%s1126 + $0x18] sm:$0xff]
      %v1131 = vld [vmem:[%s1126 + $0x20] sm:$0xff]
      %v1132 = vld [vmem:[%s1126 + $0x28] sm:$0xff]
      %v1133 = vld [vmem:[%s1126 + $0x30] sm:$0xff]
      %v1134 = vld [vmem:[%s1126 + $0x38] sm:$0xff]
      %v1135 = vld [vmem:[%s1126 + $0x40] sm:$0xff]
      %v1136 = vld [vmem:[%s1126 + $0x48] sm:$0xff]
      %v1137 = vld [vmem:[%s1126 + $0x50] sm:$0xff]
      %v1138 = vld [vmem:[%s1126 + $0x58] sm:$0xff]
      %v1139 = vld [vmem:[%s1126 + $0x60] sm:$0xff]
      %v1140 = vld [vmem:[%s1126 + $0x68] sm:$0xff]
      %v1141 = vld [vmem:[%s1126 + $0x70] sm:$0xff]
      %v1142 = vld [vmem:[%s1126 + $0x78] sm:$0xff]
      %1143 = vmatprep.subr.mxu0 0.0
      %1144 = vmatpush1.msra.mxu0 %v1142
      %1145 = vmatprep.subr.mxu0 0.0
      %1146 = vmatpush1.msra.mxu0 %v1141
      %1147 = vmatprep.subr.mxu0 0.0
      %1148 = vmatpush1.msra.mxu0 %v1140
      %1149 = vmatprep.subr.mxu0 0.0
      %1150 = vmatpush1.msra.mxu0 %v1139
      %1151 = vmatprep.subr.mxu0 0.0
      %1152 = vmatpush1.msra.mxu0 %v1138
      %1153 = vmatprep.subr.mxu0 0.0
      %1154 = vmatpush1.msra.mxu0 %v1137
      %1155 = vmatprep.subr.mxu0 0.0
      %1156 = vmatpush1.msra.mxu0 %v1136
      %1157 = vmatprep.subr.mxu0 0.0
      %1158 = vmatpush1.msra.mxu0 %v1135
      %1159 = vmatprep.subr.mxu0 0.0
      %1160 = vmatpush1.msra.mxu0 %v1134
      %1161 = vmatprep.subr.mxu0 0.0
      %1162 = vmatpush1.msra.mxu0 %v1133
      %1163 = vmatprep.subr.mxu0 0.0
      %1164 = vmatpush1.msra.mxu0 %v1132
      %1165 = vmatprep.subr.mxu0 0.0
      %1166 = vmatpush1.msra.mxu0 %v1131
      %1167 = vmatprep.subr.mxu0 0.0
      %1168 = vmatpush1.msra.mxu0 %v1130
      %1169 = vmatprep.subr.mxu0 0.0
      %1170 = vmatpush1.msra.mxu0 %v1129
      %1171 = vmatprep.subr.mxu0 0.0
      %1172 = vmatpush1.msra.mxu0 %v1128
      %1173 = vmatprep.subr.mxu0 0.0
      %1174 = vmatpush1.msra.mxu0 %v1127
      %1175 = vmatprep.subr.mxu0 0.0
      %1176 = vmatpush2.msra.mxu0 0.0
      %1177 = vmatprep.subr.mxu0 0.0
      %1178 = vmatpush2.msra.mxu0 0.0
      %1179 = vmatprep.subr.mxu0 0.0
      %1180 = vmatpush2.msra.mxu0 0.0
      %1181 = vmatprep.subr.mxu0 0.0
      %1182 = vmatpush2.msra.mxu0 0.0
      %1183 = vmatprep.subr.mxu0 0.0
      %1184 = vmatpush2.msra.mxu0 0.0
      %1185 = vmatprep.subr.mxu0 0.0
      %1186 = vmatpush2.msra.mxu0 0.0
      %1187 = vmatprep.subr.mxu0 0.0
      %1188 = vmatpush2.msra.mxu0 0.0
      %1189 = vmatprep.subr.mxu0 0.0
      %1190 = vmatpush2.msra.mxu0 0.0
      %1191 = vmatprep.subr.mxu0 0.0
      %1192 = vmatpush2.msra.mxu0 0.0
      %1193 = vmatprep.subr.mxu0 0.0
      %1194 = vmatpush2.msra.mxu0 0.0
      %1195 = vmatprep.subr.mxu0 0.0
      %1196 = vmatpush2.msra.mxu0 0.0
      %1197 = vmatprep.subr.mxu0 0.0
      %1198 = vmatpush2.msra.mxu0 0.0
      %1199 = vmatprep.subr.mxu0 0.0
      %1200 = vmatpush2.msra.mxu0 0.0
      %1201 = vmatprep.subr.mxu0 0.0
      %1202 = vmatpush2.msra.mxu0 0.0
      %1203 = vmatprep.subr.mxu0 0.0
      %1204 = vmatpush2.msra.mxu0 0.0
      %1205 = vmatprep.subr.mxu0 0.0
      %1206 = vmatpush2.msra.mxu0 0.0
      %1207 = vmatprep.mubr.f32.mxu0 0.0
      %1208 = vmatmul.mubr.f32.gmra.mxu0 %v1072
      %v1209 = vpop.f32.mrf.mxu0
      %v1210 = vadd.f32 0.0, %v1209
      %v1211 = vpop.f32.mrf.mxu0
      %1212 = vmatprep.mubr.f32.mxu0 0.0
      %1213 = vmatmul.mubr.f32.gmra.mxu0 %v1074
      %v1214 = vpop.f32.mrf.mxu0
      %v1215 = vadd.f32 0.0, %v1214
      %v1216 = vpop.f32.mrf.mxu0
      %1217 = vmatprep.mubr.f32.mxu0 0.0
      %1218 = vmatmul.mubr.f32.gmra.mxu0 %v1077
      %v1219 = vpop.f32.mrf.mxu0
      %v1220 = vadd.f32 0.0, %v1219
      %v1221 = vpop.f32.mrf.mxu0
      %1222 = vmatprep.mubr.f32.mxu0 0.0
      %1223 = vmatmul.mubr.f32.gmra.mxu0 %v1079
      %v1224 = vpop.f32.mrf.mxu0
      %v1225 = vadd.f32 0.0, %v1224
      %v1226 = vpop.f32.mrf.mxu0
      %1227 = vmatprep.mubr.f32.mxu0 0.0
      %1228 = vmatmul.mubr.f32.gmra.mxu0 %v1082
      %v1229 = vpop.f32.mrf.mxu0
      %v1230 = vadd.f32 0.0, %v1229
      %v1231 = vpop.f32.mrf.mxu0
      %1232 = vmatprep.mubr.f32.mxu0 0.0
      %1233 = vmatmul.mubr.f32.gmra.mxu0 %v1084
      %v1234 = vpop.f32.mrf.mxu0
      %v1235 = vadd.f32 0.0, %v1234
      %v1236 = vpop.f32.mrf.mxu0
      %1237 = vmatprep.mubr.f32.mxu0 0.0
      %1238 = vmatmul.mubr.f32.gmra.mxu0 %v1087
      %v1239 = vpop.f32.mrf.mxu0
      %v1240 = vadd.f32 0.0, %v1239
      %v1241 = vpop.f32.mrf.mxu0
      %1242 = vmatprep.mubr.f32.mxu0 0.0
      %1243 = vmatmul.mubr.f32.gmra.mxu0 %v1089
      %v1244 = vpop.f32.mrf.mxu0
      %v1245 = vadd.f32 0.0, %v1244
      %v1246 = vpop.f32.mrf.mxu0
      %1247 = vmatprep.mubr.f32.mxu0 0.0
      %1248 = vmatmul.mubr.f32.gmra.mxu0 %v1092
      %v1249 = vpop.f32.mrf.mxu0
      %v1250 = vadd.f32 0.0, %v1249
      %v1251 = vpop.f32.mrf.mxu0
      %1252 = vmatprep.mubr.f32.mxu0 0.0
      %1253 = vmatmul.mubr.f32.gmra.mxu0 %v1094
      %v1254 = vpop.f32.mrf.mxu0
      %v1255 = vadd.f32 0.0, %v1254
      %v1256 = vpop.f32.mrf.mxu0
      %1257 = vmatprep.mubr.f32.mxu0 0.0
      %1258 = vmatmul.mubr.f32.gmra.mxu0 %v1097
      %v1259 = vpop.f32.mrf.mxu0
      %v1260 = vadd.f32 0.0, %v1259
      %v1261 = vpop.f32.mrf.mxu0
      %1262 = vmatprep.mubr.f32.mxu0 0.0
      %1263 = vmatmul.mubr.f32.gmra.mxu0 %v1099
      %v1264 = vpop.f32.mrf.mxu0
      %v1265 = vadd.f32 0.0, %v1264
      %v1266 = vpop.f32.mrf.mxu0
      %1267 = vmatprep.mubr.f32.mxu0 0.0
      %1268 = vmatmul.mubr.f32.gmra.mxu0 %v1102
      %v1269 = vpop.f32.mrf.mxu0
      %v1270 = vadd.f32 0.0, %v1269
      %v1271 = vpop.f32.mrf.mxu0
      %1272 = vmatprep.mubr.f32.mxu0 0.0
      %1273 = vmatmul.mubr.f32.gmra.mxu0 %v1104
      %v1274 = vpop.f32.mrf.mxu0
      %v1275 = vadd.f32 0.0, %v1274
      %v1276 = vpop.f32.mrf.mxu0
      %1277 = vmatprep.mubr.f32.mxu0 0.0
      %1278 = vmatmul.mubr.f32.gmra.mxu0 %v1107
      %v1279 = vpop.f32.mrf.mxu0
      %v1280 = vadd.f32 0.0, %v1279
      %v1281 = vpop.f32.mrf.mxu0
      %1282 = vmatprep.mubr.f32.mxu0 0.0
      %1283 = vmatmul.mubr.f32.gmra.mxu0 %v1109
      %v1284 = vpop.f32.mrf.mxu0
      %v1285 = vadd.f32 0.0, %v1284
      %v1286 = vpop.f32.mrf.mxu0
      %1287 = vdwg.mxu0
      %v1288 = vadd.f32 %v991, %v1210
      %v1289 = vadd.f32 %v996, %v1215
      %v1290 = vadd.f32 %v1001, %v1220
      %v1291 = vadd.f32 %v1006, %v1225
      %v1292 = vadd.f32 %v1011, %v1230
      %v1293 = vadd.f32 %v1016, %v1235
      %v1294 = vadd.f32 %v1021, %v1240
      %v1295 = vadd.f32 %v1026, %v1245
      %v1296 = vadd.f32 %v1031, %v1250
      %v1297 = vadd.f32 %v1036, %v1255
      %v1298 = vadd.f32 %v1041, %v1260
      %v1299 = vadd.f32 %v1046, %v1265
      %v1300 = vadd.f32 %v1051, %v1270
      %v1301 = vadd.f32 %v1056, %v1275
      %v1302 = vadd.f32 %v1061, %v1280
      %v1303 = vadd.f32 %v1066, %v1285
      %s1304 = scalar_lea.vmem %s5, 384
      %v1305 = vld [vmem:[%s1304] sm:$0xff]
      %v1306 = vld [vmem:[%s1304 + $0x8] sm:$0xff]
      %v1307 = vld [vmem:[%s1304 + $0x10] sm:$0xff]
      %v1308 = vld [vmem:[%s1304 + $0x18] sm:$0xff]
      %v1309 = vld [vmem:[%s1304 + $0x20] sm:$0xff]
      %v1310 = vld [vmem:[%s1304 + $0x28] sm:$0xff]
      %v1311 = vld [vmem:[%s1304 + $0x30] sm:$0xff]
      %v1312 = vld [vmem:[%s1304 + $0x38] sm:$0xff]
      %v1313 = vld [vmem:[%s1304 + $0x40] sm:$0xff]
      %v1314 = vld [vmem:[%s1304 + $0x48] sm:$0xff]
      %v1315 = vld [vmem:[%s1304 + $0x50] sm:$0xff]
      %v1316 = vld [vmem:[%s1304 + $0x58] sm:$0xff]
      %v1317 = vld [vmem:[%s1304 + $0x60] sm:$0xff]
      %v1318 = vld [vmem:[%s1304 + $0x68] sm:$0xff]
      %v1319 = vld [vmem:[%s1304 + $0x70] sm:$0xff]
      %v1320 = vld [vmem:[%s1304 + $0x78] sm:$0xff]
      %1321 = vmatprep.subr.mxu0 0.0
      %1322 = vmatpush1.msra.mxu0 %v1320
      %1323 = vmatprep.subr.mxu0 0.0
      %1324 = vmatpush1.msra.mxu0 %v1319
      %1325 = vmatprep.subr.mxu0 0.0
      %1326 = vmatpush1.msra.mxu0 %v1318
      %1327 = vmatprep.subr.mxu0 0.0
      %1328 = vmatpush1.msra.mxu0 %v1317
      %1329 = vmatprep.subr.mxu0 0.0
      %1330 = vmatpush1.msra.mxu0 %v1316
      %1331 = vmatprep.subr.mxu0 0.0
      %1332 = vmatpush1.msra.mxu0 %v1315
      %1333 = vmatprep.subr.mxu0 0.0
      %1334 = vmatpush1.msra.mxu0 %v1314
      %1335 = vmatprep.subr.mxu0 0.0
      %1336 = vmatpush1.msra.mxu0 %v1313
      %1337 = vmatprep.subr.mxu0 0.0
      %1338 = vmatpush1.msra.mxu0 %v1312
      %1339 = vmatprep.subr.mxu0 0.0
      %1340 = vmatpush1.msra.mxu0 %v1311
      %1341 = vmatprep.subr.mxu0 0.0
      %1342 = vmatpush1.msra.mxu0 %v1310
      %1343 = vmatprep.subr.mxu0 0.0
      %1344 = vmatpush1.msra.mxu0 %v1309
      %1345 = vmatprep.subr.mxu0 0.0
      %1346 = vmatpush1.msra.mxu0 %v1308
      %1347 = vmatprep.subr.mxu0 0.0
      %1348 = vmatpush1.msra.mxu0 %v1307
      %1349 = vmatprep.subr.mxu0 0.0
      %1350 = vmatpush1.msra.mxu0 %v1306
      %1351 = vmatprep.subr.mxu0 0.0
      %1352 = vmatpush1.msra.mxu0 %v1305
      %1353 = vmatprep.subr.mxu0 0.0
      %1354 = vmatpush2.msra.mxu0 0.0
      %1355 = vmatprep.subr.mxu0 0.0
      %1356 = vmatpush2.msra.mxu0 0.0
      %1357 = vmatprep.subr.mxu0 0.0
      %1358 = vmatpush2.msra.mxu0 0.0
      %1359 = vmatprep.subr.mxu0 0.0
      %1360 = vmatpush2.msra.mxu0 0.0
      %1361 = vmatprep.subr.mxu0 0.0
      %1362 = vmatpush2.msra.mxu0 0.0
      %1363 = vmatprep.subr.mxu0 0.0
      %1364 = vmatpush2.msra.mxu0 0.0
      %1365 = vmatprep.subr.mxu0 0.0
      %1366 = vmatpush2.msra.mxu0 0.0
      %1367 = vmatprep.subr.mxu0 0.0
      %1368 = vmatpush2.msra.mxu0 0.0
      %1369 = vmatprep.subr.mxu0 0.0
      %1370 = vmatpush2.msra.mxu0 0.0
      %1371 = vmatprep.subr.mxu0 0.0
      %1372 = vmatpush2.msra.mxu0 0.0
      %1373 = vmatprep.subr.mxu0 0.0
      %1374 = vmatpush2.msra.mxu0 0.0
      %1375 = vmatprep.subr.mxu0 0.0
      %1376 = vmatpush2.msra.mxu0 0.0
      %1377 = vmatprep.subr.mxu0 0.0
      %1378 = vmatpush2.msra.mxu0 0.0
      %1379 = vmatprep.subr.mxu0 0.0
      %1380 = vmatpush2.msra.mxu0 0.0
      %1381 = vmatprep.subr.mxu0 0.0
      %1382 = vmatpush2.msra.mxu0 0.0
      %1383 = vmatprep.subr.mxu0 0.0
      %1384 = vmatpush2.msra.mxu0 0.0
      %1385 = vmatprep.mubr.f32.mxu0 0.0
      %1386 = vmatmul.mubr.f32.gmra.mxu0 %v654
      %v1387 = vpop.f32.mrf.mxu0
      %v1388 = vadd.f32 0.0, %v1387
      %v1389 = vpop.f32.mrf.mxu0
      %1390 = vmatprep.mubr.f32.mxu0 0.0
      %1391 = vmatmul.mubr.f32.gmra.mxu0 %v598
      %v1392 = vpop.f32.mrf.mxu0
      %v1393 = vadd.f32 0.0, %v1392
      %v1394 = vpop.f32.mrf.mxu0
      %1395 = vmatprep.mubr.f32.mxu0 0.0
      %1396 = vmatmul.mubr.f32.gmra.mxu0 %v655
      %v1397 = vpop.f32.mrf.mxu0
      %v1398 = vadd.f32 0.0, %v1397
      %v1399 = vpop.f32.mrf.mxu0
      %1400 = vmatprep.mubr.f32.mxu0 0.0
      %1401 = vmatmul.mubr.f32.gmra.mxu0 %v601
      %v1402 = vpop.f32.mrf.mxu0
      %v1403 = vadd.f32 0.0, %v1402
      %v1404 = vpop.f32.mrf.mxu0
      %1405 = vmatprep.mubr.f32.mxu0 0.0
      %1406 = vmatmul.mubr.f32.gmra.mxu0 %v656
      %v1407 = vpop.f32.mrf.mxu0
      %v1408 = vadd.f32 0.0, %v1407
      %v1409 = vpop.f32.mrf.mxu0
      %1410 = vmatprep.mubr.f32.mxu0 0.0
      %1411 = vmatmul.mubr.f32.gmra.mxu0 %v604
      %v1412 = vpop.f32.mrf.mxu0
      %v1413 = vadd.f32 0.0, %v1412
      %v1414 = vpop.f32.mrf.mxu0
      %1415 = vmatprep.mubr.f32.mxu0 0.0
      %1416 = vmatmul.mubr.f32.gmra.mxu0 %v657
      %v1417 = vpop.f32.mrf.mxu0
      %v1418 = vadd.f32 0.0, %v1417
      %v1419 = vpop.f32.mrf.mxu0
      %1420 = vmatprep.mubr.f32.mxu0 0.0
      %1421 = vmatmul.mubr.f32.gmra.mxu0 %v607
      %v1422 = vpop.f32.mrf.mxu0
      %v1423 = vadd.f32 0.0, %v1422
      %v1424 = vpop.f32.mrf.mxu0
      %1425 = vmatprep.mubr.f32.mxu0 0.0
      %1426 = vmatmul.mubr.f32.gmra.mxu0 %v658
      %v1427 = vpop.f32.mrf.mxu0
      %v1428 = vadd.f32 0.0, %v1427
      %v1429 = vpop.f32.mrf.mxu0
      %1430 = vmatprep.mubr.f32.mxu0 0.0
      %1431 = vmatmul.mubr.f32.gmra.mxu0 %v610
      %v1432 = vpop.f32.mrf.mxu0
      %v1433 = vadd.f32 0.0, %v1432
      %v1434 = vpop.f32.mrf.mxu0
      %1435 = vmatprep.mubr.f32.mxu0 0.0
      %1436 = vmatmul.mubr.f32.gmra.mxu0 %v659
      %v1437 = vpop.f32.mrf.mxu0
      %v1438 = vadd.f32 0.0, %v1437
      %v1439 = vpop.f32.mrf.mxu0
      %1440 = vmatprep.mubr.f32.mxu0 0.0
      %1441 = vmatmul.mubr.f32.gmra.mxu0 %v613
      %v1442 = vpop.f32.mrf.mxu0
      %v1443 = vadd.f32 0.0, %v1442
      %v1444 = vpop.f32.mrf.mxu0
      %1445 = vmatprep.mubr.f32.mxu0 0.0
      %1446 = vmatmul.mubr.f32.gmra.mxu0 %v660
      %v1447 = vpop.f32.mrf.mxu0
      %v1448 = vadd.f32 0.0, %v1447
      %v1449 = vpop.f32.mrf.mxu0
      %1450 = vmatprep.mubr.f32.mxu0 0.0
      %1451 = vmatmul.mubr.f32.gmra.mxu0 %v616
      %v1452 = vpop.f32.mrf.mxu0
      %v1453 = vadd.f32 0.0, %v1452
      %v1454 = vpop.f32.mrf.mxu0
      %1455 = vmatprep.mubr.f32.mxu0 0.0
      %1456 = vmatmul.mubr.f32.gmra.mxu0 %v661
      %v1457 = vpop.f32.mrf.mxu0
      %v1458 = vadd.f32 0.0, %v1457
      %v1459 = vpop.f32.mrf.mxu0
      %1460 = vmatprep.mubr.f32.mxu0 0.0
      %1461 = vmatmul.mubr.f32.gmra.mxu0 %v619
      %v1462 = vpop.f32.mrf.mxu0
      %v1463 = vadd.f32 0.0, %v1462
      %v1464 = vpop.f32.mrf.mxu0
      %1465 = vdwg.mxu0
      %v1466 = vadd.f32 %v1288, %v1388
      %v1467 = vadd.f32 %v1289, %v1393
      %v1468 = vadd.f32 %v1290, %v1398
      %v1469 = vadd.f32 %v1291, %v1403
      %v1470 = vadd.f32 %v1292, %v1408
      %v1471 = vadd.f32 %v1293, %v1413
      %v1472 = vadd.f32 %v1294, %v1418
      %v1473 = vadd.f32 %v1295, %v1423
      %v1474 = vadd.f32 %v1296, %v1428
      %v1475 = vadd.f32 %v1297, %v1433
      %v1476 = vadd.f32 %v1298, %v1438
      %v1477 = vadd.f32 %v1299, %v1443
      %v1478 = vadd.f32 %v1300, %v1448
      %v1479 = vadd.f32 %v1301, %v1453
      %v1480 = vadd.f32 %v1302, %v1458
      %v1481 = vadd.f32 %v1303, %v1463
      %v1484 = vrot.slane %v661, 1
      %v1485 = vrot.slane %v619, 1
      %v1486 = vsel %vm705, %v1484, %v1485
      %v1487 = vrot.slane %v671, 1
      %v1488 = vsel %vm705, %v1485, %v1487
      %s1491 = scalar_lea.vmem %s5, 512
      %v1492 = vld [vmem:[%s1491] sm:$0xff]
      %v1493 = vld [vmem:[%s1491 + $0x8] sm:$0xff]
      %v1494 = vld [vmem:[%s1491 + $0x10] sm:$0xff]
      %v1495 = vld [vmem:[%s1491 + $0x18] sm:$0xff]
      %v1496 = vld [vmem:[%s1491 + $0x20] sm:$0xff]
      %v1497 = vld [vmem:[%s1491 + $0x28] sm:$0xff]
      %v1498 = vld [vmem:[%s1491 + $0x30] sm:$0xff]
      %v1499 = vld [vmem:[%s1491 + $0x38] sm:$0xff]
      %v1500 = vld [vmem:[%s1491 + $0x40] sm:$0xff]
      %v1501 = vld [vmem:[%s1491 + $0x48] sm:$0xff]
      %v1502 = vld [vmem:[%s1491 + $0x50] sm:$0xff]
      %v1503 = vld [vmem:[%s1491 + $0x58] sm:$0xff]
      %v1504 = vld [vmem:[%s1491 + $0x60] sm:$0xff]
      %v1505 = vld [vmem:[%s1491 + $0x68] sm:$0xff]
      %v1506 = vld [vmem:[%s1491 + $0x70] sm:$0xff]
      %v1507 = vld [vmem:[%s1491 + $0x78] sm:$0xff]
      %1508 = vmatprep.subr.mxu0 0.0
      %1509 = vmatpush1.msra.mxu0 %v1507
      %1510 = vmatprep.subr.mxu0 0.0
      %1511 = vmatpush1.msra.mxu0 %v1506
      %1512 = vmatprep.subr.mxu0 0.0
      %1513 = vmatpush1.msra.mxu0 %v1505
      %1514 = vmatprep.subr.mxu0 0.0
      %1515 = vmatpush1.msra.mxu0 %v1504
      %1516 = vmatprep.subr.mxu0 0.0
      %1517 = vmatpush1.msra.mxu0 %v1503
      %1518 = vmatprep.subr.mxu0 0.0
      %1519 = vmatpush1.msra.mxu0 %v1502
      %1520 = vmatprep.subr.mxu0 0.0
      %1521 = vmatpush1.msra.mxu0 %v1501
      %1522 = vmatprep.subr.mxu0 0.0
      %1523 = vmatpush1.msra.mxu0 %v1500
      %1524 = vmatprep.subr.mxu0 0.0
      %1525 = vmatpush1.msra.mxu0 %v1499
      %1526 = vmatprep.subr.mxu0 0.0
      %1527 = vmatpush1.msra.mxu0 %v1498
      %1528 = vmatprep.subr.mxu0 0.0
      %1529 = vmatpush1.msra.mxu0 %v1497
      %1530 = vmatprep.subr.mxu0 0.0
      %1531 = vmatpush1.msra.mxu0 %v1496
      %1532 = vmatprep.subr.mxu0 0.0
      %1533 = vmatpush1.msra.mxu0 %v1495
      %1534 = vmatprep.subr.mxu0 0.0
      %1535 = vmatpush1.msra.mxu0 %v1494
      %1536 = vmatprep.subr.mxu0 0.0
      %1537 = vmatpush1.msra.mxu0 %v1493
      %1538 = vmatprep.subr.mxu0 0.0
      %1539 = vmatpush1.msra.mxu0 %v1492
      %1540 = vmatprep.subr.mxu0 0.0
      %1541 = vmatpush2.msra.mxu0 0.0
      %1542 = vmatprep.subr.mxu0 0.0
      %1543 = vmatpush2.msra.mxu0 0.0
      %1544 = vmatprep.subr.mxu0 0.0
      %1545 = vmatpush2.msra.mxu0 0.0
      %1546 = vmatprep.subr.mxu0 0.0
      %1547 = vmatpush2.msra.mxu0 0.0
      %1548 = vmatprep.subr.mxu0 0.0
      %1549 = vmatpush2.msra.mxu0 0.0
      %1550 = vmatprep.subr.mxu0 0.0
      %1551 = vmatpush2.msra.mxu0 0.0
      %1552 = vmatprep.subr.mxu0 0.0
      %1553 = vmatpush2.msra.mxu0 0.0
      %1554 = vmatprep.subr.mxu0 0.0
      %1555 = vmatpush2.msra.mxu0 0.0
      %1556 = vmatprep.subr.mxu0 0.0
      %1557 = vmatpush2.msra.mxu0 0.0
      %1558 = vmatprep.subr.mxu0 0.0
      %1559 = vmatpush2.msra.mxu0 0.0
      %1560 = vmatprep.subr.mxu0 0.0
      %1561 = vmatpush2.msra.mxu0 0.0
      %1562 = vmatprep.subr.mxu0 0.0
      %1563 = vmatpush2.msra.mxu0 0.0
      %1564 = vmatprep.subr.mxu0 0.0
      %1565 = vmatpush2.msra.mxu0 0.0
      %1566 = vmatprep.subr.mxu0 0.0
      %1567 = vmatpush2.msra.mxu0 0.0
      %1568 = vmatprep.subr.mxu0 0.0
      %1569 = vmatpush2.msra.mxu0 0.0
      %1570 = vmatprep.subr.mxu0 0.0
      %1571 = vmatpush2.msra.mxu0 0.0
      %1572 = vmatprep.mubr.f32.mxu0 0.0
      %1573 = vmatmul.mubr.f32.gmra.mxu0 %v713
      %v1574 = vpop.f32.mrf.mxu0
      %v1575 = vadd.f32 0.0, %v1574
      %v1576 = vpop.f32.mrf.mxu0
      %1577 = vmatprep.mubr.f32.mxu0 0.0
      %1578 = vmatmul.mubr.f32.gmra.mxu0 %v715
      %v1579 = vpop.f32.mrf.mxu0
      %v1580 = vadd.f32 0.0, %v1579
      %v1581 = vpop.f32.mrf.mxu0
      %1582 = vmatprep.mubr.f32.mxu0 0.0
      %1583 = vmatmul.mubr.f32.gmra.mxu0 %v718
      %v1584 = vpop.f32.mrf.mxu0
      %v1585 = vadd.f32 0.0, %v1584
      %v1586 = vpop.f32.mrf.mxu0
      %1587 = vmatprep.mubr.f32.mxu0 0.0
      %1588 = vmatmul.mubr.f32.gmra.mxu0 %v720
      %v1589 = vpop.f32.mrf.mxu0
      %v1590 = vadd.f32 0.0, %v1589
      %v1591 = vpop.f32.mrf.mxu0
      %1592 = vmatprep.mubr.f32.mxu0 0.0
      %1593 = vmatmul.mubr.f32.gmra.mxu0 %v723
      %v1594 = vpop.f32.mrf.mxu0
      %v1595 = vadd.f32 0.0, %v1594
      %v1596 = vpop.f32.mrf.mxu0
      %1597 = vmatprep.mubr.f32.mxu0 0.0
      %1598 = vmatmul.mubr.f32.gmra.mxu0 %v725
      %v1599 = vpop.f32.mrf.mxu0
      %v1600 = vadd.f32 0.0, %v1599
      %v1601 = vpop.f32.mrf.mxu0
      %1602 = vmatprep.mubr.f32.mxu0 0.0
      %1603 = vmatmul.mubr.f32.gmra.mxu0 %v728
      %v1604 = vpop.f32.mrf.mxu0
      %v1605 = vadd.f32 0.0, %v1604
      %v1606 = vpop.f32.mrf.mxu0
      %1607 = vmatprep.mubr.f32.mxu0 0.0
      %1608 = vmatmul.mubr.f32.gmra.mxu0 %v730
      %v1609 = vpop.f32.mrf.mxu0
      %v1610 = vadd.f32 0.0, %v1609
      %v1611 = vpop.f32.mrf.mxu0
      %1612 = vmatprep.mubr.f32.mxu0 0.0
      %1613 = vmatmul.mubr.f32.gmra.mxu0 %v733
      %v1614 = vpop.f32.mrf.mxu0
      %v1615 = vadd.f32 0.0, %v1614
      %v1616 = vpop.f32.mrf.mxu0
      %1617 = vmatprep.mubr.f32.mxu0 0.0
      %1618 = vmatmul.mubr.f32.gmra.mxu0 %v735
      %v1619 = vpop.f32.mrf.mxu0
      %v1620 = vadd.f32 0.0, %v1619
      %v1621 = vpop.f32.mrf.mxu0
      %1622 = vmatprep.mubr.f32.mxu0 0.0
      %1623 = vmatmul.mubr.f32.gmra.mxu0 %v738
      %v1624 = vpop.f32.mrf.mxu0
      %v1625 = vadd.f32 0.0, %v1624
      %v1626 = vpop.f32.mrf.mxu0
      %1627 = vmatprep.mubr.f32.mxu0 0.0
      %1628 = vmatmul.mubr.f32.gmra.mxu0 %v740
      %v1629 = vpop.f32.mrf.mxu0
      %v1630 = vadd.f32 0.0, %v1629
      %v1631 = vpop.f32.mrf.mxu0
      %1632 = vmatprep.mubr.f32.mxu0 0.0
      %1633 = vmatmul.mubr.f32.gmra.mxu0 %v743
      %v1634 = vpop.f32.mrf.mxu0
      %v1635 = vadd.f32 0.0, %v1634
      %v1636 = vpop.f32.mrf.mxu0
      %1637 = vmatprep.mubr.f32.mxu0 0.0
      %1638 = vmatmul.mubr.f32.gmra.mxu0 %v745
      %v1639 = vpop.f32.mrf.mxu0
      %v1640 = vadd.f32 0.0, %v1639
      %v1641 = vpop.f32.mrf.mxu0
      %1642 = vmatprep.mubr.f32.mxu0 0.0
      %1643 = vmatmul.mubr.f32.gmra.mxu0 %v1486
      %v1644 = vpop.f32.mrf.mxu0
      %v1645 = vadd.f32 0.0, %v1644
      %v1646 = vpop.f32.mrf.mxu0
      %1647 = vmatprep.mubr.f32.mxu0 0.0
      %1648 = vmatmul.mubr.f32.gmra.mxu0 %v1488
      %v1649 = vpop.f32.mrf.mxu0
      %v1650 = vadd.f32 0.0, %v1649
      %v1651 = vpop.f32.mrf.mxu0
      %1652 = vdwg.mxu0
      %v1653 = vadd.f32 %v1466, %v1575
      %v1654 = vadd.f32 %v1467, %v1580
      %v1655 = vadd.f32 %v1468, %v1585
      %v1656 = vadd.f32 %v1469, %v1590
      %v1657 = vadd.f32 %v1470, %v1595
      %v1658 = vadd.f32 %v1471, %v1600
      %v1659 = vadd.f32 %v1472, %v1605
      %v1660 = vadd.f32 %v1473, %v1610
      %v1661 = vadd.f32 %v1474, %v1615
      %v1662 = vadd.f32 %v1475, %v1620
      %v1663 = vadd.f32 %v1476, %v1625
      %v1664 = vadd.f32 %v1477, %v1630
      %v1665 = vadd.f32 %v1478, %v1635
      %v1666 = vadd.f32 %v1479, %v1640
      %v1667 = vadd.f32 %v1480, %v1645
      %v1668 = vadd.f32 %v1481, %v1650
      %v1669 = vrot.slane %v661, 2
      %v1670 = vrot.slane %v619, 2
      %v1671 = vsel %vm1069, %v1669, %v1670
      %v1672 = vrot.slane %v671, 2
      %v1673 = vsel %vm1069, %v1670, %v1672
      %s1676 = scalar_lea.vmem %s5, 640
      %v1677 = vld [vmem:[%s1676] sm:$0xff]
      %v1678 = vld [vmem:[%s1676 + $0x8] sm:$0xff]
      %v1679 = vld [vmem:[%s1676 + $0x10] sm:$0xff]
      %v1680 = vld [vmem:[%s1676 + $0x18] sm:$0xff]
      %v1681 = vld [vmem:[%s1676 + $0x20] sm:$0xff]
      %v1682 = vld [vmem:[%s1676 + $0x28] sm:$0xff]
      %v1683 = vld [vmem:[%s1676 + $0x30] sm:$0xff]
      %v1684 = vld [vmem:[%s1676 + $0x38] sm:$0xff]
      %v1685 = vld [vmem:[%s1676 + $0x40] sm:$0xff]
      %v1686 = vld [vmem:[%s1676 + $0x48] sm:$0xff]
      %v1687 = vld [vmem:[%s1676 + $0x50] sm:$0xff]
      %v1688 = vld [vmem:[%s1676 + $0x58] sm:$0xff]
      %v1689 = vld [vmem:[%s1676 + $0x60] sm:$0xff]
      %v1690 = vld [vmem:[%s1676 + $0x68] sm:$0xff]
      %v1691 = vld [vmem:[%s1676 + $0x70] sm:$0xff]
      %v1692 = vld [vmem:[%s1676 + $0x78] sm:$0xff]
      %1693 = vmatprep.subr.mxu0 0.0
      %1694 = vmatpush1.msra.mxu0 %v1692
      %1695 = vmatprep.subr.mxu0 0.0
      %1696 = vmatpush1.msra.mxu0 %v1691
      %1697 = vmatprep.subr.mxu0 0.0
      %1698 = vmatpush1.msra.mxu0 %v1690
      %1699 = vmatprep.subr.mxu0 0.0
      %1700 = vmatpush1.msra.mxu0 %v1689
      %1701 = vmatprep.subr.mxu0 0.0
      %1702 = vmatpush1.msra.mxu0 %v1688
      %1703 = vmatprep.subr.mxu0 0.0
      %1704 = vmatpush1.msra.mxu0 %v1687
      %1705 = vmatprep.subr.mxu0 0.0
      %1706 = vmatpush1.msra.mxu0 %v1686
      %1707 = vmatprep.subr.mxu0 0.0
      %1708 = vmatpush1.msra.mxu0 %v1685
      %1709 = vmatprep.subr.mxu0 0.0
      %1710 = vmatpush1.msra.mxu0 %v1684
      %1711 = vmatprep.subr.mxu0 0.0
      %1712 = vmatpush1.msra.mxu0 %v1683
      %1713 = vmatprep.subr.mxu0 0.0
      %1714 = vmatpush1.msra.mxu0 %v1682
      %1715 = vmatprep.subr.mxu0 0.0
      %1716 = vmatpush1.msra.mxu0 %v1681
      %1717 = vmatprep.subr.mxu0 0.0
      %1718 = vmatpush1.msra.mxu0 %v1680
      %1719 = vmatprep.subr.mxu0 0.0
      %1720 = vmatpush1.msra.mxu0 %v1679
      %1721 = vmatprep.subr.mxu0 0.0
      %1722 = vmatpush1.msra.mxu0 %v1678
      %1723 = vmatprep.subr.mxu0 0.0
      %1724 = vmatpush1.msra.mxu0 %v1677
      %1725 = vmatprep.subr.mxu0 0.0
      %1726 = vmatpush2.msra.mxu0 0.0
      %1727 = vmatprep.subr.mxu0 0.0
      %1728 = vmatpush2.msra.mxu0 0.0
      %1729 = vmatprep.subr.mxu0 0.0
      %1730 = vmatpush2.msra.mxu0 0.0
      %1731 = vmatprep.subr.mxu0 0.0
      %1732 = vmatpush2.msra.mxu0 0.0
      %1733 = vmatprep.subr.mxu0 0.0
      %1734 = vmatpush2.msra.mxu0 0.0
      %1735 = vmatprep.subr.mxu0 0.0
      %1736 = vmatpush2.msra.mxu0 0.0
      %1737 = vmatprep.subr.mxu0 0.0
      %1738 = vmatpush2.msra.mxu0 0.0
      %1739 = vmatprep.subr.mxu0 0.0
      %1740 = vmatpush2.msra.mxu0 0.0
      %1741 = vmatprep.subr.mxu0 0.0
      %1742 = vmatpush2.msra.mxu0 0.0
      %1743 = vmatprep.subr.mxu0 0.0
      %1744 = vmatpush2.msra.mxu0 0.0
      %1745 = vmatprep.subr.mxu0 0.0
      %1746 = vmatpush2.msra.mxu0 0.0
      %1747 = vmatprep.subr.mxu0 0.0
      %1748 = vmatpush2.msra.mxu0 0.0
      %1749 = vmatprep.subr.mxu0 0.0
      %1750 = vmatpush2.msra.mxu0 0.0
      %1751 = vmatprep.subr.mxu0 0.0
      %1752 = vmatpush2.msra.mxu0 0.0
      %1753 = vmatprep.subr.mxu0 0.0
      %1754 = vmatpush2.msra.mxu0 0.0
      %1755 = vmatprep.subr.mxu0 0.0
      %1756 = vmatpush2.msra.mxu0 0.0
      %1757 = vmatprep.mubr.f32.mxu0 0.0
      %1758 = vmatmul.mubr.f32.gmra.mxu0 %v1077
      %v1759 = vpop.f32.mrf.mxu0
      %v1760 = vadd.f32 0.0, %v1759
      %v1761 = vpop.f32.mrf.mxu0
      %1762 = vmatprep.mubr.f32.mxu0 0.0
      %1763 = vmatmul.mubr.f32.gmra.mxu0 %v1079
      %v1764 = vpop.f32.mrf.mxu0
      %v1765 = vadd.f32 0.0, %v1764
      %v1766 = vpop.f32.mrf.mxu0
      %1767 = vmatprep.mubr.f32.mxu0 0.0
      %1768 = vmatmul.mubr.f32.gmra.mxu0 %v1082
      %v1769 = vpop.f32.mrf.mxu0
      %v1770 = vadd.f32 0.0, %v1769
      %v1771 = vpop.f32.mrf.mxu0
      %1772 = vmatprep.mubr.f32.mxu0 0.0
      %1773 = vmatmul.mubr.f32.gmra.mxu0 %v1084
      %v1774 = vpop.f32.mrf.mxu0
      %v1775 = vadd.f32 0.0, %v1774
      %v1776 = vpop.f32.mrf.mxu0
      %1777 = vmatprep.mubr.f32.mxu0 0.0
      %1778 = vmatmul.mubr.f32.gmra.mxu0 %v1087
      %v1779 = vpop.f32.mrf.mxu0
      %v1780 = vadd.f32 0.0, %v1779
      %v1781 = vpop.f32.mrf.mxu0
      %1782 = vmatprep.mubr.f32.mxu0 0.0
      %1783 = vmatmul.mubr.f32.gmra.mxu0 %v1089
      %v1784 = vpop.f32.mrf.mxu0
      %v1785 = vadd.f32 0.0, %v1784
      %v1786 = vpop.f32.mrf.mxu0
      %1787 = vmatprep.mubr.f32.mxu0 0.0
      %1788 = vmatmul.mubr.f32.gmra.mxu0 %v1092
      %v1789 = vpop.f32.mrf.mxu0
      %v1790 = vadd.f32 0.0, %v1789
      %v1791 = vpop.f32.mrf.mxu0
      %1792 = vmatprep.mubr.f32.mxu0 0.0
      %1793 = vmatmul.mubr.f32.gmra.mxu0 %v1094
      %v1794 = vpop.f32.mrf.mxu0
      %v1795 = vadd.f32 0.0, %v1794
      %v1796 = vpop.f32.mrf.mxu0
      %1797 = vmatprep.mubr.f32.mxu0 0.0
      %1798 = vmatmul.mubr.f32.gmra.mxu0 %v1097
      %v1799 = vpop.f32.mrf.mxu0
      %v1800 = vadd.f32 0.0, %v1799
      %v1801 = vpop.f32.mrf.mxu0
      %1802 = vmatprep.mubr.f32.mxu0 0.0
      %1803 = vmatmul.mubr.f32.gmra.mxu0 %v1099
      %v1804 = vpop.f32.mrf.mxu0
      %v1805 = vadd.f32 0.0, %v1804
      %v1806 = vpop.f32.mrf.mxu0
      %1807 = vmatprep.mubr.f32.mxu0 0.0
      %1808 = vmatmul.mubr.f32.gmra.mxu0 %v1102
      %v1809 = vpop.f32.mrf.mxu0
      %v1810 = vadd.f32 0.0, %v1809
      %v1811 = vpop.f32.mrf.mxu0
      %1812 = vmatprep.mubr.f32.mxu0 0.0
      %1813 = vmatmul.mubr.f32.gmra.mxu0 %v1104
      %v1814 = vpop.f32.mrf.mxu0
      %v1815 = vadd.f32 0.0, %v1814
      %v1816 = vpop.f32.mrf.mxu0
      %1817 = vmatprep.mubr.f32.mxu0 0.0
      %1818 = vmatmul.mubr.f32.gmra.mxu0 %v1107
      %v1819 = vpop.f32.mrf.mxu0
      %v1820 = vadd.f32 0.0, %v1819
      %v1821 = vpop.f32.mrf.mxu0
      %1822 = vmatprep.mubr.f32.mxu0 0.0
      %1823 = vmatmul.mubr.f32.gmra.mxu0 %v1109
      %v1824 = vpop.f32.mrf.mxu0
      %v1825 = vadd.f32 0.0, %v1824
      %v1826 = vpop.f32.mrf.mxu0
      %1827 = vmatprep.mubr.f32.mxu0 0.0
      %1828 = vmatmul.mubr.f32.gmra.mxu0 %v1671
      %v1829 = vpop.f32.mrf.mxu0
      %v1830 = vadd.f32 0.0, %v1829
      %v1831 = vpop.f32.mrf.mxu0
      %1832 = vmatprep.mubr.f32.mxu0 0.0
      %1833 = vmatmul.mubr.f32.gmra.mxu0 %v1673
      %v1834 = vpop.f32.mrf.mxu0
      %v1835 = vadd.f32 0.0, %v1834
      %v1836 = vpop.f32.mrf.mxu0
      %1837 = vdwg.mxu0
      %v1838 = vadd.f32 %v1653, %v1760
      %v1839 = vadd.f32 %v1654, %v1765
      %v1840 = vadd.f32 %v1655, %v1770
      %v1841 = vadd.f32 %v1656, %v1775
      %v1842 = vadd.f32 %v1657, %v1780
      %v1843 = vadd.f32 %v1658, %v1785
      %v1844 = vadd.f32 %v1659, %v1790
      %v1845 = vadd.f32 %v1660, %v1795
      %v1846 = vadd.f32 %v1661, %v1800
      %v1847 = vadd.f32 %v1662, %v1805
      %v1848 = vadd.f32 %v1663, %v1810
      %v1849 = vadd.f32 %v1664, %v1815
      %v1850 = vadd.f32 %v1665, %v1820
      %v1851 = vadd.f32 %v1666, %v1825
      %v1852 = vadd.f32 %v1667, %v1830
      %v1853 = vadd.f32 %v1668, %v1835
      %s1854 = scalar_lea.vmem %s5, 768
      %v1855 = vld [vmem:[%s1854] sm:$0xff]
      %v1856 = vld [vmem:[%s1854 + $0x8] sm:$0xff]
      %v1857 = vld [vmem:[%s1854 + $0x10] sm:$0xff]
      %v1858 = vld [vmem:[%s1854 + $0x18] sm:$0xff]
      %v1859 = vld [vmem:[%s1854 + $0x20] sm:$0xff]
      %v1860 = vld [vmem:[%s1854 + $0x28] sm:$0xff]
      %v1861 = vld [vmem:[%s1854 + $0x30] sm:$0xff]
      %v1862 = vld [vmem:[%s1854 + $0x38] sm:$0xff]
      %v1863 = vld [vmem:[%s1854 + $0x40] sm:$0xff]
      %v1864 = vld [vmem:[%s1854 + $0x48] sm:$0xff]
      %v1865 = vld [vmem:[%s1854 + $0x50] sm:$0xff]
      %v1866 = vld [vmem:[%s1854 + $0x58] sm:$0xff]
      %v1867 = vld [vmem:[%s1854 + $0x60] sm:$0xff]
      %v1868 = vld [vmem:[%s1854 + $0x68] sm:$0xff]
      %v1869 = vld [vmem:[%s1854 + $0x70] sm:$0xff]
      %v1870 = vld [vmem:[%s1854 + $0x78] sm:$0xff]
      %1871 = vmatprep.subr.mxu0 0.0
      %1872 = vmatpush1.msra.mxu0 %v1870
      %1873 = vmatprep.subr.mxu0 0.0
      %1874 = vmatpush1.msra.mxu0 %v1869
      %1875 = vmatprep.subr.mxu0 0.0
      %1876 = vmatpush1.msra.mxu0 %v1868
      %1877 = vmatprep.subr.mxu0 0.0
      %1878 = vmatpush1.msra.mxu0 %v1867
      %1879 = vmatprep.subr.mxu0 0.0
      %1880 = vmatpush1.msra.mxu0 %v1866
      %1881 = vmatprep.subr.mxu0 0.0
      %1882 = vmatpush1.msra.mxu0 %v1865
      %1883 = vmatprep.subr.mxu0 0.0
      %1884 = vmatpush1.msra.mxu0 %v1864
      %1885 = vmatprep.subr.mxu0 0.0
      %1886 = vmatpush1.msra.mxu0 %v1863
      %1887 = vmatprep.subr.mxu0 0.0
      %1888 = vmatpush1.msra.mxu0 %v1862
      %1889 = vmatprep.subr.mxu0 0.0
      %1890 = vmatpush1.msra.mxu0 %v1861
      %1891 = vmatprep.subr.mxu0 0.0
      %1892 = vmatpush1.msra.mxu0 %v1860
      %1893 = vmatprep.subr.mxu0 0.0
      %1894 = vmatpush1.msra.mxu0 %v1859
      %1895 = vmatprep.subr.mxu0 0.0
      %1896 = vmatpush1.msra.mxu0 %v1858
      %1897 = vmatprep.subr.mxu0 0.0
      %1898 = vmatpush1.msra.mxu0 %v1857
      %1899 = vmatprep.subr.mxu0 0.0
      %1900 = vmatpush1.msra.mxu0 %v1856
      %1901 = vmatprep.subr.mxu0 0.0
      %1902 = vmatpush1.msra.mxu0 %v1855
      %1903 = vmatprep.subr.mxu0 0.0
      %1904 = vmatpush2.msra.mxu0 0.0
      %1905 = vmatprep.subr.mxu0 0.0
      %1906 = vmatpush2.msra.mxu0 0.0
      %1907 = vmatprep.subr.mxu0 0.0
      %1908 = vmatpush2.msra.mxu0 0.0
      %1909 = vmatprep.subr.mxu0 0.0
      %1910 = vmatpush2.msra.mxu0 0.0
      %1911 = vmatprep.subr.mxu0 0.0
      %1912 = vmatpush2.msra.mxu0 0.0
      %1913 = vmatprep.subr.mxu0 0.0
      %1914 = vmatpush2.msra.mxu0 0.0
      %1915 = vmatprep.subr.mxu0 0.0
      %1916 = vmatpush2.msra.mxu0 0.0
      %1917 = vmatprep.subr.mxu0 0.0
      %1918 = vmatpush2.msra.mxu0 0.0
      %1919 = vmatprep.subr.mxu0 0.0
      %1920 = vmatpush2.msra.mxu0 0.0
      %1921 = vmatprep.subr.mxu0 0.0
      %1922 = vmatpush2.msra.mxu0 0.0
      %1923 = vmatprep.subr.mxu0 0.0
      %1924 = vmatpush2.msra.mxu0 0.0
      %1925 = vmatprep.subr.mxu0 0.0
      %1926 = vmatpush2.msra.mxu0 0.0
      %1927 = vmatprep.subr.mxu0 0.0
      %1928 = vmatpush2.msra.mxu0 0.0
      %1929 = vmatprep.subr.mxu0 0.0
      %1930 = vmatpush2.msra.mxu0 0.0
      %1931 = vmatprep.subr.mxu0 0.0
      %1932 = vmatpush2.msra.mxu0 0.0
      %1933 = vmatprep.subr.mxu0 0.0
      %1934 = vmatpush2.msra.mxu0 0.0
      %1935 = vmatprep.mubr.f32.mxu0 0.0
      %1936 = vmatmul.mubr.f32.gmra.mxu0 %v655
      %v1937 = vpop.f32.mrf.mxu0
      %v1938 = vadd.f32 0.0, %v1937
      %v1939 = vpop.f32.mrf.mxu0
      %1940 = vmatprep.mubr.f32.mxu0 0.0
      %1941 = vmatmul.mubr.f32.gmra.mxu0 %v601
      %v1942 = vpop.f32.mrf.mxu0
      %v1943 = vadd.f32 0.0, %v1942
      %v1944 = vpop.f32.mrf.mxu0
      %1945 = vmatprep.mubr.f32.mxu0 0.0
      %1946 = vmatmul.mubr.f32.gmra.mxu0 %v656
      %v1947 = vpop.f32.mrf.mxu0
      %v1948 = vadd.f32 0.0, %v1947
      %v1949 = vpop.f32.mrf.mxu0
      %1950 = vmatprep.mubr.f32.mxu0 0.0
      %1951 = vmatmul.mubr.f32.gmra.mxu0 %v604
      %v1952 = vpop.f32.mrf.mxu0
      %v1953 = vadd.f32 0.0, %v1952
      %v1954 = vpop.f32.mrf.mxu0
      %1955 = vmatprep.mubr.f32.mxu0 0.0
      %1956 = vmatmul.mubr.f32.gmra.mxu0 %v657
      %v1957 = vpop.f32.mrf.mxu0
      %v1958 = vadd.f32 0.0, %v1957
      %v1959 = vpop.f32.mrf.mxu0
      %1960 = vmatprep.mubr.f32.mxu0 0.0
      %1961 = vmatmul.mubr.f32.gmra.mxu0 %v607
      %v1962 = vpop.f32.mrf.mxu0
      %v1963 = vadd.f32 0.0, %v1962
      %v1964 = vpop.f32.mrf.mxu0
      %1965 = vmatprep.mubr.f32.mxu0 0.0
      %1966 = vmatmul.mubr.f32.gmra.mxu0 %v658
      %v1967 = vpop.f32.mrf.mxu0
      %v1968 = vadd.f32 0.0, %v1967
      %v1969 = vpop.f32.mrf.mxu0
      %1970 = vmatprep.mubr.f32.mxu0 0.0
      %1971 = vmatmul.mubr.f32.gmra.mxu0 %v610
      %v1972 = vpop.f32.mrf.mxu0
      %v1973 = vadd.f32 0.0, %v1972
      %v1974 = vpop.f32.mrf.mxu0
      %1975 = vmatprep.mubr.f32.mxu0 0.0
      %1976 = vmatmul.mubr.f32.gmra.mxu0 %v659
      %v1977 = vpop.f32.mrf.mxu0
      %v1978 = vadd.f32 0.0, %v1977
      %v1979 = vpop.f32.mrf.mxu0
      %1980 = vmatprep.mubr.f32.mxu0 0.0
      %1981 = vmatmul.mubr.f32.gmra.mxu0 %v613
      %v1982 = vpop.f32.mrf.mxu0
      %v1983 = vadd.f32 0.0, %v1982
      %v1984 = vpop.f32.mrf.mxu0
      %1985 = vmatprep.mubr.f32.mxu0 0.0
      %1986 = vmatmul.mubr.f32.gmra.mxu0 %v660
      %v1987 = vpop.f32.mrf.mxu0
      %v1988 = vadd.f32 0.0, %v1987
      %v1989 = vpop.f32.mrf.mxu0
      %1990 = vmatprep.mubr.f32.mxu0 0.0
      %1991 = vmatmul.mubr.f32.gmra.mxu0 %v616
      %v1992 = vpop.f32.mrf.mxu0
      %v1993 = vadd.f32 0.0, %v1992
      %v1994 = vpop.f32.mrf.mxu0
      %1995 = vmatprep.mubr.f32.mxu0 0.0
      %1996 = vmatmul.mubr.f32.gmra.mxu0 %v661
      %v1997 = vpop.f32.mrf.mxu0
      %v1998 = vadd.f32 0.0, %v1997
      %v1999 = vpop.f32.mrf.mxu0
      %2000 = vmatprep.mubr.f32.mxu0 0.0
      %2001 = vmatmul.mubr.f32.gmra.mxu0 %v619
      %v2002 = vpop.f32.mrf.mxu0
      %v2003 = vadd.f32 0.0, %v2002
      %v2004 = vpop.f32.mrf.mxu0
      %2005 = vmatprep.mubr.f32.mxu0 0.0
      %2006 = vmatmul.mubr.f32.gmra.mxu0 %v662
      %v2007 = vpop.f32.mrf.mxu0
      %v2008 = vadd.f32 0.0, %v2007
      %v2009 = vpop.f32.mrf.mxu0
      %2010 = vmatprep.mubr.f32.mxu0 0.0
      %2011 = vmatmul.mubr.f32.gmra.mxu0 %v622
      %v2012 = vpop.f32.mrf.mxu0
      %v2013 = vadd.f32 0.0, %v2012
      %v2014 = vpop.f32.mrf.mxu0
      %2015 = vdwg.mxu0
      %v2016 = vadd.f32 %v1838, %v1938
      %v2017 = vadd.f32 %v1839, %v1943
      %v2018 = vadd.f32 %v1840, %v1948
      %v2019 = vadd.f32 %v1841, %v1953
      %v2020 = vadd.f32 %v1842, %v1958
      %v2021 = vadd.f32 %v1843, %v1963
      %v2022 = vadd.f32 %v1844, %v1968
      %v2023 = vadd.f32 %v1845, %v1973
      %v2024 = vadd.f32 %v1846, %v1978
      %v2025 = vadd.f32 %v1847, %v1983
      %v2026 = vadd.f32 %v1848, %v1988
      %v2027 = vadd.f32 %v1849, %v1993
      %v2028 = vadd.f32 %v1850, %v1998
      %v2029 = vadd.f32 %v1851, %v2003
      %v2030 = vadd.f32 %v1852, %v2008
      %v2031 = vadd.f32 %v1853, %v2013
      %v2034 = vrot.slane %v662, 1
      %v2035 = vrot.slane %v622, 1
      %v2036 = vsel %vm705, %v2034, %v2035
      %v2037 = vrot.slane %v672, 1
      %v2038 = vsel %vm705, %v2035, %v2037
      %s2041 = scalar_lea.vmem %s5, 896
      %v2042 = vld [vmem:[%s2041] sm:$0xff]
      %v2043 = vld [vmem:[%s2041 + $0x8] sm:$0xff]
      %v2044 = vld [vmem:[%s2041 + $0x10] sm:$0xff]
      %v2045 = vld [vmem:[%s2041 + $0x18] sm:$0xff]
      %v2046 = vld [vmem:[%s2041 + $0x20] sm:$0xff]
      %v2047 = vld [vmem:[%s2041 + $0x28] sm:$0xff]
      %v2048 = vld [vmem:[%s2041 + $0x30] sm:$0xff]
      %v2049 = vld [vmem:[%s2041 + $0x38] sm:$0xff]
      %v2050 = vld [vmem:[%s2041 + $0x40] sm:$0xff]
      %v2051 = vld [vmem:[%s2041 + $0x48] sm:$0xff]
      %v2052 = vld [vmem:[%s2041 + $0x50] sm:$0xff]
      %v2053 = vld [vmem:[%s2041 + $0x58] sm:$0xff]
      %v2054 = vld [vmem:[%s2041 + $0x60] sm:$0xff]
      %v2055 = vld [vmem:[%s2041 + $0x68] sm:$0xff]
      %v2056 = vld [vmem:[%s2041 + $0x70] sm:$0xff]
      %v2057 = vld [vmem:[%s2041 + $0x78] sm:$0xff]
      %2058 = vmatprep.subr.mxu0 0.0
      %2059 = vmatpush1.msra.mxu0 %v2057
      %2060 = vmatprep.subr.mxu0 0.0
      %2061 = vmatpush1.msra.mxu0 %v2056
      %2062 = vmatprep.subr.mxu0 0.0
      %2063 = vmatpush1.msra.mxu0 %v2055
      %2064 = vmatprep.subr.mxu0 0.0
      %2065 = vmatpush1.msra.mxu0 %v2054
      %2066 = vmatprep.subr.mxu0 0.0
      %2067 = vmatpush1.msra.mxu0 %v2053
      %2068 = vmatprep.subr.mxu0 0.0
      %2069 = vmatpush1.msra.mxu0 %v2052
      %2070 = vmatprep.subr.mxu0 0.0
      %2071 = vmatpush1.msra.mxu0 %v2051
      %2072 = vmatprep.subr.mxu0 0.0
      %2073 = vmatpush1.msra.mxu0 %v2050
      %2074 = vmatprep.subr.mxu0 0.0
      %2075 = vmatpush1.msra.mxu0 %v2049
      %2076 = vmatprep.subr.mxu0 0.0
      %2077 = vmatpush1.msra.mxu0 %v2048
      %2078 = vmatprep.subr.mxu0 0.0
      %2079 = vmatpush1.msra.mxu0 %v2047
      %2080 = vmatprep.subr.mxu0 0.0
      %2081 = vmatpush1.msra.mxu0 %v2046
      %2082 = vmatprep.subr.mxu0 0.0
      %2083 = vmatpush1.msra.mxu0 %v2045
      %2084 = vmatprep.subr.mxu0 0.0
      %2085 = vmatpush1.msra.mxu0 %v2044
      %2086 = vmatprep.subr.mxu0 0.0
      %2087 = vmatpush1.msra.mxu0 %v2043
      %2088 = vmatprep.subr.mxu0 0.0
      %2089 = vmatpush1.msra.mxu0 %v2042
      %2090 = vmatprep.subr.mxu0 0.0
      %2091 = vmatpush2.msra.mxu0 0.0
      %2092 = vmatprep.subr.mxu0 0.0
      %2093 = vmatpush2.msra.mxu0 0.0
      %2094 = vmatprep.subr.mxu0 0.0
      %2095 = vmatpush2.msra.mxu0 0.0
      %2096 = vmatprep.subr.mxu0 0.0
      %2097 = vmatpush2.msra.mxu0 0.0
      %2098 = vmatprep.subr.mxu0 0.0
      %2099 = vmatpush2.msra.mxu0 0.0
      %2100 = vmatprep.subr.mxu0 0.0
      %2101 = vmatpush2.msra.mxu0 0.0
      %2102 = vmatprep.subr.mxu0 0.0
      %2103 = vmatpush2.msra.mxu0 0.0
      %2104 = vmatprep.subr.mxu0 0.0
      %2105 = vmatpush2.msra.mxu0 0.0
      %2106 = vmatprep.subr.mxu0 0.0
      %2107 = vmatpush2.msra.mxu0 0.0
      %2108 = vmatprep.subr.mxu0 0.0
      %2109 = vmatpush2.msra.mxu0 0.0
      %2110 = vmatprep.subr.mxu0 0.0
      %2111 = vmatpush2.msra.mxu0 0.0
      %2112 = vmatprep.subr.mxu0 0.0
      %2113 = vmatpush2.msra.mxu0 0.0
      %2114 = vmatprep.subr.mxu0 0.0
      %2115 = vmatpush2.msra.mxu0 0.0
      %2116 = vmatprep.subr.mxu0 0.0
      %2117 = vmatpush2.msra.mxu0 0.0
      %2118 = vmatprep.subr.mxu0 0.0
      %2119 = vmatpush2.msra.mxu0 0.0
      %2120 = vmatprep.subr.mxu0 0.0
      %2121 = vmatpush2.msra.mxu0 0.0
      %2122 = vmatprep.mubr.f32.mxu0 0.0
      %2123 = vmatmul.mubr.f32.gmra.mxu0 %v718
      %v2124 = vpop.f32.mrf.mxu0
      %v2125 = vadd.f32 0.0, %v2124
      %v2126 = vpop.f32.mrf.mxu0
      %2127 = vmatprep.mubr.f32.mxu0 0.0
      %2128 = vmatmul.mubr.f32.gmra.mxu0 %v720
      %v2129 = vpop.f32.mrf.mxu0
      %v2130 = vadd.f32 0.0, %v2129
      %v2131 = vpop.f32.mrf.mxu0
      %2132 = vmatprep.mubr.f32.mxu0 0.0
      %2133 = vmatmul.mubr.f32.gmra.mxu0 %v723
      %v2134 = vpop.f32.mrf.mxu0
      %v2135 = vadd.f32 0.0, %v2134
      %v2136 = vpop.f32.mrf.mxu0
      %2137 = vmatprep.mubr.f32.mxu0 0.0
      %2138 = vmatmul.mubr.f32.gmra.mxu0 %v725
      %v2139 = vpop.f32.mrf.mxu0
      %v2140 = vadd.f32 0.0, %v2139
      %v2141 = vpop.f32.mrf.mxu0
      %2142 = vmatprep.mubr.f32.mxu0 0.0
      %2143 = vmatmul.mubr.f32.gmra.mxu0 %v728
      %v2144 = vpop.f32.mrf.mxu0
      %v2145 = vadd.f32 0.0, %v2144
      %v2146 = vpop.f32.mrf.mxu0
      %2147 = vmatprep.mubr.f32.mxu0 0.0
      %2148 = vmatmul.mubr.f32.gmra.mxu0 %v730
      %v2149 = vpop.f32.mrf.mxu0
      %v2150 = vadd.f32 0.0, %v2149
      %v2151 = vpop.f32.mrf.mxu0
      %2152 = vmatprep.mubr.f32.mxu0 0.0
      %2153 = vmatmul.mubr.f32.gmra.mxu0 %v733
      %v2154 = vpop.f32.mrf.mxu0
      %v2155 = vadd.f32 0.0, %v2154
      %v2156 = vpop.f32.mrf.mxu0
      %2157 = vmatprep.mubr.f32.mxu0 0.0
      %2158 = vmatmul.mubr.f32.gmra.mxu0 %v735
      %v2159 = vpop.f32.mrf.mxu0
      %v2160 = vadd.f32 0.0, %v2159
      %v2161 = vpop.f32.mrf.mxu0
      %2162 = vmatprep.mubr.f32.mxu0 0.0
      %2163 = vmatmul.mubr.f32.gmra.mxu0 %v738
      %v2164 = vpop.f32.mrf.mxu0
      %v2165 = vadd.f32 0.0, %v2164
      %v2166 = vpop.f32.mrf.mxu0
      %2167 = vmatprep.mubr.f32.mxu0 0.0
      %2168 = vmatmul.mubr.f32.gmra.mxu0 %v740
      %v2169 = vpop.f32.mrf.mxu0
      %v2170 = vadd.f32 0.0, %v2169
      %v2171 = vpop.f32.mrf.mxu0
      %2172 = vmatprep.mubr.f32.mxu0 0.0
      %2173 = vmatmul.mubr.f32.gmra.mxu0 %v743
      %v2174 = vpop.f32.mrf.mxu0
      %v2175 = vadd.f32 0.0, %v2174
      %v2176 = vpop.f32.mrf.mxu0
      %2177 = vmatprep.mubr.f32.mxu0 0.0
      %2178 = vmatmul.mubr.f32.gmra.mxu0 %v745
      %v2179 = vpop.f32.mrf.mxu0
      %v2180 = vadd.f32 0.0, %v2179
      %v2181 = vpop.f32.mrf.mxu0
      %2182 = vmatprep.mubr.f32.mxu0 0.0
      %2183 = vmatmul.mubr.f32.gmra.mxu0 %v1486
      %v2184 = vpop.f32.mrf.mxu0
      %v2185 = vadd.f32 0.0, %v2184
      %v2186 = vpop.f32.mrf.mxu0
      %2187 = vmatprep.mubr.f32.mxu0 0.0
      %2188 = vmatmul.mubr.f32.gmra.mxu0 %v1488
      %v2189 = vpop.f32.mrf.mxu0
      %v2190 = vadd.f32 0.0, %v2189
      %v2191 = vpop.f32.mrf.mxu0
      %2192 = vmatprep.mubr.f32.mxu0 0.0
      %2193 = vmatmul.mubr.f32.gmra.mxu0 %v2036
      %v2194 = vpop.f32.mrf.mxu0
      %v2195 = vadd.f32 0.0, %v2194
      %v2196 = vpop.f32.mrf.mxu0
      %2197 = vmatprep.mubr.f32.mxu0 0.0
      %2198 = vmatmul.mubr.f32.gmra.mxu0 %v2038
      %v2199 = vpop.f32.mrf.mxu0
      %v2200 = vadd.f32 0.0, %v2199
      %v2201 = vpop.f32.mrf.mxu0
      %2202 = vdwg.mxu0
      %v2203 = vadd.f32 %v2016, %v2125
      %v2204 = vadd.f32 %v2017, %v2130
      %v2205 = vadd.f32 %v2018, %v2135
      %v2206 = vadd.f32 %v2019, %v2140
      %v2207 = vadd.f32 %v2020, %v2145
      %v2208 = vadd.f32 %v2021, %v2150
      %v2209 = vadd.f32 %v2022, %v2155
      %v2210 = vadd.f32 %v2023, %v2160
      %v2211 = vadd.f32 %v2024, %v2165
      %v2212 = vadd.f32 %v2025, %v2170
      %v2213 = vadd.f32 %v2026, %v2175
      %v2214 = vadd.f32 %v2027, %v2180
      %v2215 = vadd.f32 %v2028, %v2185
      %v2216 = vadd.f32 %v2029, %v2190
      %v2217 = vadd.f32 %v2030, %v2195
      %v2218 = vadd.f32 %v2031, %v2200
      %v2219 = vrot.slane %v662, 2
      %v2220 = vrot.slane %v622, 2
      %v2221 = vsel %vm1069, %v2219, %v2220
      %v2222 = vrot.slane %v672, 2
      %v2223 = vsel %vm1069, %v2220, %v2222
      %s2226 = scalar_lea.vmem %s5, 1024
      %v2227 = vld [vmem:[%s2226] sm:$0xff]
      %v2228 = vld [vmem:[%s2226 + $0x8] sm:$0xff]
      %v2229 = vld [vmem:[%s2226 + $0x10] sm:$0xff]
      %v2230 = vld [vmem:[%s2226 + $0x18] sm:$0xff]
      %v2231 = vld [vmem:[%s2226 + $0x20] sm:$0xff]
      %v2232 = vld [vmem:[%s2226 + $0x28] sm:$0xff]
      %v2233 = vld [vmem:[%s2226 + $0x30] sm:$0xff]
      %v2234 = vld [vmem:[%s2226 + $0x38] sm:$0xff]
      %v2235 = vld [vmem:[%s2226 + $0x40] sm:$0xff]
      %v2236 = vld [vmem:[%s2226 + $0x48] sm:$0xff]
      %v2237 = vld [vmem:[%s2226 + $0x50] sm:$0xff]
      %v2238 = vld [vmem:[%s2226 + $0x58] sm:$0xff]
      %v2239 = vld [vmem:[%s2226 + $0x60] sm:$0xff]
      %v2240 = vld [vmem:[%s2226 + $0x68] sm:$0xff]
      %v2241 = vld [vmem:[%s2226 + $0x70] sm:$0xff]
      %v2242 = vld [vmem:[%s2226 + $0x78] sm:$0xff]
      %2243 = vmatprep.subr.mxu0 0.0
      %2244 = vmatpush1.msra.mxu0 %v2242
      %2245 = vmatprep.subr.mxu0 0.0
      %2246 = vmatpush1.msra.mxu0 %v2241
      %2247 = vmatprep.subr.mxu0 0.0
      %2248 = vmatpush1.msra.mxu0 %v2240
      %2249 = vmatprep.subr.mxu0 0.0
      %2250 = vmatpush1.msra.mxu0 %v2239
      %2251 = vmatprep.subr.mxu0 0.0
      %2252 = vmatpush1.msra.mxu0 %v2238
      %2253 = vmatprep.subr.mxu0 0.0
      %2254 = vmatpush1.msra.mxu0 %v2237
      %2255 = vmatprep.subr.mxu0 0.0
      %2256 = vmatpush1.msra.mxu0 %v2236
      %2257 = vmatprep.subr.mxu0 0.0
      %2258 = vmatpush1.msra.mxu0 %v2235
      %2259 = vmatprep.subr.mxu0 0.0
      %2260 = vmatpush1.msra.mxu0 %v2234
      %2261 = vmatprep.subr.mxu0 0.0
      %2262 = vmatpush1.msra.mxu0 %v2233
      %2263 = vmatprep.subr.mxu0 0.0
      %2264 = vmatpush1.msra.mxu0 %v2232
      %2265 = vmatprep.subr.mxu0 0.0
      %2266 = vmatpush1.msra.mxu0 %v2231
      %2267 = vmatprep.subr.mxu0 0.0
      %2268 = vmatpush1.msra.mxu0 %v2230
      %2269 = vmatprep.subr.mxu0 0.0
      %2270 = vmatpush1.msra.mxu0 %v2229
      %2271 = vmatprep.subr.mxu0 0.0
      %2272 = vmatpush1.msra.mxu0 %v2228
      %2273 = vmatprep.subr.mxu0 0.0
      %2274 = vmatpush1.msra.mxu0 %v2227
      %2275 = vmatprep.subr.mxu0 0.0
      %2276 = vmatpush2.msra.mxu0 0.0
      %2277 = vmatprep.subr.mxu0 0.0
      %2278 = vmatpush2.msra.mxu0 0.0
      %2279 = vmatprep.subr.mxu0 0.0
      %2280 = vmatpush2.msra.mxu0 0.0
      %2281 = vmatprep.subr.mxu0 0.0
      %2282 = vmatpush2.msra.mxu0 0.0
      %2283 = vmatprep.subr.mxu0 0.0
      %2284 = vmatpush2.msra.mxu0 0.0
      %2285 = vmatprep.subr.mxu0 0.0
      %2286 = vmatpush2.msra.mxu0 0.0
      %2287 = vmatprep.subr.mxu0 0.0
      %2288 = vmatpush2.msra.mxu0 0.0
      %2289 = vmatprep.subr.mxu0 0.0
      %2290 = vmatpush2.msra.mxu0 0.0
      %2291 = vmatprep.subr.mxu0 0.0
      %2292 = vmatpush2.msra.mxu0 0.0
      %2293 = vmatprep.subr.mxu0 0.0
      %2294 = vmatpush2.msra.mxu0 0.0
      %2295 = vmatprep.subr.mxu0 0.0
      %2296 = vmatpush2.msra.mxu0 0.0
      %2297 = vmatprep.subr.mxu0 0.0
      %2298 = vmatpush2.msra.mxu0 0.0
      %2299 = vmatprep.subr.mxu0 0.0
      %2300 = vmatpush2.msra.mxu0 0.0
      %2301 = vmatprep.subr.mxu0 0.0
      %2302 = vmatpush2.msra.mxu0 0.0
      %2303 = vmatprep.subr.mxu0 0.0
      %2304 = vmatpush2.msra.mxu0 0.0
      %2305 = vmatprep.subr.mxu0 0.0
      %2306 = vmatpush2.msra.mxu0 0.0
      %2307 = vmatprep.mubr.f32.mxu0 0.0
      %2308 = vmatmul.mubr.f32.gmra.mxu0 %v1082
      %v2309 = vpop.f32.mrf.mxu0
      %v2310 = vadd.f32 0.0, %v2309
      %v2311 = vpop.f32.mrf.mxu0
      %2312 = vmatprep.mubr.f32.mxu0 0.0
      %2313 = vmatmul.mubr.f32.gmra.mxu0 %v1084
      %v2314 = vpop.f32.mrf.mxu0
      %v2315 = vadd.f32 0.0, %v2314
      %v2316 = vpop.f32.mrf.mxu0
      %2317 = vmatprep.mubr.f32.mxu0 0.0
      %2318 = vmatmul.mubr.f32.gmra.mxu0 %v1087
      %v2319 = vpop.f32.mrf.mxu0
      %v2320 = vadd.f32 0.0, %v2319
      %v2321 = vpop.f32.mrf.mxu0
      %2322 = vmatprep.mubr.f32.mxu0 0.0
      %2323 = vmatmul.mubr.f32.gmra.mxu0 %v1089
      %v2324 = vpop.f32.mrf.mxu0
      %v2325 = vadd.f32 0.0, %v2324
      %v2326 = vpop.f32.mrf.mxu0
      %2327 = vmatprep.mubr.f32.mxu0 0.0
      %2328 = vmatmul.mubr.f32.gmra.mxu0 %v1092
      %v2329 = vpop.f32.mrf.mxu0
      %v2330 = vadd.f32 0.0, %v2329
      %v2331 = vpop.f32.mrf.mxu0
      %2332 = vmatprep.mubr.f32.mxu0 0.0
      %2333 = vmatmul.mubr.f32.gmra.mxu0 %v1094
      %v2334 = vpop.f32.mrf.mxu0
      %v2335 = vadd.f32 0.0, %v2334
      %v2336 = vpop.f32.mrf.mxu0
      %2337 = vmatprep.mubr.f32.mxu0 0.0
      %2338 = vmatmul.mubr.f32.gmra.mxu0 %v1097
      %v2339 = vpop.f32.mrf.mxu0
      %v2340 = vadd.f32 0.0, %v2339
      %v2341 = vpop.f32.mrf.mxu0
      %2342 = vmatprep.mubr.f32.mxu0 0.0
      %2343 = vmatmul.mubr.f32.gmra.mxu0 %v1099
      %v2344 = vpop.f32.mrf.mxu0
      %v2345 = vadd.f32 0.0, %v2344
      %v2346 = vpop.f32.mrf.mxu0
      %2347 = vmatprep.mubr.f32.mxu0 0.0
      %2348 = vmatmul.mubr.f32.gmra.mxu0 %v1102
      %v2349 = vpop.f32.mrf.mxu0
      %v2350 = vadd.f32 0.0, %v2349
      %v2351 = vpop.f32.mrf.mxu0
      %2352 = vmatprep.mubr.f32.mxu0 0.0
      %2353 = vmatmul.mubr.f32.gmra.mxu0 %v1104
      %v2354 = vpop.f32.mrf.mxu0
      %v2355 = vadd.f32 0.0, %v2354
      %v2356 = vpop.f32.mrf.mxu0
      %2357 = vmatprep.mubr.f32.mxu0 0.0
      %2358 = vmatmul.mubr.f32.gmra.mxu0 %v1107
      %v2359 = vpop.f32.mrf.mxu0
      %v2360 = vadd.f32 0.0, %v2359
      %v2361 = vpop.f32.mrf.mxu0
      %2362 = vmatprep.mubr.f32.mxu0 0.0
      %2363 = vmatmul.mubr.f32.gmra.mxu0 %v1109
      %v2364 = vpop.f32.mrf.mxu0
      %v2365 = vadd.f32 0.0, %v2364
      %v2366 = vpop.f32.mrf.mxu0
      %2367 = vmatprep.mubr.f32.mxu0 0.0
      %2368 = vmatmul.mubr.f32.gmra.mxu0 %v1671
      %v2369 = vpop.f32.mrf.mxu0
      %v2370 = vadd.f32 0.0, %v2369
      %v2371 = vpop.f32.mrf.mxu0
      %2372 = vmatprep.mubr.f32.mxu0 0.0
      %2373 = vmatmul.mubr.f32.gmra.mxu0 %v1673
      %v2374 = vpop.f32.mrf.mxu0
      %v2375 = vadd.f32 0.0, %v2374
      %v2376 = vpop.f32.mrf.mxu0
      %2377 = vmatprep.mubr.f32.mxu0 0.0
      %2378 = vmatmul.mubr.f32.gmra.mxu0 %v2221
      %v2379 = vpop.f32.mrf.mxu0
      %v2380 = vadd.f32 0.0, %v2379
      %v2381 = vpop.f32.mrf.mxu0
      %2382 = vmatprep.mubr.f32.mxu0 0.0
      %2383 = vmatmul.mubr.f32.gmra.mxu0 %v2223
      %v2384 = vpop.f32.mrf.mxu0
      %v2385 = vadd.f32 0.0, %v2384
      %v2386 = vpop.f32.mrf.mxu0
      %2387 = vdwg.mxu0
      %v2388 = vadd.f32 %v2203, %v2310
      %v2389 = vadd.f32 %v2204, %v2315
      %v2390 = vadd.f32 %v2205, %v2320
      %v2391 = vadd.f32 %v2206, %v2325
      %v2392 = vadd.f32 %v2207, %v2330
      %v2393 = vadd.f32 %v2208, %v2335
      %v2394 = vadd.f32 %v2209, %v2340
      %v2395 = vadd.f32 %v2210, %v2345
      %v2396 = vadd.f32 %v2211, %v2350
      %v2397 = vadd.f32 %v2212, %v2355
      %v2398 = vadd.f32 %v2213, %v2360
      %v2399 = vadd.f32 %v2214, %v2365
      %v2400 = vadd.f32 %v2215, %v2370
      %v2401 = vadd.f32 %v2216, %v2375
      %v2402 = vadd.f32 %v2217, %v2380
      %v2403 = vadd.f32 %v2218, %v2385
      %2404 = vst [vmem:[%s454] sm:$0xff] %v2388
      %2405 = vst [vmem:[%s454 + $0x8] sm:$0xff] %v2389
      %2406 = vst [vmem:[%s454 + $0x10] sm:$0xff] %v2390
      %2407 = vst [vmem:[%s454 + $0x18] sm:$0xff] %v2391
      %2408 = vst [vmem:[%s454 + $0x20] sm:$0xff] %v2392
      %2409 = vst [vmem:[%s454 + $0x28] sm:$0xff] %v2393
      %2410 = vst [vmem:[%s454 + $0x30] sm:$0xff] %v2394
      %2411 = vst [vmem:[%s454 + $0x38] sm:$0xff] %v2395
      %2412 = vst [vmem:[%s454 + $0x40] sm:$0xff] %v2396
      %2413 = vst [vmem:[%s454 + $0x48] sm:$0xff] %v2397
      %2414 = vst [vmem:[%s454 + $0x50] sm:$0xff] %v2398
      %2415 = vst [vmem:[%s454 + $0x58] sm:$0xff] %v2399
      %2416 = vst [vmem:[%s454 + $0x60] sm:$0xff] %v2400
      %2417 = vst [vmem:[%s454 + $0x68] sm:$0xff] %v2401
      %2418 = vst [vmem:[%s454 + $0x70] sm:$0xff] %v2402
      %2419 = vst [vmem:[%s454 + $0x78] sm:$0xff] %v2403
      %v2420 = vadd.f32 %v2388, %v2389
      %v2421 = vadd.f32 %v2420, %v2390
      %v2422 = vadd.f32 %v2421, %v2391
      %v2423 = vadd.f32 %v2422, %v2392
      %v2424 = vadd.f32 %v2423, %v2393
      %v2425 = vadd.f32 %v2424, %v2394
      %v2426 = vadd.f32 %v2425, %v2395
      %v2427 = vadd.f32 %v2426, %v2396
      %v2428 = vadd.f32 %v2427, %v2397
      %v2429 = vadd.f32 %v2428, %v2398
      %v2430 = vadd.f32 %v2429, %v2399
      %v2431 = vadd.f32 %v2430, %v2400
      %v2432 = vadd.f32 %v2431, %v2401
      %v2433 = vadd.f32 %v2432, %v2402
      %v2434 = vadd.f32 %v2433, %v2403
      %v2435 = vrot.slane %v2434, 4
      %v2436 = vadd.f32 %v2434, %v2435
      %v2437 = vrot.slane %v2436, 2
      %v2438 = vadd.f32 %v2436, %v2437
      %v2439 = vrot.slane %v2438, 1
      %v2440 = vadd.f32 %v2438, %v2439
      %v2441 = vmul.f32 %v2388, %v2388
      %v2442 = vmul.f32 %v2389, %v2389
      %v2443 = vmul.f32 %v2390, %v2390
      %v2444 = vmul.f32 %v2391, %v2391
      %v2445 = vmul.f32 %v2392, %v2392
      %v2446 = vmul.f32 %v2393, %v2393
      %v2447 = vmul.f32 %v2394, %v2394
      %v2448 = vmul.f32 %v2395, %v2395
      %v2449 = vmul.f32 %v2396, %v2396
      %v2450 = vmul.f32 %v2397, %v2397
      %v2451 = vmul.f32 %v2398, %v2398
      %v2452 = vmul.f32 %v2399, %v2399
      %v2453 = vmul.f32 %v2400, %v2400
      %v2454 = vmul.f32 %v2401, %v2401
      %v2455 = vmul.f32 %v2402, %v2402
      %v2456 = vmul.f32 %v2403, %v2403
      %v2457 = vadd.f32 %v2441, %v2442
      %v2458 = vadd.f32 %v2457, %v2443
      %v2459 = vadd.f32 %v2458, %v2444
      %v2460 = vadd.f32 %v2459, %v2445
      %v2461 = vadd.f32 %v2460, %v2446
      %v2462 = vadd.f32 %v2461, %v2447
      %v2463 = vadd.f32 %v2462, %v2448
      %v2464 = vadd.f32 %v2463, %v2449
      %v2465 = vadd.f32 %v2464, %v2450
      %v2466 = vadd.f32 %v2465, %v2451
      %v2467 = vadd.f32 %v2466, %v2452
      %v2468 = vadd.f32 %v2467, %v2453
      %v2469 = vadd.f32 %v2468, %v2454
      %v2470 = vadd.f32 %v2469, %v2455
      %v2471 = vadd.f32 %v2470, %v2456
      %v2472 = vrot.slane %v2471, 4
      %v2473 = vadd.f32 %v2471, %v2472
      %v2474 = vrot.slane %v2473, 2
      %v2475 = vadd.f32 %v2473, %v2474
      %v2476 = vrot.slane %v2475, 1
      %v2477 = vadd.f32 %v2475, %v2476
      %v2478 = vsel %vm592, %v2440, %v2477
      %2479 = vst [vmem:[%s463] sm:$0x3] %v2478
      %s2480 = smul.u32 %s23, 2
      %s2481 = sadd.s32 %s2480, %s24
      %s2482 = smul.u32 16, %s2481
      %p2483 = scmp.lt.s32.totalorder %s2482, 63
      %s2484 = scalar_select %p2483, %s2482, 63
      %s2485 = smul.addr %s2484, 8
      %s2486 = scalar_lea.vmem %s6, %s2485
      %s2487 = smul.u32 %s23, 2
      %s2488 = sadd.s32 %s2487, %s24
      %p2489 = scmp.lt.s32.totalorder %s2488, 3
      %s2490 = scalar_select %p2489, %s2488, 3
      %s2491 = smul.addr %s2490, 2
      %s2492 = scalar_lea.vmem %s7, %s2491
      // Predicated region
      $region45: #{double_conv.4} parent=43 // pred_check
        %p2493 = pneg %p216
      $region46: #{double_conv.4} parent=43 // pred_check_branch
        %2495 = sbr.rel (%p2493) target = $region48
      $region47: #{double_conv.4} parent=43 // pred_region
        %s2496 = smul.u32 %s23, 2
        %s2497 = sadd.s32 %s2496, %s24
        %s2498 = smul.u32 16, %s2497
      $region48: #{double_conv.4} parent=43 // pred_fallthru
        _
      // Predicated region
      $region49: #{double_conv.4} parent=43 // pred_check
        %p2499 = pneg %p246
      $region50: #{double_conv.4} parent=43 // pred_check_branch
        %2501 = sbr.rel (%p2499) target = $region52
      $region51: #{double_conv.4} parent=43 // pred_region
        %s2502 = smul.u32 %s23, 2
        %s2503 = sadd.s32 %s2502, %s24
      $region52: #{double_conv.4} parent=43 // pred_fallthru
        _
    $region44: #{double_conv.4} parent=5 // pred_fallthru
      _
    %p2504 = scmp.le.s32.totalorder 2, %s14
    // Predicated region
    $region53: #{double_conv.4} parent=5 // pred_check
      %p2505 = pneg %p2504
    $region54: #{double_conv.4} parent=5 // pred_check_branch
      %2507 = sbr.rel (%p2505) target = $region56
    $region55: #{double_conv.4} parent=5 // pred_region
      %s2508 = ssub.s32 %s14, 2
      // Predicated region
      $region57: #{double_conv.4} parent=55 // pred_check
        %p2509 = pneg %p222
      $region58: #{double_conv.4} parent=55 // pred_check_branch
        %2511 = sbr.rel (%p2509) target = $region60
      $region59: #{double_conv.4} parent=55 // pred_region
        %s2512 = smul.u32 %s25, 2
        %s2513 = sadd.s32 %s2512, %s26
        %s2514 = smul.u32 16, %s2513
        %p2515 = scmp.lt.s32.totalorder %s2514, 63
        %s2516 = scalar_select %p2515, %s2514, 63
        %s2517 = smul.addr %s2516, 8
        %s2518 = scalar_lea.vmem %s6, %s2517
      $region60: #{double_conv.4} parent=55 // pred_fallthru
        _
      // Predicated region
      $region61: #{double_conv.4} parent=55 // pred_check
        %p2519 = pneg %p252
      $region62: #{double_conv.4} parent=55 // pred_check_branch
        %2521 = sbr.rel (%p2519) target = $region64
      $region63: #{double_conv.4} parent=55 // pred_region
        %s2522 = smul.u32 %s25, 2
        %s2523 = sadd.s32 %s2522, %s26
        %p2524 = scmp.lt.s32.totalorder %s2523, 3
        %s2525 = scalar_select %p2524, %s2523, 3
        %s2526 = smul.addr %s2525, 2
        %s2527 = scalar_lea.vmem %s7, %s2526
      $region64: #{double_conv.4} parent=55 // pred_fallthru
        _
    $region56: #{double_conv.4} parent=5 // pred_fallthru
      _
  $region6: #{double_conv.4} parent=0 // loop_footer
    %s18 = sadd.s32 1, %s14
  $region7: #{double_conv.4} parent=0 // loop_footer_branch
    %13 = sbr.rel target = $region3
  $region8: #{double_conv.4} parent=0 // loop_exit
    _

</llo_original>
